<compile_context>
chip_gen: v7x
topology: tpu7x:2x2x1
jax: 0.10.0
libtpu: 0.0.40
codegen_flags: <defaults>
</compile_context>

<pallas_src>
import math

import jax
import jax.numpy as jnp
from jax.experimental import pallas as pl
from jax.experimental.pallas import tpu as pltpu

TWO_PI = 2.0 * math.pi

_OUT_BLOCK_BUDGET = 4 * 1024 * 1024     # bytes per output block (pre double-buffer)
_VMEM_LIMIT = 48 * 1024 * 1024          # safe on v5e/v6e (128 MiB) and v7x (64 MiB)


def _round_up(x, m):
    return ((x + m - 1) // m) * m


# --------------------------------------------------------------------------
# Kernel 1: relative-coordinate Fourier embedding, channel-first output.
#   qt_ref  : (3, TQ)     query xyz tile, coords on sublanes / points on lanes
#   ct_ref  : (3, TC)     corr  xyz tile
#   gbt_ref : (DH, 3)     (2*pi*gauss_B/(pc_max-pc_min)).T
#   bias_ref: (DH, 1)     -2*pi*(pc_min*inv)@gauss_B, transposed
#   o_ref   : (2*DH, TQ, TC)   [sin; cos] of proj, channel-first, lane = corr
# --------------------------------------------------------------------------
def _rel_fourier_kernel(qt_ref, ct_ref, gbt_ref, bias_ref, o_ref):
    gbt = gbt_ref[...]                                    # (DH, 3)
    # A[f,q] = sum_d gb_scaled[d,f]*q[d,q] + bias[f]   (3 FMAs, VPU broadcast)
    a = (gbt[:, 0:1] * qt_ref[0:1, :]
         + gbt[:, 1:2] * qt_ref[1:2, :]
         + gbt[:, 2:3] * qt_ref[2:3, :]
         + bias_ref[...])                                 # (DH, TQ)
    # B[f,k] = sum_d gb_scaled[d,f]*c[d,k]             (bias only once -> in A)
    b = (gbt[:, 0:1] * ct_ref[0:1, :]
         + gbt[:, 1:2] * ct_ref[1:2, :]
         + gbt[:, 2:3] * ct_ref[2:3, :])                  # (DH, TC)

    sin_a, cos_a = jnp.sin(a), jnp.cos(a)                 # EUP work: O((TQ)*DH)
    sin_b, cos_b = jnp.sin(b), jnp.cos(b)                 # EUP work: O((TC)*DH)
    dh = a.shape[0]

    # proj = A - B; use angle-difference identities so the O(TQ*TC*DH) work
    # is VALU multiplies/adds instead of EUP transcendentals.
    sa = sin_a[:, :, None]
    ca = cos_a[:, :, None]
    sb = sin_b[:, None, :]
    cb = cos_b[:, None, :]
    o_ref[:dh] = sa * cb - ca * sb        # sin(A - B)
    o_ref[dh:] = ca * cb + sa * sb        # cos(A - B)


# --------------------------------------------------------------------------
# Kernel 2: per-point Fourier embedding, channel-first output.
#   xt_ref : (3, TN)   point coords (coords on sublanes, points on lanes)
#   o_ref  : (2*DH, TN)
# K=3 contraction stays on the VPU (MXU would be <1% utilized at K=3).
# --------------------------------------------------------------------------
def _point_fourier_kernel(xt_ref, gbt_ref, bias_ref, o_ref):
    gbt = gbt_ref[...]
    a = (gbt[:, 0:1] * xt_ref[0:1, :]
         + gbt[:, 1:2] * xt_ref[1:2, :]
         + gbt[:, 2:3] * xt_ref[2:3, :]
         + bias_ref[...])                                 # (DH, TN)
    dh = a.shape[0]
    o_ref[:dh] = jnp.sin(a)
    o_ref[dh:] = jnp.cos(a)


# --------------------------------------------------------------------------
# Host-side parameter folding
# --------------------------------------------------------------------------
def _fold_pos_params(gauss_B, pc_min, pc_max):
    """Fold normalization + 2*pi into the Fourier matrix.

    Returns gbt (DH, 3) and bias_t (DH, 1) such that
      proj[f] = sum_d x[d]*gbt[f,d] + bias_t[f]  ==  2*pi*(x-pc_min)/(pc_max-pc_min) @ gauss_B
    """
    pc_min = jnp.asarray(pc_min, jnp.float32).reshape(1, 3)
    pc_max = jnp.asarray(pc_max, jnp.float32).reshape(1, 3)
    inv = 1.0 / (pc_max - pc_min)                            # (1, 3)
    gb_scaled = (TWO_PI * gauss_B) * inv.reshape(3, 1)       # (3, DH)
    bias = -(TWO_PI * (pc_min * inv)) @ gauss_B              # (1, DH)
    return gb_scaled.T, bias.T                               # (DH, 3), (DH, 1)


def _choose_rel_tiles(nq, nc, d_pos, budget=_OUT_BLOCK_BUDGET):
    # Lane tile over corr points (multiple of 128 -> unmasked stores).
    tc = min(512, _round_up(nc, 128))
    while tc > 128 and d_pos * 128 * tc * 4 > budget:
        tc -= 128
    # Sublane tile over query points: biggest multiple of 128 within budget.
    tq = max(128, (budget // (d_pos * tc * 4)) // 128 * 128)
    tq = min(tq, _round_up(nq, 128))
    return tq, tc


# --------------------------------------------------------------------------
# Wrappers
# --------------------------------------------------------------------------
def relative_fourier_embedding(q_t, c_t, gbt, bias_t):
    """q_t: (B, 3, nq), c_t: (B, 3, nc)  ->  (B, 2*DH, nq, nc) channel-first."""
    B, _, nq = q_t.shape
    nc = c_t.shape[2]
    dh = gbt.shape[0]
    d_pos = 2 * dh

    tq, tc = _choose_rel_tiles(nq, nc, d_pos)
    nq_pad = _round_up(nq, tq)
    nc_pad = _round_up(nc, tc)
    if nq_pad != nq:
        q_t = jnp.pad(q_t, ((0, 0), (0, 0), (0, nq_pad - nq)))
    if nc_pad != nc:
        c_t = jnp.pad(c_t, ((0, 0), (0, 0), (0, nc_pad - nc)))

    out = pl.pallas_call(
        _rel_fourier_kernel,
        out_shape=jax.ShapeDtypeStruct((B, d_pos, nq_pad, nc_pad), jnp.float32),
        grid_spec=pltpu.PrefetchScalarGridSpec(
            num_scalar_prefetch=0,
            grid=(B, nq_pad // tq, nc_pad // tc),
            in_specs=[
                pl.BlockSpec((None, 3, tq), lambda b, i, j: (b, 0, i)),
                pl.BlockSpec((None, 3, tc), lambda b, i, j: (b, 0, j)),
                pl.BlockSpec((dh, 3), lambda b, i, j: (0, 0)),
                pl.BlockSpec((dh, 1), lambda b, i, j: (0, 0)),
            ],
            out_specs=pl.BlockSpec((None, d_pos, tq, tc),
                                   lambda b, i, j: (b, 0, i, j)),
        ),
        compiler_params=pltpu.CompilerParams(
            dimension_semantics=("parallel", "parallel", "parallel"),
            vmem_limit_bytes=_VMEM_LIMIT),
    )(q_t, c_t, gbt, bias_t)
    return out[:, :, :nq, :nc]


def point_fourier_embedding(x_t, gbt, bias_t):
    """x_t: (3, n)  ->  (2*DH, n) channel-first Fourier embedding."""
    n = x_t.shape[1]
    dh = gbt.shape[0]
    d_pos = 2 * dh

    tn = min(1024, _round_up(n, 128))
    n_pad = _round_up(n, tn)
    if n_pad != n:
        x_t = jnp.pad(x_t, ((0, 0), (0, n_pad - n)))

    out = pl.pallas_call(
        _point_fourier_kernel,
        out_shape=jax.ShapeDtypeStruct((d_pos, n_pad), jnp.float32),
        grid_spec=pltpu.PrefetchScalarGridSpec(
            num_scalar_prefetch=0,
            grid=(n_pad // tn,),
            in_specs=[
                pl.BlockSpec((3, tn), lambda i: (0, i)),
                pl.BlockSpec((dh, 3), lambda i: (0, 0)),
                pl.BlockSpec((dh, 1), lambda i: (0, 0)),
            ],
            out_specs=pl.BlockSpec((d_pos, tn), lambda i: (0, i)),
        ),
        compiler_params=pltpu.CompilerParams(
            dimension_semantics=("parallel",),
            vmem_limit_bytes=_VMEM_LIMIT),
    )(x_t, gbt, bias_t)
    return out[:, :n]


def init_guided_upsample_params(key, dim, dec_dim):
    # PositionEmbeddingCoordsSine('fourier') buffer: gauss_B ~ N(0,1), (3, dec_dim//2)
    # TODO(synk): CrossAttention(dim) weights are built by __init__ but the
    # reference forward never reaches it (ipdb.set_trace()), so they are unused.
    del dim
    return {"gauss_B": jax.random.normal(key, (3, dec_dim // 2), jnp.float32)}


def guided_upsample_forward(corr, query_feats, pc_dims, params):
    """Mirrors GuidedUpsample.forward up to the point it stops (ipdb)."""
    query_batch_idxs, query_coords, query_coords_float, querys = query_feats
    corr_batch_idxs, corr_coords, corr_coords_float, corrs = corr
    del querys, corrs  # only aliased in the reference forward, never used
    gauss_B = params["gauss_B"]
    pc_min, pc_max = pc_dims

    gbt, bias_t = _fold_pos_params(gauss_B, pc_min, pc_max)
    d_pos = 2 * gbt.shape[0]

    num_batches = int(query_batch_idxs.max()) + 1
    # Synthetic data has contiguous, equal-sized batches, so the boolean-mask
    # selection of the reference reduces to a reshape.
    nq = query_coords_float.shape[0] // num_batches
    nc = corr_coords_float.shape[0] // num_batches

    # (B, 3, N) coordinate layout: coord axis on sublanes, points on lanes.
    q_f = query_coords_float.reshape(num_batches, nq, 3).transpose(0, 2, 1)
    c_f = corr_coords_float.reshape(num_batches, nc, 3).transpose(0, 2, 1)

    # Relative embeddings for all batches in one pallas_call (batch = grid axis).
    # TODO(synk): verify torch PositionEmbeddingCoordsSine shifts relative
    # (possibly negative) coords by pc_min the same way; this matches the
    # pure-JAX reference below.
    rel_pos = relative_fourier_embedding(q_f, c_f, gbt, bias_t)   # (B, d_pos, nq, nc)

    # One fused point-embedding call over all integer corr + query coords.
    pts = jnp.concatenate([corr_coords.astype(jnp.float32),
                           query_coords.astype(jnp.float32)], axis=0)  # (B*nc+B*nq, 3)
    emb = point_fourier_embedding(pts.T, gbt, bias_t)             # (d_pos, B*nc+B*nq)
    corr_pos = emb[:, :num_batches * nc].reshape(d_pos, num_batches, nc)
    corr_pos = jnp.transpose(corr_pos, (1, 0, 2))                 # (B, d_pos, nc)
    query_pos = emb[:, num_batches * nc:].reshape(d_pos, num_batches, nq)
    query_pos = jnp.transpose(query_pos, (1, 0, 2))               # (B, d_pos, nq)

    # TODO(synk): reference forward ends at ipdb.set_trace() with no return /
    # no CrossAttention call; return the computed positional embeddings.
    return rel_pos, corr_pos, query_pos


# --------------------------------------------------------------------------
# Pure-JAX references (kernel sanity checks)
# --------------------------------------------------------------------------
def _ref_rel_emb(q_f, c_f, gauss_B, pc_min, pc_max):
    rel = q_f[:, None, :] - c_f[None, :, :]
    norm = (rel - pc_min[0]) / (pc_max[0] - pc_min[0]) * TWO_PI
    proj = jnp.einsum("qkd,df->qkf", norm, gauss_B)
    emb = jnp.concatenate([jnp.sin(proj), jnp.cos(proj)], axis=-1)
    return jnp.transpose(emb, (2, 0, 1))


def _ref_point_emb(x, gauss_B, pc_min, pc_max):
    norm = (x - pc_min[0]) / (pc_max[0] - pc_min[0]) * TWO_PI
    proj = norm @ gauss_B
    return jnp.concatenate([jnp.sin(proj), jnp.cos(proj)], axis=-1).T


if __name__ == "__main__":
    B, NQ, NC = 2, 128, 128        # 128 points -> lane-dense output blocks
    DIM, DEC_DIM = 32, 32

    key = jax.random.PRNGKey(0)
    k1, k2, k3, k4, k5 = jax.random.split(key, 5)

    query_coords_float = jax.random.uniform(k1, (B * NQ, 3), jnp.float32, 0.0, 10.0)
    corr_coords_float = jax.random.uniform(k2, (B * NC, 3), jnp.float32, 0.0, 10.0)
    query_coords = jnp.floor(query_coords_float / 0.5).astype(jnp.int32)
    corr_coords = jnp.floor(corr_coords_float / 0.5).astype(jnp.int32)
    query_batch_idxs = jnp.repeat(jnp.arange(B, dtype=jnp.int32), NQ)
    corr_batch_idxs = jnp.repeat(jnp.arange(B, dtype=jnp.int32), NC)
    querys = jax.random.normal(k3, (B * NQ, DIM), jnp.float32)
    corrs = jax.random.normal(k4, (B * NC, DIM), jnp.float32)

    pc_min = jnp.zeros((1, 3), jnp.float32)
    pc_max = jnp.full((1, 3), 10.0, jnp.float32)
    pc_dims = (pc_min, pc_max)

    params = init_guided_upsample_params(k5, DIM, DEC_DIM)

    rel_pos, corr_pos, query_pos = guided_upsample_forward(
        (corr_batch_idxs, corr_coords, corr_coords_float, corrs),
        (query_batch_idxs, query_coords, query_coords_float, querys),
        pc_dims, params)
    jax.block_until_ready((rel_pos, corr_pos, query_pos))

    assert rel_pos.shape == (B, DEC_DIM, NQ, NC)
    assert corr_pos.shape == (B, DEC_DIM, NC)
    assert query_pos.shape == (B, DEC_DIM, NQ)
    assert bool(jnp.all(jnp.isfinite(rel_pos)))
    assert bool(jnp.all(jnp.isfinite(corr_pos)))
    assert bool(jnp.all(jnp.isfinite(query_pos)))

    gB = params["gauss_B"]
    atol = rtol = 2e-4
    ref_rel0 = _ref_rel_emb(query_coords_float[:NQ], corr_coords_float[:NC],
                            gB, pc_min, pc_max)
    ref_rel1 = _ref_rel_emb(query_coords_float[NQ:], corr_coords_float[NC:],
                            gB, pc_min, pc_max)
    ref_cpos0 = _ref_point_emb(corr_coords[:NC].astype(jnp.float32), gB, pc_min, pc_max)
    ref_qpos1 = _ref_point_emb(query_coords[NQ:].astype(jnp.float32), gB, pc_min, pc_max)

    assert bool(jnp.allclose(rel_pos[0], ref_rel0, atol=atol, rtol=rtol))
    assert bool(jnp.allclose(rel_pos[1], ref_rel1, atol=atol, rtol=rtol))
    assert bool(jnp.allclose(corr_pos[0], ref_cpos0, atol=atol, rtol=rtol))
    assert bool(jnp.allclose(query_pos[1], ref_qpos1, atol=atol, rtol=rtol))

    print("KERNEL_OK")
</pallas_src>

<mosaic_0001>
module attributes {stable_mosaic.version = 11 : i64} {
  func.func @_rel_fourier_kernel(%arg0: i32, %arg1: i32, %arg2: i32, %arg3: memref<1x3x128xf32, #tpu.memory_space<vmem>>, %arg4: memref<1x3x128xf32, #tpu.memory_space<vmem>>, %arg5: memref<16x3xf32, #tpu.memory_space<vmem>>, %arg6: memref<16x1xf32, #tpu.memory_space<vmem>>, %arg7: memref<1x32x128x128xf32, #tpu.memory_space<vmem>>) attributes {dimension_semantics = [#tpu.dimension_semantics<parallel>, #tpu.dimension_semantics<parallel>, #tpu.dimension_semantics<parallel>], iteration_bounds = array<i64: 2, 1, 1>, scalar_prefetch = 0 : i64, scratch_operands = 0 : i64, tpu.core_type = #tpu.core_type<tc>, window_params = [{transform_indices = @transform_0, window_bounds = array<i64: 1, 3, 128>}, {transform_indices = @transform_1, window_bounds = array<i64: 1, 3, 128>}, {pipeline_mode = #tpu.pipeline_mode<synchronous>, transform_indices = @transform_2, window_bounds = array<i64: 16, 3>}, {pipeline_mode = #tpu.pipeline_mode<synchronous>, transform_indices = @transform_3, window_bounds = array<i64: 16, 1>}, {transform_indices = @transform_4, window_bounds = array<i64: 1, 32, 128, 128>}]} {
    %c0 = arith.constant 0 : index
    %c0_0 = arith.constant 0 : index
    %0 = vector.load %arg5[%c0, %c0_0] : memref<16x3xf32, #tpu.memory_space<vmem>>, vector<16x3xf32>
    %1 = vector.extract_strided_slice %0 {offsets = [0, 0], sizes = [16, 1], strides = [1, 1]} : vector<16x3xf32> to vector<16x1xf32>
    %c0_1 = arith.constant 0 : index
    %c0_2 = arith.constant 0 : index
    %c0_3 = arith.constant 0 : index
    %2 = vector.load %arg3[%c0_1, %c0_2, %c0_3] : memref<1x3x128xf32, #tpu.memory_space<vmem>>, vector<1x1x128xf32>
    %3 = vector.shape_cast %2 : vector<1x1x128xf32> to vector<1x128xf32>
    %4 = vector.broadcast %1 : vector<16x1xf32> to vector<16x128xf32>
    %5 = vector.broadcast %3 : vector<1x128xf32> to vector<16x128xf32>
    %6 = arith.mulf %4, %5 : vector<16x128xf32>
    %7 = vector.extract_strided_slice %0 {offsets = [0, 1], sizes = [16, 1], strides = [1, 1]} : vector<16x3xf32> to vector<16x1xf32>
    %c0_4 = arith.constant 0 : index
    %c1 = arith.constant 1 : index
    %c0_5 = arith.constant 0 : index
    %8 = vector.load %arg3[%c0_4, %c1, %c0_5] : memref<1x3x128xf32, #tpu.memory_space<vmem>>, vector<1x1x128xf32>
    %9 = vector.shape_cast %8 : vector<1x1x128xf32> to vector<1x128xf32>
    %10 = vector.broadcast %7 : vector<16x1xf32> to vector<16x128xf32>
    %11 = vector.broadcast %9 : vector<1x128xf32> to vector<16x128xf32>
    %12 = arith.mulf %10, %11 : vector<16x128xf32>
    %13 = arith.addf %6, %12 : vector<16x128xf32>
    %14 = vector.extract_strided_slice %0 {offsets = [0, 2], sizes = [16, 1], strides = [1, 1]} : vector<16x3xf32> to vector<16x1xf32>
    %c0_6 = arith.constant 0 : index
    %c2 = arith.constant 2 : index
    %c0_7 = arith.constant 0 : index
    %15 = vector.load %arg3[%c0_6, %c2, %c0_7] : memref<1x3x128xf32, #tpu.memory_space<vmem>>, vector<1x1x128xf32>
    %16 = vector.shape_cast %15 : vector<1x1x128xf32> to vector<1x128xf32>
    %17 = vector.broadcast %14 : vector<16x1xf32> to vector<16x128xf32>
    %18 = vector.broadcast %16 : vector<1x128xf32> to vector<16x128xf32>
    %19 = arith.mulf %17, %18 : vector<16x128xf32>
    %20 = arith.addf %13, %19 : vector<16x128xf32>
    %c0_8 = arith.constant 0 : index
    %c0_9 = arith.constant 0 : index
    %21 = vector.load %arg6[%c0_8, %c0_9] : memref<16x1xf32, #tpu.memory_space<vmem>>, vector<16x1xf32>
    %22 = vector.broadcast %21 : vector<16x1xf32> to vector<16x128xf32>
    %23 = arith.addf %20, %22 : vector<16x128xf32>
    %24 = vector.extract_strided_slice %0 {offsets = [0, 0], sizes = [16, 1], strides = [1, 1]} : vector<16x3xf32> to vector<16x1xf32>
    %c0_10 = arith.constant 0 : index
    %c0_11 = arith.constant 0 : index
    %c0_12 = arith.constant 0 : index
    %25 = vector.load %arg4[%c0_10, %c0_11, %c0_12] : memref<1x3x128xf32, #tpu.memory_space<vmem>>, vector<1x1x128xf32>
    %26 = vector.shape_cast %25 : vector<1x1x128xf32> to vector<1x128xf32>
    %27 = vector.broadcast %24 : vector<16x1xf32> to vector<16x128xf32>
    %28 = vector.broadcast %26 : vector<1x128xf32> to vector<16x128xf32>
    %29 = arith.mulf %27, %28 : vector<16x128xf32>
    %30 = vector.extract_strided_slice %0 {offsets = [0, 1], sizes = [16, 1], strides = [1, 1]} : vector<16x3xf32> to vector<16x1xf32>
    %c0_13 = arith.constant 0 : index
    %c1_14 = arith.constant 1 : index
    %c0_15 = arith.constant 0 : index
    %31 = vector.load %arg4[%c0_13, %c1_14, %c0_15] : memref<1x3x128xf32, #tpu.memory_space<vmem>>, vector<1x1x128xf32>
    %32 = vector.shape_cast %31 : vector<1x1x128xf32> to vector<1x128xf32>
    %33 = vector.broadcast %30 : vector<16x1xf32> to vector<16x128xf32>
    %34 = vector.broadcast %32 : vector<1x128xf32> to vector<16x128xf32>
    %35 = arith.mulf %33, %34 : vector<16x128xf32>
    %36 = arith.addf %29, %35 : vector<16x128xf32>
    %37 = vector.extract_strided_slice %0 {offsets = [0, 2], sizes = [16, 1], strides = [1, 1]} : vector<16x3xf32> to vector<16x1xf32>
    %c0_16 = arith.constant 0 : index
    %c2_17 = arith.constant 2 : index
    %c0_18 = arith.constant 0 : index
    %38 = vector.load %arg4[%c0_16, %c2_17, %c0_18] : memref<1x3x128xf32, #tpu.memory_space<vmem>>, vector<1x1x128xf32>
    %39 = vector.shape_cast %38 : vector<1x1x128xf32> to vector<1x128xf32>
    %40 = vector.broadcast %37 : vector<16x1xf32> to vector<16x128xf32>
    %41 = vector.broadcast %39 : vector<1x128xf32> to vector<16x128xf32>
    %42 = arith.mulf %40, %41 : vector<16x128xf32>
    %43 = arith.addf %36, %42 : vector<16x128xf32>
    %44 = math.sin %23 : vector<16x128xf32>
    %45 = math.cos %23 : vector<16x128xf32>
    %46 = math.sin %43 : vector<16x128xf32>
    %47 = math.cos %43 : vector<16x128xf32>
    %48 = vector.shape_cast %44 : vector<16x128xf32> to vector<16x128x1xf32>
    %49 = vector.shape_cast %45 : vector<16x128xf32> to vector<16x128x1xf32>
    %50 = vector.shape_cast %46 : vector<16x128xf32> to vector<16x1x128xf32>
    %51 = vector.shape_cast %47 : vector<16x128xf32> to vector<16x1x128xf32>
    %52 = vector.broadcast %48 : vector<16x128x1xf32> to vector<16x128x128xf32>
    %53 = vector.broadcast %51 : vector<16x1x128xf32> to vector<16x128x128xf32>
    %54 = arith.mulf %52, %53 : vector<16x128x128xf32>
    %55 = vector.broadcast %49 : vector<16x128x1xf32> to vector<16x128x128xf32>
    %56 = vector.broadcast %50 : vector<16x1x128xf32> to vector<16x128x128xf32>
    %57 = arith.mulf %55, %56 : vector<16x128x128xf32>
    %58 = arith.subf %54, %57 : vector<16x128x128xf32>
    %c0_19 = arith.constant 0 : index
    %c0_20 = arith.constant 0 : index
    %c0_21 = arith.constant 0 : index
    %c0_22 = arith.constant 0 : index
    %59 = vector.load %arg7[%c0_19, %c0_20, %c0_21, %c0_22] : memref<1x32x128x128xf32, #tpu.memory_space<vmem>>, vector<1x16x128x128xf32>
    %60 = vector.shape_cast %59 : vector<1x16x128x128xf32> to vector<16x128x128xf32>
    %61 = vector.shape_cast %58 : vector<16x128x128xf32> to vector<1x16x128x128xf32>
    tpu.vector_store %arg7[%c0_19, %c0_20, %c0_21, %c0_22], %61 {strides = array<i32>} : memref<1x32x128x128xf32, #tpu.memory_space<vmem>>, vector<1x16x128x128xf32>,
    %62 = vector.broadcast %49 : vector<16x128x1xf32> to vector<16x128x128xf32>
    %63 = vector.broadcast %51 : vector<16x1x128xf32> to vector<16x128x128xf32>
    %64 = arith.mulf %62, %63 : vector<16x128x128xf32>
    %65 = vector.broadcast %48 : vector<16x128x1xf32> to vector<16x128x128xf32>
    %66 = vector.broadcast %50 : vector<16x1x128xf32> to vector<16x128x128xf32>
    %67 = arith.mulf %65, %66 : vector<16x128x128xf32>
    %68 = arith.addf %64, %67 : vector<16x128x128xf32>
    %c0_23 = arith.constant 0 : index
    %c16 = arith.constant 16 : index
    %c0_24 = arith.constant 0 : index
    %c0_25 = arith.constant 0 : index
    %69 = vector.load %arg7[%c0_23, %c16, %c0_24, %c0_25] : memref<1x32x128x128xf32, #tpu.memory_space<vmem>>, vector<1x16x128x128xf32>
    %70 = vector.shape_cast %69 : vector<1x16x128x128xf32> to vector<16x128x128xf32>
    %71 = vector.shape_cast %68 : vector<16x128x128xf32> to vector<1x16x128x128xf32>
    tpu.vector_store %arg7[%c0_23, %c16, %c0_24, %c0_25], %71 {strides = array<i32>} : memref<1x32x128x128xf32, #tpu.memory_space<vmem>>, vector<1x16x128x128xf32>,
    return
  }
  func.func @transform_0(%arg0: i32, %arg1: i32, %arg2: i32) -> (i32, i32, i32) {
    %c0_i32 = arith.constant 0 : i32
    %c0_i32_0 = arith.constant 0 : i32
    return %arg0, %c0_i32, %arg1 : i32, i32, i32
  }
  func.func @transform_1(%arg0: i32, %arg1: i32, %arg2: i32) -> (i32, i32, i32) {
    %c0_i32 = arith.constant 0 : i32
    %c0_i32_0 = arith.constant 0 : i32
    return %arg0, %c0_i32, %arg2 : i32, i32, i32
  }
  func.func @transform_2(%arg0: i32, %arg1: i32, %arg2: i32) -> (i32, i32) {
    %c0_i32 = arith.constant 0 : i32
    %c0_i32_0 = arith.constant 0 : i32
    %c0_i32_1 = arith.constant 0 : i32
    return %c0_i32, %c0_i32_0 : i32, i32
  }
  func.func @transform_3(%arg0: i32, %arg1: i32, %arg2: i32) -> (i32, i32) {
    %c0_i32 = arith.constant 0 : i32
    %c0_i32_0 = arith.constant 0 : i32
    %c0_i32_1 = arith.constant 0 : i32
    return %c0_i32, %c0_i32_0 : i32, i32
  }
  func.func @transform_4(%arg0: i32, %arg1: i32, %arg2: i32) -> (i32, i32, i32, i32) {
    %c0_i32 = arith.constant 0 : i32
    %c0_i32_0 = arith.constant 0 : i32
    return %arg0, %c0_i32, %arg1, %arg2 : i32, i32, i32, i32
  }
}

</mosaic_0001>

<llo_original>
// kernel: tpu_custom_call.1
$region0: #{tpu_custom_call.1}
  #allocation0 [shape = 'u32[]', space=smem, size = 0x4, offset = 0x4, fixed_abs, tag = 'smem constant byte address 0x4 - core index']
  #allocation1 [shape = 'u32[144,128]{1,0:T(1,128)}', space=vmem, size = 0x12000, scoped, tag = 'internal scratch']
  %s0 = inlined_call_operand.vmem [shape: f32[2,3,128], index: 0, kind: input, shape index: {}]
  %s1 = inlined_call_operand.vmem [shape: f32[2,3,128], index: 1, kind: input, shape index: {}]
  %s2 = inlined_call_operand.vmem [shape: f32[16,3], index: 2, kind: input, shape index: {}]
  %s3 = inlined_call_operand.vmem [shape: f32[16,1], index: 3, kind: input, shape index: {}]
  %s4 = inlined_call_operand.hbm [shape: f32[2,32,128,128], index: 4, kind: output, shape index: {}]
  %s5 = sld [smem:[#allocation0]]
  $region49: #{tpu_custom_call.1} parent=0
    _
  %s7 = ssub.s32 1, %s5
  %s8 = scalar_select 0, %s7, %s5
  $region1: #{tpu_custom_call.1} parent=0
    #allocation2 [shape = 'u8[4194304]{0}', space=vmem, size = 0x400000, scoped, tag = 'output window, operand 0']
    #allocation3 [shape = 's32[2]{0}', space=sflag, size = 0x8, scoped, tag = 'scoped memory for tpu_custom_call.1']
    %9 = vsyncpa [#allocation3], 0
    %s10 = scalar_lea.sflag [#allocation3], 1
    %11 = vsyncpa %s10, 0
    loop: start=0, step=1, limit=4
    $region2: #{tpu_custom_call.1} parent=1 // loop_pre_header
      _
    $region3: #{tpu_custom_call.1} parent=1 // loop_header
      %s13 = sphi 0, %s17
      %p14 = scmp.ge.s32.totalorder %s13, 4
      %s20 = sphi 0, %s39
      %s21 = sphi 0, %s35
      %s22 = sphi 0, %s31
      %s23 = sphi 0, %s20
      %s24 = sphi 0, %s21
      %s25 = sphi 0, %s22
      %s26 = sphi 0, %s23
      %s27 = sphi 0, %s24
      %s28 = sphi 0, %s25
      %s44 = sphi 0, %s46
      %s47 = sphi 0, %s44
      %s48 = sphi 0, %s47
      %s64 = sphi 0, %s48
      %s72 = sphi 0, %s74
      %s75 = sphi 0, %s72
      %s76 = sphi 0, %s75
      %s92 = sphi 0, %s76
      %s96 = sphi 0, %s96
      %s98 = sphi 0, %s96
      %s99 = sphi 0, %s98
      %s113 = sphi 0, %s99
      %s117 = sphi 0, %s117
      %s119 = sphi 0, %s117
      %s120 = sphi 0, %s119
      %s134 = sphi 0, %s120
      %s144 = sphi 0, %s146
      %s147 = sphi 0, %s144
      %s148 = sphi 0, %s147
      %s164 = sphi 0, %s148
    $region4: #{tpu_custom_call.1} parent=1 // loop_header_branch
      %16 = sbr.rel (%p14) target = $region8
    $region5: #{tpu_custom_call.1} parent=1 // loop_body
      %s18 = ssub.s32 %s13, 1
      %s19 = ssub.s32 %s13, 2
      %s29 = sadd.s32 1, %s22
      %p30 = scmp.ge.s32.totalorder %s29, 1
      %s31 = scalar_select %p30, 0, %s29
      %s32 = sadd.s32 1, %s21
      %s33 = scalar_select %p30, %s32, %s21
      %p34 = scmp.ge.s32.totalorder %s33, 1
      %s35 = scalar_select %p34, 0, %s33
      %s36 = sadd.s32 1, %s20
      %s37 = scalar_select %p34, %s36, %s20
      %p38 = scmp.ge.s32.totalorder %s37, 2
      %s39 = scalar_select %p38, 0, %s37
      %s40 = ssub.s32 %s20, %s39
      %s41 = ssub.s32 %s21, %s35
      %s42 = sor.u32 %s40, %s41
      %p43 = scmp.eq.s32.totalorder %s42, 0
      %s45 = sadd.s32 %s44, 1
      %s46 = scalar_select %p43, %s44, %s45
      %p49 = pneg %p43
      %p50 = scmp.eq.s32.totalorder %s13, 1
      %p51 = por %p49, %p50
      %p52 = scmp.ne.s32.totalorder %s44, %s47
      %p53 = scmp.eq.s32.totalorder %s13, 0
      %p54 = por %p52, %p53
      %p55 = scmp.ne.s32.totalorder %s44, %s47
      %p56 = scmp.eq.s32.totalorder %s18, 1
      %p57 = por %p55, %p56
      %p58 = scmp.ne.s32.totalorder %s47, %s48
      %p59 = scmp.eq.s32.totalorder %s18, 0
      %p60 = por %p58, %p59
      %p61 = scmp.ne.s32.totalorder %s47, %s48
      %p62 = scmp.eq.s32.totalorder %s19, 1
      %p63 = por %p61, %p62
      %p65 = scmp.ne.s32.totalorder %s48, %s64
      %p66 = scmp.eq.s32.totalorder %s19, 0
      %p67 = por %p65, %p66
      %s68 = ssub.s32 %s20, %s39
      %s69 = ssub.s32 %s22, %s31
      %s70 = sor.u32 %s68, %s69
      %p71 = scmp.eq.s32.totalorder %s70, 0
      %s73 = sadd.s32 %s72, 1
      %s74 = scalar_select %p71, %s72, %s73
      %p77 = pneg %p71
      %p78 = scmp.eq.s32.totalorder %s13, 1
      %p79 = por %p77, %p78
      %p80 = scmp.ne.s32.totalorder %s72, %s75
      %p81 = scmp.eq.s32.totalorder %s13, 0
      %p82 = por %p80, %p81
      %p83 = scmp.ne.s32.totalorder %s72, %s75
      %p84 = scmp.eq.s32.totalorder %s18, 1
      %p85 = por %p83, %p84
      %p86 = scmp.ne.s32.totalorder %s75, %s76
      %p87 = scmp.eq.s32.totalorder %s18, 0
      %p88 = por %p86, %p87
      %p89 = scmp.ne.s32.totalorder %s75, %s76
      %p90 = scmp.eq.s32.totalorder %s19, 1
      %p91 = por %p89, %p90
      %p93 = scmp.ne.s32.totalorder %s76, %s92
      %p94 = scmp.eq.s32.totalorder %s19, 0
      %p95 = por %p93, %p94
      %s97 = sadd.s32 %s96, 1
      %p100 = scmp.eq.s32.totalorder %s13, 1
      %p101 = scmp.ne.s32.totalorder %s96, %s98
      %p102 = scmp.eq.s32.totalorder %s13, 0
      %p103 = por %p101, %p102
      %p104 = scmp.ne.s32.totalorder %s96, %s98
      %p105 = scmp.eq.s32.totalorder %s18, 1
      %p106 = por %p104, %p105
      %p107 = scmp.ne.s32.totalorder %s98, %s99
      %p108 = scmp.eq.s32.totalorder %s18, 0
      %p109 = por %p107, %p108
      %p110 = scmp.ne.s32.totalorder %s98, %s99
      %p111 = scmp.eq.s32.totalorder %s19, 1
      %p112 = por %p110, %p111
      %p114 = scmp.ne.s32.totalorder %s99, %s113
      %p115 = scmp.eq.s32.totalorder %s19, 0
      %p116 = por %p114, %p115
      %s118 = sadd.s32 %s117, 1
      %p121 = scmp.eq.s32.totalorder %s13, 1
      %p122 = scmp.ne.s32.totalorder %s117, %s119
      %p123 = scmp.eq.s32.totalorder %s13, 0
      %p124 = por %p122, %p123
      %p125 = scmp.ne.s32.totalorder %s117, %s119
      %p126 = scmp.eq.s32.totalorder %s18, 1
      %p127 = por %p125, %p126
      %p128 = scmp.ne.s32.totalorder %s119, %s120
      %p129 = scmp.eq.s32.totalorder %s18, 0
      %p130 = por %p128, %p129
      %p131 = scmp.ne.s32.totalorder %s119, %s120
      %p132 = scmp.eq.s32.totalorder %s19, 1
      %p133 = por %p131, %p132
      %p135 = scmp.ne.s32.totalorder %s120, %s134
      %p136 = scmp.eq.s32.totalorder %s19, 0
      %p137 = por %p135, %p136
      %s138 = ssub.s32 %s20, %s39
      %s139 = ssub.s32 %s21, %s35
      %s140 = sor.u32 %s138, %s139
      %s141 = ssub.s32 %s22, %s31
      %s142 = sor.u32 %s140, %s141
      %p143 = scmp.eq.s32.totalorder %s142, 0
      %s145 = sadd.s32 %s144, 1
      %s146 = scalar_select %p143, %s144, %s145
      %p149 = pneg %p143
      %p150 = scmp.eq.s32.totalorder %s13, 1
      %p151 = por %p149, %p150
      %p152 = scmp.ne.s32.totalorder %s144, %s147
      %p153 = scmp.eq.s32.totalorder %s13, 0
      %p154 = por %p152, %p153
      %p155 = scmp.ne.s32.totalorder %s144, %s147
      %p156 = scmp.eq.s32.totalorder %s18, 1
      %p157 = por %p155, %p156
      %p158 = scmp.ne.s32.totalorder %s147, %s148
      %p159 = scmp.eq.s32.totalorder %s18, 0
      %p160 = por %p158, %p159
      %p161 = scmp.ne.s32.totalorder %s147, %s148
      %p162 = scmp.eq.s32.totalorder %s19, 1
      %p163 = por %p161, %p162
      %p165 = scmp.ne.s32.totalorder %s148, %s164
      %p166 = scmp.eq.s32.totalorder %s19, 0
      %p167 = por %p165, %p166
      %p168 = scmp.le.s32.totalorder 1, %s13
      %p169 = scmp.lt.s32.totalorder %s13, 3
      %p170 = pnand %p168, %p169
      %p171 = pneg %p170
      // Predicated region
      $region9: #{tpu_custom_call.1} parent=5 // pred_check
        _
      $region10: #{tpu_custom_call.1} parent=5 // pred_check_branch
        %173 = sbr.rel (%p170) target = $region12
      $region11: #{tpu_custom_call.1} parent=5 // pred_region
        %s174 = ssub.s32 %s13, 1
        // Predicated region
        $region13: #{tpu_custom_call.1} parent=11 // pred_check
          %p175 = pneg %p109
        $region14: #{tpu_custom_call.1} parent=11 // pred_check_branch
          %177 = sbr.rel (%p175) target = $region16
        $region15: #{tpu_custom_call.1} parent=11 // pred_region
          _
        $region16: #{tpu_custom_call.1} parent=11 // pred_fallthru
          _
        // Predicated region
        $region17: #{tpu_custom_call.1} parent=11 // pred_check
          %p178 = pneg %p130
        $region18: #{tpu_custom_call.1} parent=11 // pred_check_branch
          %180 = sbr.rel (%p178) target = $region20
        $region19: #{tpu_custom_call.1} parent=11 // pred_region
          _
        $region20: #{tpu_custom_call.1} parent=11 // pred_fallthru
          _
      $region12: #{tpu_custom_call.1} parent=5 // pred_fallthru
        _
      %p181 = scmp.lt.s32.totalorder %s13, 2
      // Predicated region
      $region21: #{tpu_custom_call.1} parent=5 // pred_check
        %p182 = pneg %p181
      $region22: #{tpu_custom_call.1} parent=5 // pred_check_branch
        %184 = sbr.rel (%p182) target = $region24
      $region23: #{tpu_custom_call.1} parent=5 // pred_region
        // Predicated region
        $region25: #{tpu_custom_call.1} parent=23 // pred_check
          %p185 = pneg %p54
        $region26: #{tpu_custom_call.1} parent=23 // pred_check_branch
          %187 = sbr.rel (%p185) target = $region28
        $region27: #{tpu_custom_call.1} parent=23 // pred_region
          %p188 = scmp.lt.s32.totalorder %s20, 1
          %s189 = scalar_select %p188, %s20, 1
          %p190 = scmp.lt.s32.totalorder %s21, 0
          %s191 = scalar_select %p190, %s21, 0
          %s192 = sadd.s32 %s191, %s189
          %s193 = smul.addr %s192, 4
          %s194 = scalar_lea.vmem %s0, %s193
        $region28: #{tpu_custom_call.1} parent=23 // pred_fallthru
          _
        // Predicated region
        $region29: #{tpu_custom_call.1} parent=23 // pred_check
          %p195 = pneg %p82
        $region30: #{tpu_custom_call.1} parent=23 // pred_check_branch
          %197 = sbr.rel (%p195) target = $region32
        $region31: #{tpu_custom_call.1} parent=23 // pred_region
          %p198 = scmp.lt.s32.totalorder %s20, 1
          %s199 = scalar_select %p198, %s20, 1
          %p200 = scmp.lt.s32.totalorder %s22, 0
          %s201 = scalar_select %p200, %s22, 0
          %s202 = sadd.s32 %s201, %s199
          %s203 = smul.addr %s202, 4
          %s204 = scalar_lea.vmem %s1, %s203
        $region32: #{tpu_custom_call.1} parent=23 // pred_fallthru
          _
      $region24: #{tpu_custom_call.1} parent=5 // pred_fallthru
        _
      %p205 = scmp.le.s32.totalorder 1, %s13
      %p206 = scmp.lt.s32.totalorder %s13, 3
      %p207 = pnand %p205, %p206
      %p208 = pneg %p207
      // Predicated region
      $region33: #{tpu_custom_call.1} parent=5 // pred_check
        _
      $region34: #{tpu_custom_call.1} parent=5 // pred_check_branch
        %210 = sbr.rel (%p207) target = $region36
      $region35: #{tpu_custom_call.1} parent=5 // pred_region
        %s211 = ssub.s32 %s13, 1
        %p212 = scmp.lt.s32.totalorder %s23, 1
        %s213 = scalar_select %p212, %s23, 1
        %p214 = scmp.lt.s32.totalorder %s24, 0
        %s215 = scalar_select %p214, %s24, 0
        %s216 = sadd.s32 %s215, %s213
        %s217 = smul.addr %s216, 4
        %s218 = scalar_lea.vmem %s0, %s217
        %p219 = pneg %p60
        %p220 = pneg %p57
        %p221 = scmp.lt.s32.totalorder %s23, 1
        %s222 = scalar_select %p221, %s23, 1
        %p223 = scmp.lt.s32.totalorder %s25, 0
        %s224 = scalar_select %p223, %s25, 0
        %s225 = sadd.s32 %s224, %s222
        %s226 = smul.addr %s225, 4
        %s227 = scalar_lea.vmem %s1, %s226
        %p228 = pneg %p88
        %p229 = pneg %p85
        %p230 = pneg %p109
        %p231 = pneg %p106
        %p232 = pneg %p130
        %p233 = pneg %p127
        %p234 = pneg %p160
        %p235 = pneg %p157
        %s236 = sand.u32 %s147, 1
        %s237 = scalar_lea.sflag [#allocation3], %s236
        %s238 = sand.u32 %s147, 1
        %s239 = smul.addr %s238, 4096
        %s240 = scalar_lea.vmem [#allocation2], %s239
        %p241 = scmp.lt.s32.totalorder %s23, 1
        %s242 = scalar_select %p241, %s23, 1
        %p243 = scmp.lt.s32.totalorder %s24, 0
        %s244 = scalar_select %p243, %s24, 0
        %s245 = sadd.s32 %s244, %s242
        %s246 = smul.addr %s245, 4
        %s247 = scalar_lea.vmem %s0, %s246
        %p248 = scmp.lt.s32.totalorder %s23, 1
        %s249 = scalar_select %p248, %s23, 1
        %p250 = scmp.lt.s32.totalorder %s25, 0
        %s251 = scalar_select %p250, %s25, 0
        %s252 = sadd.s32 %s251, %s249
        %s253 = smul.addr %s252, 4
        %s254 = scalar_lea.vmem %s1, %s253
        %s255 = smul.u32 16, %s24
        %v256 = vld [vmem:[%s2] sm:$0xff]
        %v257 = vld [vmem:[%s2 + $0x8] sm:$0xff]
        %v258 = vld [vmem:[%s247] sm:$0x1]
        %260 = vset.pattern.permute.xlu0 0
        %261 = vperm.xlu0 %260, %v256
        %v262 = vpop.permute.xlu0 %261
        %265 = vset.pattern.permute.xlu0 0
        %266 = vperm.xlu0 %265, %v257
        %v267 = vpop.permute.xlu0 %266
        %v269 = vlaneseq
        %v270 = vshrl.u32 %v269, 7
        %v271 = vsub.s32 0, %v270
        %v272 = vrot.slane %v258, %v271
        %v273 = vmul.f32 %v262, %v272
        %v274 = vmul.f32 %v267, %v272
        %v275 = vld [vmem:[%s247 + $0x1] sm:$0x1]
        %276 = vset.pattern.permute.xlu0 1
        %277 = vperm.xlu0 %276, %v256
        %v278 = vpop.permute.xlu0 %277
        %280 = vset.pattern.permute.xlu0 1
        %281 = vperm.xlu0 %280, %v257
        %v282 = vpop.permute.xlu0 %281
        %v284 = vlaneseq
        %v285 = vshrl.u32 %v284, 7
        %v286 = vsub.s32 0, %v285
        %v287 = vrot.slane %v275, %v286
        %v288 = vmul.f32 %v278, %v287
        %v289 = vmul.f32 %v282, %v287
        %v290 = vadd.f32 %v273, %v288
        %v291 = vadd.f32 %v274, %v289
        %v292 = vld [vmem:[%s247 + $0x2] sm:$0x1]
        %293 = vset.pattern.permute.xlu0 2
        %294 = vperm.xlu0 %293, %v256
        %v295 = vpop.permute.xlu0 %294
        %297 = vset.pattern.permute.xlu0 2
        %298 = vperm.xlu0 %297, %v257
        %v299 = vpop.permute.xlu0 %298
        %v301 = vlaneseq
        %v302 = vshrl.u32 %v301, 7
        %v303 = vsub.s32 0, %v302
        %v304 = vrot.slane %v292, %v303
        %v305 = vmul.f32 %v295, %v304
        %v306 = vmul.f32 %v299, %v304
        %v307 = vadd.f32 %v290, %v305
        %v308 = vadd.f32 %v291, %v306
        %v309 = vld [vmem:[%s3] sm:$0xff]
        %v310 = vld [vmem:[%s3 + $0x8] sm:$0xff]
        %312 = vset.pattern.permute.xlu0 0
        %313 = vperm.xlu0 %312, %v309
        %v314 = vpop.permute.xlu0 %313
        %317 = vset.pattern.permute.xlu0 0
        %318 = vperm.xlu0 %317, %v310
        %v319 = vpop.permute.xlu0 %318
        %v321 = vadd.f32 %v307, %v314
        %v322 = vadd.f32 %v308, %v319
        %v323 = vld [vmem:[%s254] sm:$0x1]
        %v324 = vlaneseq
        %v325 = vshrl.u32 %v324, 7
        %v326 = vsub.s32 0, %v325
        %v327 = vrot.slane %v323, %v326
        %v328 = vmul.f32 %v262, %v327
        %v329 = vmul.f32 %v267, %v327
        %v330 = vld [vmem:[%s254 + $0x1] sm:$0x1]
        %v331 = vlaneseq
        %v332 = vshrl.u32 %v331, 7
        %v333 = vsub.s32 0, %v332
        %v334 = vrot.slane %v330, %v333
        %v335 = vmul.f32 %v278, %v334
        %v336 = vmul.f32 %v282, %v334
        %v337 = vadd.f32 %v328, %v335
        %v338 = vadd.f32 %v329, %v336
        %v339 = vld [vmem:[%s254 + $0x2] sm:$0x1]
        %v340 = vlaneseq
        %v341 = vshrl.u32 %v340, 7
        %v342 = vsub.s32 0, %v341
        %v343 = vrot.slane %v339, %v342
        %v344 = vmul.f32 %v295, %v343
        %v345 = vmul.f32 %v299, %v343
        %v346 = vadd.f32 %v337, %v344
        %v347 = vadd.f32 %v338, %v345
        %v348 = vand.u32 2147483647, %v321
        %vm349 = vcmp.le.f32.partialorder %v348, 0.7853982
        %vm350 = vcmp.lt.s32.totalorder %v321, 0
        %v351 = vand.u32 %v321, 2139095040
        %v352 = vshrl.u32 %v351, 23
        %v353 = vsub.s32 %v352, 127
        %v354 = vand.u32 2147483647, %v321
        %v355 = vand.u32 %v354, 8388607
        %v356 = vor.u32 %v355, 8388608
        %v357 = vsub.s32 0, %v356
        %v358 = vadd.s32 %v353, 1
        %vm359 = vcmp.gt.s32.totalorder %v358, 0
        %v360 = vsel %vm359, %v358, 0
        %v361 = vshrl.u32 %v360, 5
        %v362 = vand.u32 %v360, 31
        %v363 = vsub.s32 32, %v362
        %v364 = vshrl.u32 683565275, %v363
        %v365 = vshll.u32 683565275, %v362
        %v366 = vshrl.u32 2475754826, %v363
        %v367 = vor.u32 %v365, %v366
        %v368 = vshll.u32 2475754826, %v362
        %v369 = vshrl.u32 2131351028, %v363
        %v370 = vor.u32 %v368, %v369
        %v371 = vshll.u32 2131351028, %v362
        %v372 = vshrl.u32 2102212464, %v363
        %v373 = vor.u32 %v371, %v372
        %v374 = vshll.u32 2102212464, %v362
        %v375 = vshrl.u32 920167782, %v363
        %v376 = vor.u32 %v374, %v375
        %v377 = vshll.u32 920167782, %v362
        %v378 = vshrl.u32 1326507024, %v363
        %v379 = vor.u32 %v377, %v378
        %vm380 = vcmp.lt.s32.totalorder %v361, 1
        %vm381 = vcmp.lt.s32.totalorder %v361, 2
        %vm382 = vcmp.lt.s32.totalorder %v361, 3
        %vm383 = vcmp.lt.s32.totalorder %v361, 4
        %v384 = vsel %vm380, %v364, %v367
        %v385 = vsel %vm383, %v373, 2102212464
        %v386 = vsel %vm382, %v370, %v385
        %v387 = vsel %vm381, %v384, %v386
        %v388 = vsel %vm380, %v367, %v370
        %v389 = vsel %vm383, %v376, 920167782
        %v390 = vsel %vm382, %v373, %v389
        %v391 = vsel %vm381, %v388, %v390
        %v392 = vsel %vm380, %v370, %v373
        %v393 = vsel %vm383, %v379, 1326507024
        %v394 = vsel %vm382, %v376, %v393
        %v395 = vsel %vm381, %v392, %v394
        %v396 = vshll.u32 %v356, 8
        %v397 = vmul.u32.u64.compose %v396, %v395
        %v398 = vextract.low.u32 %v397
        %v399 = vextract.high.u32 %v397
        %v400 = vmul.u32.u64.compose %v396, %v391
        %v401 = vextract.low.u32 %v400
        %v402 = vextract.high.u32 %v400
        %v403 = vmul.u32 %v396, %v387
        %v404 = vadd.s32 %v399, %v401
        %vm405 = vc.u32 %v399, %v401
        %v406 = vadd.s32 %v402, 1
        %v407 = vsel %vm405, %v406, %v402
        %v408 = vadd.s32 %v403, %v407
        %v409 = vadd.s32 %v408, 536870912
        %v410 = vshrl.u32 %v409, 30
        %v411 = vshll.u32 %v410, 30
        %v412 = vsub.s32 %v408, %v411
        %vm413 = vcmp.lt.s32.totalorder %v412, 0
        %v414 = vsub.s32 0, %v412
        %v415 = vsel %vm413, %v414, %v412
        %v416 = vclz %v415
        %v417 = vsub.s32 %v416, 2
        %vm418 = vcmp.gt.s32.totalorder 0, %v417
        %v419 = vsel %vm418, 0, %v417
        %v420 = vsub.s32 32, %v419
        %v421 = vshll.u32 %v412, %v419
        %v422 = vshrl.u32 %v404, %v420
        %v423 = vor.u32 %v421, %v422
        %v424 = vsub.s32 4294967266, %v419
        %v425 = vadd.s32 %v424, 127
        %v426 = vshll.u32 %v425, 23
        %v427 = vor.u32 4788187, %v426
        %v428 = vand.u32 2147483647, %v427
        %v430 = vcvt.s32.f32 %v423
        %v431 = vmul.f32 %v430, %v428
        %v432 = vxor.u32 %v431, 2147483648
        %v433 = vsel %vm350, %v432, %v431
        %v434 = vsub.s32 4, %v410
        %v435 = vsel %vm350, %v434, %v410
        %v436 = vsel %vm349, %v321, %v433
        %v437 = vsel %vm349, 0, %v435
        %v438 = vcosq.f32.pop %v436
        %v439 = vsinq.f32.pop %v436
        %vm440 = vweird.f32 %v321
        %v441 = vadd.s32 %v437, 3
        %v442 = vand.u32 %v441, 3
        %vm443 = vcmp.lt.s32.totalorder %v442, 2
        %vm444 = vcmp.eq.s32.totalorder %v442, 0
        %v445 = vxor.u32 %v439, 2147483648
        %v446 = vsel %vm444, %v438, %v445
        %vm447 = vcmp.eq.s32.totalorder %v442, 2
        %v448 = vxor.u32 %v438, 2147483648
        %v449 = vsel %vm447, %v448, %v439
        %v450 = vsel %vm443, %v446, %v449
        %v451 = vsel %vm440, nan, %v450
        %v452 = vand.u32 2147483647, %v322
        %vm453 = vcmp.le.f32.partialorder %v452, 0.7853982
        %vm454 = vcmp.lt.s32.totalorder %v322, 0
        %v455 = vand.u32 %v322, 2139095040
        %v456 = vshrl.u32 %v455, 23
        %v457 = vsub.s32 %v456, 127
        %v458 = vand.u32 2147483647, %v322
        %v459 = vand.u32 %v458, 8388607
        %v460 = vor.u32 %v459, 8388608
        %v461 = vsub.s32 0, %v460
        %v462 = vadd.s32 %v457, 1
        %vm463 = vcmp.gt.s32.totalorder %v462, 0
        %v464 = vsel %vm463, %v462, 0
        %v465 = vshrl.u32 %v464, 5
        %v466 = vand.u32 %v464, 31
        %v467 = vsub.s32 32, %v466
        %v468 = vshrl.u32 683565275, %v467
        %v469 = vshll.u32 683565275, %v466
        %v470 = vshrl.u32 2475754826, %v467
        %v471 = vor.u32 %v469, %v470
        %v472 = vshll.u32 2475754826, %v466
        %v473 = vshrl.u32 2131351028, %v467
        %v474 = vor.u32 %v472, %v473
        %v475 = vshll.u32 2131351028, %v466
        %v476 = vshrl.u32 2102212464, %v467
        %v477 = vor.u32 %v475, %v476
        %v478 = vshll.u32 2102212464, %v466
        %v479 = vshrl.u32 920167782, %v467
        %v480 = vor.u32 %v478, %v479
        %v481 = vshll.u32 920167782, %v466
        %v482 = vshrl.u32 1326507024, %v467
        %v483 = vor.u32 %v481, %v482
        %vm484 = vcmp.lt.s32.totalorder %v465, 1
        %vm485 = vcmp.lt.s32.totalorder %v465, 2
        %vm486 = vcmp.lt.s32.totalorder %v465, 3
        %vm487 = vcmp.lt.s32.totalorder %v465, 4
        %v488 = vsel %vm484, %v468, %v471
        %v489 = vsel %vm487, %v477, 2102212464
        %v490 = vsel %vm486, %v474, %v489
        %v491 = vsel %vm485, %v488, %v490
        %v492 = vsel %vm484, %v471, %v474
        %v493 = vsel %vm487, %v480, 920167782
        %v494 = vsel %vm486, %v477, %v493
        %v495 = vsel %vm485, %v492, %v494
        %v496 = vsel %vm484, %v474, %v477
        %v497 = vsel %vm487, %v483, 1326507024
        %v498 = vsel %vm486, %v480, %v497
        %v499 = vsel %vm485, %v496, %v498
        %v500 = vshll.u32 %v460, 8
        %v501 = vmul.u32.u64.compose %v500, %v499
        %v502 = vextract.low.u32 %v501
        %v503 = vextract.high.u32 %v501
        %v504 = vmul.u32.u64.compose %v500, %v495
        %v505 = vextract.low.u32 %v504
        %v506 = vextract.high.u32 %v504
        %v507 = vmul.u32 %v500, %v491
        %v508 = vadd.s32 %v503, %v505
        %vm509 = vc.u32 %v503, %v505
        %v510 = vadd.s32 %v506, 1
        %v511 = vsel %vm509, %v510, %v506
        %v512 = vadd.s32 %v507, %v511
        %v513 = vadd.s32 %v512, 536870912
        %v514 = vshrl.u32 %v513, 30
        %v515 = vshll.u32 %v514, 30
        %v516 = vsub.s32 %v512, %v515
        %vm517 = vcmp.lt.s32.totalorder %v516, 0
        %v518 = vsub.s32 0, %v516
        %v519 = vsel %vm517, %v518, %v516
        %v520 = vclz %v519
        %v521 = vsub.s32 %v520, 2
        %vm522 = vcmp.gt.s32.totalorder 0, %v521
        %v523 = vsel %vm522, 0, %v521
        %v524 = vsub.s32 32, %v523
        %v525 = vshll.u32 %v516, %v523
        %v526 = vshrl.u32 %v508, %v524
        %v527 = vor.u32 %v525, %v526
        %v528 = vsub.s32 4294967266, %v523
        %v529 = vadd.s32 %v528, 127
        %v530 = vshll.u32 %v529, 23
        %v531 = vor.u32 4788187, %v530
        %v532 = vand.u32 2147483647, %v531
        %v534 = vcvt.s32.f32 %v527
        %v535 = vmul.f32 %v534, %v532
        %v536 = vxor.u32 %v535, 2147483648
        %v537 = vsel %vm454, %v536, %v535
        %v538 = vsub.s32 4, %v514
        %v539 = vsel %vm454, %v538, %v514
        %v540 = vsel %vm453, %v322, %v537
        %v541 = vsel %vm453, 0, %v539
        %v542 = vcosq.f32.pop %v540
        %v543 = vsinq.f32.pop %v540
        %vm544 = vweird.f32 %v322
        %v545 = vadd.s32 %v541, 3
        %v546 = vand.u32 %v545, 3
        %vm547 = vcmp.lt.s32.totalorder %v546, 2
        %vm548 = vcmp.eq.s32.totalorder %v546, 0
        %v549 = vxor.u32 %v543, 2147483648
        %v550 = vsel %vm548, %v542, %v549
        %vm551 = vcmp.eq.s32.totalorder %v546, 2
        %v552 = vxor.u32 %v542, 2147483648
        %v553 = vsel %vm551, %v552, %v543
        %v554 = vsel %vm547, %v550, %v553
        %v555 = vsel %vm544, nan, %v554
        %v556 = vand.u32 2147483647, %v321
        %vm557 = vcmp.le.f32.partialorder %v556, 0.7853982
        %vm558 = vcmp.lt.s32.totalorder %v321, 0
        %v559 = vand.u32 %v321, 2139095040
        %v560 = vshrl.u32 %v559, 23
        %v561 = vsub.s32 %v560, 127
        %v562 = vand.u32 2147483647, %v321
        %v563 = vand.u32 %v562, 8388607
        %v564 = vor.u32 %v563, 8388608
        %v565 = vsub.s32 0, %v564
        %v566 = vadd.s32 %v561, 1
        %vm567 = vcmp.gt.s32.totalorder %v566, 0
        %v568 = vsel %vm567, %v566, 0
        %v569 = vshrl.u32 %v568, 5
        %v570 = vand.u32 %v568, 31
        %v571 = vsub.s32 32, %v570
        %v572 = vshrl.u32 683565275, %v571
        %v573 = vshll.u32 683565275, %v570
        %v574 = vshrl.u32 2475754826, %v571
        %v575 = vor.u32 %v573, %v574
        %v576 = vshll.u32 2475754826, %v570
        %v577 = vshrl.u32 2131351028, %v571
        %v578 = vor.u32 %v576, %v577
        %v579 = vshll.u32 2131351028, %v570
        %v580 = vshrl.u32 2102212464, %v571
        %v581 = vor.u32 %v579, %v580
        %v582 = vshll.u32 2102212464, %v570
        %v583 = vshrl.u32 920167782, %v571
        %v584 = vor.u32 %v582, %v583
        %v585 = vshll.u32 920167782, %v570
        %v586 = vshrl.u32 1326507024, %v571
        %v587 = vor.u32 %v585, %v586
        %vm588 = vcmp.lt.s32.totalorder %v569, 1
        %vm589 = vcmp.lt.s32.totalorder %v569, 2
        %vm590 = vcmp.lt.s32.totalorder %v569, 3
        %vm591 = vcmp.lt.s32.totalorder %v569, 4
        %v592 = vsel %vm588, %v572, %v575
        %v593 = vsel %vm591, %v581, 2102212464
        %v594 = vsel %vm590, %v578, %v593
        %v595 = vsel %vm589, %v592, %v594
        %v596 = vsel %vm588, %v575, %v578
        %v597 = vsel %vm591, %v584, 920167782
        %v598 = vsel %vm590, %v581, %v597
        %v599 = vsel %vm589, %v596, %v598
        %v600 = vsel %vm588, %v578, %v581
        %v601 = vsel %vm591, %v587, 1326507024
        %v602 = vsel %vm590, %v584, %v601
        %v603 = vsel %vm589, %v600, %v602
        %v604 = vshll.u32 %v564, 8
        %v605 = vmul.u32.u64.compose %v604, %v603
        %v606 = vextract.low.u32 %v605
        %v607 = vextract.high.u32 %v605
        %v608 = vmul.u32.u64.compose %v604, %v599
        %v609 = vextract.low.u32 %v608
        %v610 = vextract.high.u32 %v608
        %v611 = vmul.u32 %v604, %v595
        %v612 = vadd.s32 %v607, %v609
        %vm613 = vc.u32 %v607, %v609
        %v614 = vadd.s32 %v610, 1
        %v615 = vsel %vm613, %v614, %v610
        %v616 = vadd.s32 %v611, %v615
        %v617 = vadd.s32 %v616, 536870912
        %v618 = vshrl.u32 %v617, 30
        %v619 = vshll.u32 %v618, 30
        %v620 = vsub.s32 %v616, %v619
        %vm621 = vcmp.lt.s32.totalorder %v620, 0
        %v622 = vsub.s32 0, %v620
        %v623 = vsel %vm621, %v622, %v620
        %v624 = vclz %v623
        %v625 = vsub.s32 %v624, 2
        %vm626 = vcmp.gt.s32.totalorder 0, %v625
        %v627 = vsel %vm626, 0, %v625
        %v628 = vsub.s32 32, %v627
        %v629 = vshll.u32 %v620, %v627
        %v630 = vshrl.u32 %v612, %v628
        %v631 = vor.u32 %v629, %v630
        %v632 = vsub.s32 4294967266, %v627
        %v633 = vadd.s32 %v632, 127
        %v634 = vshll.u32 %v633, 23
        %v635 = vor.u32 4788187, %v634
        %v636 = vand.u32 2147483647, %v635
        %v638 = vcvt.s32.f32 %v631
        %v639 = vmul.f32 %v638, %v636
        %v640 = vxor.u32 %v639, 2147483648
        %v641 = vsel %vm558, %v640, %v639
        %v642 = vsub.s32 4, %v618
        %v643 = vsel %vm558, %v642, %v618
        %v644 = vsel %vm557, %v321, %v641
        %v645 = vsel %vm557, 0, %v643
        %v646 = vcosq.f32.pop %v644
        %v647 = vsinq.f32.pop %v644
        %vm648 = vweird.f32 %v321
        %v649 = vand.u32 %v645, 3
        %vm650 = vcmp.lt.s32.totalorder %v649, 2
        %vm651 = vcmp.eq.s32.totalorder %v649, 0
        %v652 = vxor.u32 %v647, 2147483648
        %v653 = vsel %vm651, %v646, %v652
        %vm654 = vcmp.eq.s32.totalorder %v649, 2
        %v655 = vxor.u32 %v646, 2147483648
        %v656 = vsel %vm654, %v655, %v647
        %v657 = vsel %vm650, %v653, %v656
        %v658 = vsel %vm648, nan, %v657
        %v659 = vand.u32 2147483647, %v322
        %vm660 = vcmp.le.f32.partialorder %v659, 0.7853982
        %vm661 = vcmp.lt.s32.totalorder %v322, 0
        %v662 = vand.u32 %v322, 2139095040
        %v663 = vshrl.u32 %v662, 23
        %v664 = vsub.s32 %v663, 127
        %v665 = vand.u32 2147483647, %v322
        %v666 = vand.u32 %v665, 8388607
        %v667 = vor.u32 %v666, 8388608
        %v668 = vsub.s32 0, %v667
        %v669 = vadd.s32 %v664, 1
        %vm670 = vcmp.gt.s32.totalorder %v669, 0
        %v671 = vsel %vm670, %v669, 0
        %v672 = vshrl.u32 %v671, 5
        %v673 = vand.u32 %v671, 31
        %v674 = vsub.s32 32, %v673
        %v675 = vshrl.u32 683565275, %v674
        %v676 = vshll.u32 683565275, %v673
        %v677 = vshrl.u32 2475754826, %v674
        %v678 = vor.u32 %v676, %v677
        %v679 = vshll.u32 2475754826, %v673
        %v680 = vshrl.u32 2131351028, %v674
        %v681 = vor.u32 %v679, %v680
        %v682 = vshll.u32 2131351028, %v673
        %v683 = vshrl.u32 2102212464, %v674
        %v684 = vor.u32 %v682, %v683
        %v685 = vshll.u32 2102212464, %v673
        %v686 = vshrl.u32 920167782, %v674
        %v687 = vor.u32 %v685, %v686
        %v688 = vshll.u32 920167782, %v673
        %v689 = vshrl.u32 1326507024, %v674
        %v690 = vor.u32 %v688, %v689
        %vm691 = vcmp.lt.s32.totalorder %v672, 1
        %vm692 = vcmp.lt.s32.totalorder %v672, 2
        %vm693 = vcmp.lt.s32.totalorder %v672, 3
        %vm694 = vcmp.lt.s32.totalorder %v672, 4
        %v695 = vsel %vm691, %v675, %v678
        %v696 = vsel %vm694, %v684, 2102212464
        %v697 = vsel %vm693, %v681, %v696
        %v698 = vsel %vm692, %v695, %v697
        %v699 = vsel %vm691, %v678, %v681
        %v700 = vsel %vm694, %v687, 920167782
        %v701 = vsel %vm693, %v684, %v700
        %v702 = vsel %vm692, %v699, %v701
        %v703 = vsel %vm691, %v681, %v684
        %v704 = vsel %vm694, %v690, 1326507024
        %v705 = vsel %vm693, %v687, %v704
        %v706 = vsel %vm692, %v703, %v705
        %v707 = vshll.u32 %v667, 8
        %v708 = vmul.u32.u64.compose %v707, %v706
        %v709 = vextract.low.u32 %v708
        %v710 = vextract.high.u32 %v708
        %v711 = vmul.u32.u64.compose %v707, %v702
        %v712 = vextract.low.u32 %v711
        %v713 = vextract.high.u32 %v711
        %v714 = vmul.u32 %v707, %v698
        %v715 = vadd.s32 %v710, %v712
        %vm716 = vc.u32 %v710, %v712
        %v717 = vadd.s32 %v713, 1
        %v718 = vsel %vm716, %v717, %v713
        %v719 = vadd.s32 %v714, %v718
        %v720 = vadd.s32 %v719, 536870912
        %v721 = vshrl.u32 %v720, 30
        %v722 = vshll.u32 %v721, 30
        %v723 = vsub.s32 %v719, %v722
        %vm724 = vcmp.lt.s32.totalorder %v723, 0
        %v725 = vsub.s32 0, %v723
        %v726 = vsel %vm724, %v725, %v723
        %v727 = vclz %v726
        %v728 = vsub.s32 %v727, 2
        %vm729 = vcmp.gt.s32.totalorder 0, %v728
        %v730 = vsel %vm729, 0, %v728
        %v731 = vsub.s32 32, %v730
        %v732 = vshll.u32 %v723, %v730
        %v733 = vshrl.u32 %v715, %v731
        %v734 = vor.u32 %v732, %v733
        %v735 = vsub.s32 4294967266, %v730
        %v736 = vadd.s32 %v735, 127
        %v737 = vshll.u32 %v736, 23
        %v738 = vor.u32 4788187, %v737
        %v739 = vand.u32 2147483647, %v738
        %v741 = vcvt.s32.f32 %v734
        %v742 = vmul.f32 %v741, %v739
        %v743 = vxor.u32 %v742, 2147483648
        %v744 = vsel %vm661, %v743, %v742
        %v745 = vsub.s32 4, %v721
        %v746 = vsel %vm661, %v745, %v721
        %v747 = vsel %vm660, %v322, %v744
        %v748 = vsel %vm660, 0, %v746
        %v749 = vcosq.f32.pop %v747
        %v750 = vsinq.f32.pop %v747
        %vm751 = vweird.f32 %v322
        %v752 = vand.u32 %v748, 3
        %vm753 = vcmp.lt.s32.totalorder %v752, 2
        %vm754 = vcmp.eq.s32.totalorder %v752, 0
        %v755 = vxor.u32 %v750, 2147483648
        %v756 = vsel %vm754, %v749, %v755
        %vm757 = vcmp.eq.s32.totalorder %v752, 2
        %v758 = vxor.u32 %v749, 2147483648
        %v759 = vsel %vm757, %v758, %v750
        %v760 = vsel %vm753, %v756, %v759
        %v761 = vsel %vm751, nan, %v760
        %v762 = vand.u32 2147483647, %v346
        %vm763 = vcmp.le.f32.partialorder %v762, 0.7853982
        %vm764 = vcmp.lt.s32.totalorder %v346, 0
        %v765 = vand.u32 %v346, 2139095040
        %v766 = vshrl.u32 %v765, 23
        %v767 = vsub.s32 %v766, 127
        %v768 = vand.u32 2147483647, %v346
        %v769 = vand.u32 %v768, 8388607
        %v770 = vor.u32 %v769, 8388608
        %v771 = vsub.s32 0, %v770
        %v772 = vadd.s32 %v767, 1
        %vm773 = vcmp.gt.s32.totalorder %v772, 0
        %v774 = vsel %vm773, %v772, 0
        %v775 = vshrl.u32 %v774, 5
        %v776 = vand.u32 %v774, 31
        %v777 = vsub.s32 32, %v776
        %v778 = vshrl.u32 683565275, %v777
        %v779 = vshll.u32 683565275, %v776
        %v780 = vshrl.u32 2475754826, %v777
        %v781 = vor.u32 %v779, %v780
        %v782 = vshll.u32 2475754826, %v776
        %v783 = vshrl.u32 2131351028, %v777
        %v784 = vor.u32 %v782, %v783
        %v785 = vshll.u32 2131351028, %v776
        %v786 = vshrl.u32 2102212464, %v777
        %v787 = vor.u32 %v785, %v786
        %v788 = vshll.u32 2102212464, %v776
        %v789 = vshrl.u32 920167782, %v777
        %v790 = vor.u32 %v788, %v789
        %v791 = vshll.u32 920167782, %v776
        %v792 = vshrl.u32 1326507024, %v777
        %v793 = vor.u32 %v791, %v792
        %vm794 = vcmp.lt.s32.totalorder %v775, 1
        %vm795 = vcmp.lt.s32.totalorder %v775, 2
        %vm796 = vcmp.lt.s32.totalorder %v775, 3
        %vm797 = vcmp.lt.s32.totalorder %v775, 4
        %v798 = vsel %vm794, %v778, %v781
        %v799 = vsel %vm797, %v787, 2102212464
        %v800 = vsel %vm796, %v784, %v799
        %v801 = vsel %vm795, %v798, %v800
        %v802 = vsel %vm794, %v781, %v784
        %v803 = vsel %vm797, %v790, 920167782
        %v804 = vsel %vm796, %v787, %v803
        %v805 = vsel %vm795, %v802, %v804
        %v806 = vsel %vm794, %v784, %v787
        %v807 = vsel %vm797, %v793, 1326507024
        %v808 = vsel %vm796, %v790, %v807
        %v809 = vsel %vm795, %v806, %v808
        %v810 = vshll.u32 %v770, 8
        %v811 = vmul.u32.u64.compose %v810, %v809
        %v812 = vextract.low.u32 %v811
        %v813 = vextract.high.u32 %v811
        %v814 = vmul.u32.u64.compose %v810, %v805
        %v815 = vextract.low.u32 %v814
        %v816 = vextract.high.u32 %v814
        %v817 = vmul.u32 %v810, %v801
        %v818 = vadd.s32 %v813, %v815
        %vm819 = vc.u32 %v813, %v815
        %v820 = vadd.s32 %v816, 1
        %v821 = vsel %vm819, %v820, %v816
        %v822 = vadd.s32 %v817, %v821
        %v823 = vadd.s32 %v822, 536870912
        %v824 = vshrl.u32 %v823, 30
        %v825 = vshll.u32 %v824, 30
        %v826 = vsub.s32 %v822, %v825
        %vm827 = vcmp.lt.s32.totalorder %v826, 0
        %v828 = vsub.s32 0, %v826
        %v829 = vsel %vm827, %v828, %v826
        %v830 = vclz %v829
        %v831 = vsub.s32 %v830, 2
        %vm832 = vcmp.gt.s32.totalorder 0, %v831
        %v833 = vsel %vm832, 0, %v831
        %v834 = vsub.s32 32, %v833
        %v835 = vshll.u32 %v826, %v833
        %v836 = vshrl.u32 %v818, %v834
        %v837 = vor.u32 %v835, %v836
        %v838 = vsub.s32 4294967266, %v833
        %v839 = vadd.s32 %v838, 127
        %v840 = vshll.u32 %v839, 23
        %v841 = vor.u32 4788187, %v840
        %v842 = vand.u32 2147483647, %v841
        %v844 = vcvt.s32.f32 %v837
        %v845 = vmul.f32 %v844, %v842
        %v846 = vxor.u32 %v845, 2147483648
        %v847 = vsel %vm764, %v846, %v845
        %v848 = vsub.s32 4, %v824
        %v849 = vsel %vm764, %v848, %v824
        %v850 = vsel %vm763, %v346, %v847
        %v851 = vsel %vm763, 0, %v849
        %v852 = vcosq.f32.pop %v850
        %v853 = vsinq.f32.pop %v850
        %vm854 = vweird.f32 %v346
        %v855 = vadd.s32 %v851, 3
        %v856 = vand.u32 %v855, 3
        %vm857 = vcmp.lt.s32.totalorder %v856, 2
        %vm858 = vcmp.eq.s32.totalorder %v856, 0
        %v859 = vxor.u32 %v853, 2147483648
        %v860 = vsel %vm858, %v852, %v859
        %vm861 = vcmp.eq.s32.totalorder %v856, 2
        %v862 = vxor.u32 %v852, 2147483648
        %v863 = vsel %vm861, %v862, %v853
        %v864 = vsel %vm857, %v860, %v863
        %v865 = vsel %vm854, nan, %v864
        %v866 = vand.u32 2147483647, %v347
        %vm867 = vcmp.le.f32.partialorder %v866, 0.7853982
        %vm868 = vcmp.lt.s32.totalorder %v347, 0
        %v869 = vand.u32 %v347, 2139095040
        %v870 = vshrl.u32 %v869, 23
        %v871 = vsub.s32 %v870, 127
        %v872 = vand.u32 2147483647, %v347
        %v873 = vand.u32 %v872, 8388607
        %v874 = vor.u32 %v873, 8388608
        %v875 = vsub.s32 0, %v874
        %v876 = vadd.s32 %v871, 1
        %vm877 = vcmp.gt.s32.totalorder %v876, 0
        %v878 = vsel %vm877, %v876, 0
        %v879 = vshrl.u32 %v878, 5
        %v880 = vand.u32 %v878, 31
        %v881 = vsub.s32 32, %v880
        %v882 = vshrl.u32 683565275, %v881
        %v883 = vshll.u32 683565275, %v880
        %v884 = vshrl.u32 2475754826, %v881
        %v885 = vor.u32 %v883, %v884
        %v886 = vshll.u32 2475754826, %v880
        %v887 = vshrl.u32 2131351028, %v881
        %v888 = vor.u32 %v886, %v887
        %v889 = vshll.u32 2131351028, %v880
        %v890 = vshrl.u32 2102212464, %v881
        %v891 = vor.u32 %v889, %v890
        %v892 = vshll.u32 2102212464, %v880
        %v893 = vshrl.u32 920167782, %v881
        %v894 = vor.u32 %v892, %v893
        %v895 = vshll.u32 920167782, %v880
        %v896 = vshrl.u32 1326507024, %v881
        %v897 = vor.u32 %v895, %v896
        %vm898 = vcmp.lt.s32.totalorder %v879, 1
        %vm899 = vcmp.lt.s32.totalorder %v879, 2
        %vm900 = vcmp.lt.s32.totalorder %v879, 3
        %vm901 = vcmp.lt.s32.totalorder %v879, 4
        %v902 = vsel %vm898, %v882, %v885
        %v903 = vsel %vm901, %v891, 2102212464
        %v904 = vsel %vm900, %v888, %v903
        %v905 = vsel %vm899, %v902, %v904
        %v906 = vsel %vm898, %v885, %v888
        %v907 = vsel %vm901, %v894, 920167782
        %v908 = vsel %vm900, %v891, %v907
        %v909 = vsel %vm899, %v906, %v908
        %v910 = vsel %vm898, %v888, %v891
        %v911 = vsel %vm901, %v897, 1326507024
        %v912 = vsel %vm900, %v894, %v911
        %v913 = vsel %vm899, %v910, %v912
        %v914 = vshll.u32 %v874, 8
        %v915 = vmul.u32.u64.compose %v914, %v913
        %v916 = vextract.low.u32 %v915
        %v917 = vextract.high.u32 %v915
        %v918 = vmul.u32.u64.compose %v914, %v909
        %v919 = vextract.low.u32 %v918
        %v920 = vextract.high.u32 %v918
        %v921 = vmul.u32 %v914, %v905
        %v922 = vadd.s32 %v917, %v919
        %vm923 = vc.u32 %v917, %v919
        %v924 = vadd.s32 %v920, 1
        %v925 = vsel %vm923, %v924, %v920
        %v926 = vadd.s32 %v921, %v925
        %v927 = vadd.s32 %v926, 536870912
        %v928 = vshrl.u32 %v927, 30
        %v929 = vshll.u32 %v928, 30
        %v930 = vsub.s32 %v926, %v929
        %vm931 = vcmp.lt.s32.totalorder %v930, 0
        %v932 = vsub.s32 0, %v930
        %v933 = vsel %vm931, %v932, %v930
        %v934 = vclz %v933
        %v935 = vsub.s32 %v934, 2
        %vm936 = vcmp.gt.s32.totalorder 0, %v935
        %v937 = vsel %vm936, 0, %v935
        %v938 = vsub.s32 32, %v937
        %v939 = vshll.u32 %v930, %v937
        %v940 = vshrl.u32 %v922, %v938
        %v941 = vor.u32 %v939, %v940
        %v942 = vsub.s32 4294967266, %v937
        %v943 = vadd.s32 %v942, 127
        %v944 = vshll.u32 %v943, 23
        %v945 = vor.u32 4788187, %v944
        %v946 = vand.u32 2147483647, %v945
        %v948 = vcvt.s32.f32 %v941
        %v949 = vmul.f32 %v948, %v946
        %v950 = vxor.u32 %v949, 2147483648
        %v951 = vsel %vm868, %v950, %v949
        %v952 = vsub.s32 4, %v928
        %v953 = vsel %vm868, %v952, %v928
        %v954 = vsel %vm867, %v347, %v951
        %v955 = vsel %vm867, 0, %v953
        %v956 = vcosq.f32.pop %v954
        %v957 = vsinq.f32.pop %v954
        %vm958 = vweird.f32 %v347
        %v959 = vadd.s32 %v955, 3
        %v960 = vand.u32 %v959, 3
        %vm961 = vcmp.lt.s32.totalorder %v960, 2
        %vm962 = vcmp.eq.s32.totalorder %v960, 0
        %v963 = vxor.u32 %v957, 2147483648
        %v964 = vsel %vm962, %v956, %v963
        %vm965 = vcmp.eq.s32.totalorder %v960, 2
        %v966 = vxor.u32 %v956, 2147483648
        %v967 = vsel %vm965, %v966, %v957
        %v968 = vsel %vm961, %v964, %v967
        %v969 = vsel %vm958, nan, %v968
        %v970 = vand.u32 2147483647, %v346
        %vm971 = vcmp.le.f32.partialorder %v970, 0.7853982
        %vm972 = vcmp.lt.s32.totalorder %v346, 0
        %v973 = vand.u32 %v346, 2139095040
        %v974 = vshrl.u32 %v973, 23
        %v975 = vsub.s32 %v974, 127
        %v976 = vand.u32 2147483647, %v346
        %v977 = vand.u32 %v976, 8388607
        %v978 = vor.u32 %v977, 8388608
        %v979 = vsub.s32 0, %v978
        %v980 = vadd.s32 %v975, 1
        %vm981 = vcmp.gt.s32.totalorder %v980, 0
        %v982 = vsel %vm981, %v980, 0
        %v983 = vshrl.u32 %v982, 5
        %v984 = vand.u32 %v982, 31
        %v985 = vsub.s32 32, %v984
        %v986 = vshrl.u32 683565275, %v985
        %v987 = vshll.u32 683565275, %v984
        %v988 = vshrl.u32 2475754826, %v985
        %v989 = vor.u32 %v987, %v988
        %v990 = vshll.u32 2475754826, %v984
        %v991 = vshrl.u32 2131351028, %v985
        %v992 = vor.u32 %v990, %v991
        %v993 = vshll.u32 2131351028, %v984
        %v994 = vshrl.u32 2102212464, %v985
        %v995 = vor.u32 %v993, %v994
        %v996 = vshll.u32 2102212464, %v984
        %v997 = vshrl.u32 920167782, %v985
        %v998 = vor.u32 %v996, %v997
        %v999 = vshll.u32 920167782, %v984
        %v1000 = vshrl.u32 1326507024, %v985
        %v1001 = vor.u32 %v999, %v1000
        %vm1002 = vcmp.lt.s32.totalorder %v983, 1
        %vm1003 = vcmp.lt.s32.totalorder %v983, 2
        %vm1004 = vcmp.lt.s32.totalorder %v983, 3
        %vm1005 = vcmp.lt.s32.totalorder %v983, 4
        %v1006 = vsel %vm1002, %v986, %v989
        %v1007 = vsel %vm1005, %v995, 2102212464
        %v1008 = vsel %vm1004, %v992, %v1007
        %v1009 = vsel %vm1003, %v1006, %v1008
        %v1010 = vsel %vm1002, %v989, %v992
        %v1011 = vsel %vm1005, %v998, 920167782
        %v1012 = vsel %vm1004, %v995, %v1011
        %v1013 = vsel %vm1003, %v1010, %v1012
        %v1014 = vsel %vm1002, %v992, %v995
        %v1015 = vsel %vm1005, %v1001, 1326507024
        %v1016 = vsel %vm1004, %v998, %v1015
        %v1017 = vsel %vm1003, %v1014, %v1016
        %v1018 = vshll.u32 %v978, 8
        %v1019 = vmul.u32.u64.compose %v1018, %v1017
        %v1020 = vextract.low.u32 %v1019
        %v1021 = vextract.high.u32 %v1019
        %v1022 = vmul.u32.u64.compose %v1018, %v1013
        %v1023 = vextract.low.u32 %v1022
        %v1024 = vextract.high.u32 %v1022
        %v1025 = vmul.u32 %v1018, %v1009
        %v1026 = vadd.s32 %v1021, %v1023
        %vm1027 = vc.u32 %v1021, %v1023
        %v1028 = vadd.s32 %v1024, 1
        %v1029 = vsel %vm1027, %v1028, %v1024
        %v1030 = vadd.s32 %v1025, %v1029
        %v1031 = vadd.s32 %v1030, 536870912
        %v1032 = vshrl.u32 %v1031, 30
        %v1033 = vshll.u32 %v1032, 30
        %v1034 = vsub.s32 %v1030, %v1033
        %vm1035 = vcmp.lt.s32.totalorder %v1034, 0
        %v1036 = vsub.s32 0, %v1034
        %v1037 = vsel %vm1035, %v1036, %v1034
        %v1038 = vclz %v1037
        %v1039 = vsub.s32 %v1038, 2
        %vm1040 = vcmp.gt.s32.totalorder 0, %v1039
        %v1041 = vsel %vm1040, 0, %v1039
        %v1042 = vsub.s32 32, %v1041
        %v1043 = vshll.u32 %v1034, %v1041
        %v1044 = vshrl.u32 %v1026, %v1042
        %v1045 = vor.u32 %v1043, %v1044
        %v1046 = vsub.s32 4294967266, %v1041
        %v1047 = vadd.s32 %v1046, 127
        %v1048 = vshll.u32 %v1047, 23
        %v1049 = vor.u32 4788187, %v1048
        %v1050 = vand.u32 2147483647, %v1049
        %v1052 = vcvt.s32.f32 %v1045
        %v1053 = vmul.f32 %v1052, %v1050
        %v1054 = vxor.u32 %v1053, 2147483648
        %v1055 = vsel %vm972, %v1054, %v1053
        %v1056 = vsub.s32 4, %v1032
        %v1057 = vsel %vm972, %v1056, %v1032
        %v1058 = vsel %vm971, %v346, %v1055
        %v1059 = vsel %vm971, 0, %v1057
        %v1060 = vcosq.f32.pop %v1058
        %v1061 = vsinq.f32.pop %v1058
        %vm1062 = vweird.f32 %v346
        %v1063 = vand.u32 %v1059, 3
        %vm1064 = vcmp.lt.s32.totalorder %v1063, 2
        %vm1065 = vcmp.eq.s32.totalorder %v1063, 0
        %v1066 = vxor.u32 %v1061, 2147483648
        %v1067 = vsel %vm1065, %v1060, %v1066
        %vm1068 = vcmp.eq.s32.totalorder %v1063, 2
        %v1069 = vxor.u32 %v1060, 2147483648
        %v1070 = vsel %vm1068, %v1069, %v1061
        %v1071 = vsel %vm1064, %v1067, %v1070
        %v1072 = vsel %vm1062, nan, %v1071
        %v1073 = vand.u32 2147483647, %v347
        %vm1074 = vcmp.le.f32.partialorder %v1073, 0.7853982
        %vm1075 = vcmp.lt.s32.totalorder %v347, 0
        %v1076 = vand.u32 %v347, 2139095040
        %v1077 = vshrl.u32 %v1076, 23
        %v1078 = vsub.s32 %v1077, 127
        %v1079 = vand.u32 2147483647, %v347
        %v1080 = vand.u32 %v1079, 8388607
        %v1081 = vor.u32 %v1080, 8388608
        %v1082 = vsub.s32 0, %v1081
        %v1083 = vadd.s32 %v1078, 1
        %vm1084 = vcmp.gt.s32.totalorder %v1083, 0
        %v1085 = vsel %vm1084, %v1083, 0
        %v1086 = vshrl.u32 %v1085, 5
        %v1087 = vand.u32 %v1085, 31
        %v1088 = vsub.s32 32, %v1087
        %v1089 = vshrl.u32 683565275, %v1088
        %v1090 = vshll.u32 683565275, %v1087
        %v1091 = vshrl.u32 2475754826, %v1088
        %v1092 = vor.u32 %v1090, %v1091
        %v1093 = vshll.u32 2475754826, %v1087
        %v1094 = vshrl.u32 2131351028, %v1088
        %v1095 = vor.u32 %v1093, %v1094
        %v1096 = vshll.u32 2131351028, %v1087
        %v1097 = vshrl.u32 2102212464, %v1088
        %v1098 = vor.u32 %v1096, %v1097
        %v1099 = vshll.u32 2102212464, %v1087
        %v1100 = vshrl.u32 920167782, %v1088
        %v1101 = vor.u32 %v1099, %v1100
        %v1102 = vshll.u32 920167782, %v1087
        %v1103 = vshrl.u32 1326507024, %v1088
        %v1104 = vor.u32 %v1102, %v1103
        %vm1105 = vcmp.lt.s32.totalorder %v1086, 1
        %vm1106 = vcmp.lt.s32.totalorder %v1086, 2
        %vm1107 = vcmp.lt.s32.totalorder %v1086, 3
        %vm1108 = vcmp.lt.s32.totalorder %v1086, 4
        %v1109 = vsel %vm1105, %v1089, %v1092
        %v1110 = vsel %vm1108, %v1098, 2102212464
        %v1111 = vsel %vm1107, %v1095, %v1110
        %v1112 = vsel %vm1106, %v1109, %v1111
        %v1113 = vsel %vm1105, %v1092, %v1095
        %v1114 = vsel %vm1108, %v1101, 920167782
        %v1115 = vsel %vm1107, %v1098, %v1114
        %v1116 = vsel %vm1106, %v1113, %v1115
        %v1117 = vsel %vm1105, %v1095, %v1098
        %v1118 = vsel %vm1108, %v1104, 1326507024
        %v1119 = vsel %vm1107, %v1101, %v1118
        %v1120 = vsel %vm1106, %v1117, %v1119
        %v1121 = vshll.u32 %v1081, 8
        %v1122 = vmul.u32.u64.compose %v1121, %v1120
        %v1123 = vextract.low.u32 %v1122
        %v1124 = vextract.high.u32 %v1122
        %v1125 = vmul.u32.u64.compose %v1121, %v1116
        %v1126 = vextract.low.u32 %v1125
        %v1127 = vextract.high.u32 %v1125
        %v1128 = vmul.u32 %v1121, %v1112
        %v1129 = vadd.s32 %v1124, %v1126
        %vm1130 = vc.u32 %v1124, %v1126
        %v1131 = vadd.s32 %v1127, 1
        %v1132 = vsel %vm1130, %v1131, %v1127
        %v1133 = vadd.s32 %v1128, %v1132
        %v1134 = vadd.s32 %v1133, 536870912
        %v1135 = vshrl.u32 %v1134, 30
        %v1136 = vshll.u32 %v1135, 30
        %v1137 = vsub.s32 %v1133, %v1136
        %vm1138 = vcmp.lt.s32.totalorder %v1137, 0
        %v1139 = vsub.s32 0, %v1137
        %v1140 = vsel %vm1138, %v1139, %v1137
        %v1141 = vclz %v1140
        %v1142 = vsub.s32 %v1141, 2
        %vm1143 = vcmp.gt.s32.totalorder 0, %v1142
        %v1144 = vsel %vm1143, 0, %v1142
        %v1145 = vsub.s32 32, %v1144
        %v1146 = vshll.u32 %v1137, %v1144
        %v1147 = vshrl.u32 %v1129, %v1145
        %v1148 = vor.u32 %v1146, %v1147
        %v1149 = vsub.s32 4294967266, %v1144
        %v1150 = vadd.s32 %v1149, 127
        %v1151 = vshll.u32 %v1150, 23
        %v1152 = vor.u32 4788187, %v1151
        %v1153 = vand.u32 2147483647, %v1152
        %v1155 = vcvt.s32.f32 %v1148
        %v1156 = vmul.f32 %v1155, %v1153
        %v1157 = vxor.u32 %v1156, 2147483648
        %v1158 = vsel %vm1075, %v1157, %v1156
        %v1159 = vsub.s32 4, %v1135
        %v1160 = vsel %vm1075, %v1159, %v1135
        %v1161 = vsel %vm1074, %v347, %v1158
        %v1162 = vsel %vm1074, 0, %v1160
        %v1163 = vcosq.f32.pop %v1161
        %v1164 = vsinq.f32.pop %v1161
        %vm1165 = vweird.f32 %v347
        %v1166 = vand.u32 %v1162, 3
        %vm1167 = vcmp.lt.s32.totalorder %v1166, 2
        %vm1168 = vcmp.eq.s32.totalorder %v1166, 0
        %v1169 = vxor.u32 %v1164, 2147483648
        %v1170 = vsel %vm1168, %v1163, %v1169
        %vm1171 = vcmp.eq.s32.totalorder %v1166, 2
        %v1172 = vxor.u32 %v1163, 2147483648
        %v1173 = vsel %vm1171, %v1172, %v1164
        %v1174 = vsel %vm1167, %v1170, %v1173
        %v1175 = vsel %vm1165, nan, %v1174
        %v1176 = vlaneseq
        %v1177 = vshrl.u32 %v1176, 7
        %v1178 = vsub.s32 0, %v1177
        %v1179 = vrot.slane %v451, %v1178
        %1181 = vbcast.lane.b32.xlu0 %v1179, 256
        %v1182 = vpop.permute.xlu0 %1181
        %s1184 = sor.u32 256, 8
        %1185 = vbcast.lane.b32.xlu0 %v1179, %s1184
        %v1186 = vpop.permute.xlu0 %1185
        %s1188 = sor.u32 256, 16
        %1189 = vbcast.lane.b32.xlu0 %v1179, %s1188
        %v1190 = vpop.permute.xlu0 %1189
        %s1192 = sor.u32 256, 24
        %1193 = vbcast.lane.b32.xlu0 %v1179, %s1192
        %v1194 = vpop.permute.xlu0 %1193
        %s1196 = sor.u32 256, 32
        %1197 = vbcast.lane.b32.xlu0 %v1179, %s1196
        %v1198 = vpop.permute.xlu0 %1197
        %s1200 = sor.u32 256, 40
        %1201 = vbcast.lane.b32.xlu0 %v1179, %s1200
        %v1202 = vpop.permute.xlu0 %1201
        %s1204 = sor.u32 256, 48
        %1205 = vbcast.lane.b32.xlu0 %v1179, %s1204
        %v1206 = vpop.permute.xlu0 %1205
        %s1208 = sor.u32 256, 56
        %1209 = vbcast.lane.b32.xlu0 %v1179, %s1208
        %v1210 = vpop.permute.xlu0 %1209
        %s1212 = sor.u32 256, 64
        %1213 = vbcast.lane.b32.xlu0 %v1179, %s1212
        %v1214 = vpop.permute.xlu0 %1213
        %s1216 = sor.u32 256, 72
        %1217 = vbcast.lane.b32.xlu0 %v1179, %s1216
        %v1218 = vpop.permute.xlu0 %1217
        %s1220 = sor.u32 256, 80
        %1221 = vbcast.lane.b32.xlu0 %v1179, %s1220
        %v1222 = vpop.permute.xlu0 %1221
        %s1224 = sor.u32 256, 88
        %1225 = vbcast.lane.b32.xlu0 %v1179, %s1224
        %v1226 = vpop.permute.xlu0 %1225
        %s1228 = sor.u32 256, 96
        %1229 = vbcast.lane.b32.xlu0 %v1179, %s1228
        %v1230 = vpop.permute.xlu0 %1229
        %s1232 = sor.u32 256, 104
        %1233 = vbcast.lane.b32.xlu0 %v1179, %s1232
        %v1234 = vpop.permute.xlu0 %1233
        %s1236 = sor.u32 256, 112
        %1237 = vbcast.lane.b32.xlu0 %v1179, %s1236
        %v1238 = vpop.permute.xlu0 %1237
        %s1240 = sor.u32 256, 120
        %1241 = vbcast.lane.b32.xlu0 %v1179, %s1240
        %v1242 = vpop.permute.xlu0 %1241
        %v1243 = vlaneseq
        %v1244 = vshrl.u32 %v1243, 7
        %v1245 = vsub.s32 1, %v1244
        %v1246 = vrot.slane %v451, %v1245
        %1248 = vbcast.lane.b32.xlu0 %v1246, 256
        %v1249 = vpop.permute.xlu0 %1248
        %s1251 = sor.u32 256, 8
        %1252 = vbcast.lane.b32.xlu0 %v1246, %s1251
        %v1253 = vpop.permute.xlu0 %1252
        %s1255 = sor.u32 256, 16
        %1256 = vbcast.lane.b32.xlu0 %v1246, %s1255
        %v1257 = vpop.permute.xlu0 %1256
        %s1259 = sor.u32 256, 24
        %1260 = vbcast.lane.b32.xlu0 %v1246, %s1259
        %v1261 = vpop.permute.xlu0 %1260
        %s1263 = sor.u32 256, 32
        %1264 = vbcast.lane.b32.xlu0 %v1246, %s1263
        %v1265 = vpop.permute.xlu0 %1264
        %s1267 = sor.u32 256, 40
        %1268 = vbcast.lane.b32.xlu0 %v1246, %s1267
        %v1269 = vpop.permute.xlu0 %1268
        %s1271 = sor.u32 256, 48
        %1272 = vbcast.lane.b32.xlu0 %v1246, %s1271
        %v1273 = vpop.permute.xlu0 %1272
        %s1275 = sor.u32 256, 56
        %1276 = vbcast.lane.b32.xlu0 %v1246, %s1275
        %v1277 = vpop.permute.xlu0 %1276
        %s1279 = sor.u32 256, 64
        %1280 = vbcast.lane.b32.xlu0 %v1246, %s1279
        %v1281 = vpop.permute.xlu0 %1280
        %s1283 = sor.u32 256, 72
        %1284 = vbcast.lane.b32.xlu0 %v1246, %s1283
        %v1285 = vpop.permute.xlu0 %1284
        %s1287 = sor.u32 256, 80
        %1288 = vbcast.lane.b32.xlu0 %v1246, %s1287
        %v1289 = vpop.permute.xlu0 %1288
        %s1291 = sor.u32 256, 88
        %1292 = vbcast.lane.b32.xlu0 %v1246, %s1291
        %v1293 = vpop.permute.xlu0 %1292
        %s1295 = sor.u32 256, 96
        %1296 = vbcast.lane.b32.xlu0 %v1246, %s1295
        %v1297 = vpop.permute.xlu0 %1296
        %s1299 = sor.u32 256, 104
        %1300 = vbcast.lane.b32.xlu0 %v1246, %s1299
        %v1301 = vpop.permute.xlu0 %1300
        %s1303 = sor.u32 256, 112
        %1304 = vbcast.lane.b32.xlu0 %v1246, %s1303
        %v1305 = vpop.permute.xlu0 %1304
        %s1307 = sor.u32 256, 120
        %1308 = vbcast.lane.b32.xlu0 %v1246, %s1307
        %v1309 = vpop.permute.xlu0 %1308
        %v1310 = vlaneseq
        %v1311 = vshrl.u32 %v1310, 7
        %v1312 = vsub.s32 2, %v1311
        %v1313 = vrot.slane %v451, %v1312
        %1315 = vbcast.lane.b32.xlu0 %v1313, 256
        %v1316 = vpop.permute.xlu0 %1315
        %s1318 = sor.u32 256, 8
        %1319 = vbcast.lane.b32.xlu0 %v1313, %s1318
        %v1320 = vpop.permute.xlu0 %1319
        %s1322 = sor.u32 256, 16
        %1323 = vbcast.lane.b32.xlu0 %v1313, %s1322
        %v1324 = vpop.permute.xlu0 %1323
        %s1326 = sor.u32 256, 24
        %1327 = vbcast.lane.b32.xlu0 %v1313, %s1326
        %v1328 = vpop.permute.xlu0 %1327
        %s1330 = sor.u32 256, 32
        %1331 = vbcast.lane.b32.xlu0 %v1313, %s1330
        %v1332 = vpop.permute.xlu0 %1331
        %s1334 = sor.u32 256, 40
        %1335 = vbcast.lane.b32.xlu0 %v1313, %s1334
        %v1336 = vpop.permute.xlu0 %1335
        %s1338 = sor.u32 256, 48
        %1339 = vbcast.lane.b32.xlu0 %v1313, %s1338
        %v1340 = vpop.permute.xlu0 %1339
        %s1342 = sor.u32 256, 56
        %1343 = vbcast.lane.b32.xlu0 %v1313, %s1342
        %v1344 = vpop.permute.xlu0 %1343
        %s1346 = sor.u32 256, 64
        %1347 = vbcast.lane.b32.xlu0 %v1313, %s1346
        %v1348 = vpop.permute.xlu0 %1347
        %s1350 = sor.u32 256, 72
        %1351 = vbcast.lane.b32.xlu0 %v1313, %s1350
        %v1352 = vpop.permute.xlu0 %1351
        %s1354 = sor.u32 256, 80
        %1355 = vbcast.lane.b32.xlu0 %v1313, %s1354
        %v1356 = vpop.permute.xlu0 %1355
        %s1358 = sor.u32 256, 88
        %1359 = vbcast.lane.b32.xlu0 %v1313, %s1358
        %v1360 = vpop.permute.xlu0 %1359
        %s1362 = sor.u32 256, 96
        %1363 = vbcast.lane.b32.xlu0 %v1313, %s1362
        %v1364 = vpop.permute.xlu0 %1363
        %s1366 = sor.u32 256, 104
        %1367 = vbcast.lane.b32.xlu0 %v1313, %s1366
        %v1368 = vpop.permute.xlu0 %1367
        %s1370 = sor.u32 256, 112
        %1371 = vbcast.lane.b32.xlu0 %v1313, %s1370
        %v1372 = vpop.permute.xlu0 %1371
        %s1374 = sor.u32 256, 120
        %1375 = vbcast.lane.b32.xlu0 %v1313, %s1374
        %v1376 = vpop.permute.xlu0 %1375
        %v1377 = vlaneseq
        %v1378 = vshrl.u32 %v1377, 7
        %v1379 = vsub.s32 3, %v1378
        %v1380 = vrot.slane %v451, %v1379
        %1382 = vbcast.lane.b32.xlu0 %v1380, 256
        %v1383 = vpop.permute.xlu0 %1382
        %s1385 = sor.u32 256, 8
        %1386 = vbcast.lane.b32.xlu0 %v1380, %s1385
        %v1387 = vpop.permute.xlu0 %1386
        %s1389 = sor.u32 256, 16
        %1390 = vbcast.lane.b32.xlu0 %v1380, %s1389
        %v1391 = vpop.permute.xlu0 %1390
        %s1393 = sor.u32 256, 24
        %1394 = vbcast.lane.b32.xlu0 %v1380, %s1393
        %v1395 = vpop.permute.xlu0 %1394
        %s1397 = sor.u32 256, 32
        %1398 = vbcast.lane.b32.xlu0 %v1380, %s1397
        %v1399 = vpop.permute.xlu0 %1398
        %s1401 = sor.u32 256, 40
        %1402 = vbcast.lane.b32.xlu0 %v1380, %s1401
        %v1403 = vpop.permute.xlu0 %1402
        %s1405 = sor.u32 256, 48
        %1406 = vbcast.lane.b32.xlu0 %v1380, %s1405
        %v1407 = vpop.permute.xlu0 %1406
        %s1409 = sor.u32 256, 56
        %1410 = vbcast.lane.b32.xlu0 %v1380, %s1409
        %v1411 = vpop.permute.xlu0 %1410
        %s1413 = sor.u32 256, 64
        %1414 = vbcast.lane.b32.xlu0 %v1380, %s1413
        %v1415 = vpop.permute.xlu0 %1414
        %s1417 = sor.u32 256, 72
        %1418 = vbcast.lane.b32.xlu0 %v1380, %s1417
        %v1419 = vpop.permute.xlu0 %1418
        %s1421 = sor.u32 256, 80
        %1422 = vbcast.lane.b32.xlu0 %v1380, %s1421
        %v1423 = vpop.permute.xlu0 %1422
        %s1425 = sor.u32 256, 88
        %1426 = vbcast.lane.b32.xlu0 %v1380, %s1425
        %v1427 = vpop.permute.xlu0 %1426
        %s1429 = sor.u32 256, 96
        %1430 = vbcast.lane.b32.xlu0 %v1380, %s1429
        %v1431 = vpop.permute.xlu0 %1430
        %s1433 = sor.u32 256, 104
        %1434 = vbcast.lane.b32.xlu0 %v1380, %s1433
        %v1435 = vpop.permute.xlu0 %1434
        %s1437 = sor.u32 256, 112
        %1438 = vbcast.lane.b32.xlu0 %v1380, %s1437
        %v1439 = vpop.permute.xlu0 %1438
        %s1441 = sor.u32 256, 120
        %1442 = vbcast.lane.b32.xlu0 %v1380, %s1441
        %v1443 = vpop.permute.xlu0 %1442
        %v1444 = vlaneseq
        %v1445 = vshrl.u32 %v1444, 7
        %v1446 = vsub.s32 4, %v1445
        %v1447 = vrot.slane %v451, %v1446
        %1449 = vbcast.lane.b32.xlu0 %v1447, 256
        %v1450 = vpop.permute.xlu0 %1449
        %s1452 = sor.u32 256, 8
        %1453 = vbcast.lane.b32.xlu0 %v1447, %s1452
        %v1454 = vpop.permute.xlu0 %1453
        %s1456 = sor.u32 256, 16
        %1457 = vbcast.lane.b32.xlu0 %v1447, %s1456
        %v1458 = vpop.permute.xlu0 %1457
        %s1460 = sor.u32 256, 24
        %1461 = vbcast.lane.b32.xlu0 %v1447, %s1460
        %v1462 = vpop.permute.xlu0 %1461
        %s1464 = sor.u32 256, 32
        %1465 = vbcast.lane.b32.xlu0 %v1447, %s1464
        %v1466 = vpop.permute.xlu0 %1465
        %s1468 = sor.u32 256, 40
        %1469 = vbcast.lane.b32.xlu0 %v1447, %s1468
        %v1470 = vpop.permute.xlu0 %1469
        %s1472 = sor.u32 256, 48
        %1473 = vbcast.lane.b32.xlu0 %v1447, %s1472
        %v1474 = vpop.permute.xlu0 %1473
        %s1476 = sor.u32 256, 56
        %1477 = vbcast.lane.b32.xlu0 %v1447, %s1476
        %v1478 = vpop.permute.xlu0 %1477
        %s1480 = sor.u32 256, 64
        %1481 = vbcast.lane.b32.xlu0 %v1447, %s1480
        %v1482 = vpop.permute.xlu0 %1481
        %s1484 = sor.u32 256, 72
        %1485 = vbcast.lane.b32.xlu0 %v1447, %s1484
        %v1486 = vpop.permute.xlu0 %1485
        %s1488 = sor.u32 256, 80
        %1489 = vbcast.lane.b32.xlu0 %v1447, %s1488
        %v1490 = vpop.permute.xlu0 %1489
        %s1492 = sor.u32 256, 88
        %1493 = vbcast.lane.b32.xlu0 %v1447, %s1492
        %v1494 = vpop.permute.xlu0 %1493
        %s1496 = sor.u32 256, 96
        %1497 = vbcast.lane.b32.xlu0 %v1447, %s1496
        %v1498 = vpop.permute.xlu0 %1497
        %s1500 = sor.u32 256, 104
        %1501 = vbcast.lane.b32.xlu0 %v1447, %s1500
        %v1502 = vpop.permute.xlu0 %1501
        %s1504 = sor.u32 256, 112
        %1505 = vbcast.lane.b32.xlu0 %v1447, %s1504
        %v1506 = vpop.permute.xlu0 %1505
        %s1508 = sor.u32 256, 120
        %1509 = vbcast.lane.b32.xlu0 %v1447, %s1508
        %v1510 = vpop.permute.xlu0 %1509
        %v1511 = vlaneseq
        %v1512 = vshrl.u32 %v1511, 7
        %v1513 = vsub.s32 5, %v1512
        %v1514 = vrot.slane %v451, %v1513
        %1516 = vbcast.lane.b32.xlu0 %v1514, 256
        %v1517 = vpop.permute.xlu0 %1516
        %s1519 = sor.u32 256, 8
        %1520 = vbcast.lane.b32.xlu0 %v1514, %s1519
        %v1521 = vpop.permute.xlu0 %1520
        %s1523 = sor.u32 256, 16
        %1524 = vbcast.lane.b32.xlu0 %v1514, %s1523
        %v1525 = vpop.permute.xlu0 %1524
        %s1527 = sor.u32 256, 24
        %1528 = vbcast.lane.b32.xlu0 %v1514, %s1527
        %v1529 = vpop.permute.xlu0 %1528
        %s1531 = sor.u32 256, 32
        %1532 = vbcast.lane.b32.xlu0 %v1514, %s1531
        %v1533 = vpop.permute.xlu0 %1532
        %s1535 = sor.u32 256, 40
        %1536 = vbcast.lane.b32.xlu0 %v1514, %s1535
        %v1537 = vpop.permute.xlu0 %1536
        %s1539 = sor.u32 256, 48
        %1540 = vbcast.lane.b32.xlu0 %v1514, %s1539
        %v1541 = vpop.permute.xlu0 %1540
        %s1543 = sor.u32 256, 56
        %1544 = vbcast.lane.b32.xlu0 %v1514, %s1543
        %v1545 = vpop.permute.xlu0 %1544
        %s1547 = sor.u32 256, 64
        %1548 = vbcast.lane.b32.xlu0 %v1514, %s1547
        %v1549 = vpop.permute.xlu0 %1548
        %s1551 = sor.u32 256, 72
        %1552 = vbcast.lane.b32.xlu0 %v1514, %s1551
        %v1553 = vpop.permute.xlu0 %1552
        %s1555 = sor.u32 256, 80
        %1556 = vbcast.lane.b32.xlu0 %v1514, %s1555
        %v1557 = vpop.permute.xlu0 %1556
        %s1559 = sor.u32 256, 88
        %1560 = vbcast.lane.b32.xlu0 %v1514, %s1559
        %v1561 = vpop.permute.xlu0 %1560
        %s1563 = sor.u32 256, 96
        %1564 = vbcast.lane.b32.xlu0 %v1514, %s1563
        %v1565 = vpop.permute.xlu0 %1564
        %s1567 = sor.u32 256, 104
        %1568 = vbcast.lane.b32.xlu0 %v1514, %s1567
        %v1569 = vpop.permute.xlu0 %1568
        %s1571 = sor.u32 256, 112
        %1572 = vbcast.lane.b32.xlu0 %v1514, %s1571
        %v1573 = vpop.permute.xlu0 %1572
        %s1575 = sor.u32 256, 120
        %1576 = vbcast.lane.b32.xlu0 %v1514, %s1575
        %v1577 = vpop.permute.xlu0 %1576
        %v1578 = vlaneseq
        %v1579 = vshrl.u32 %v1578, 7
        %v1580 = vsub.s32 6, %v1579
        %v1581 = vrot.slane %v451, %v1580
        %1583 = vbcast.lane.b32.xlu0 %v1581, 256
        %v1584 = vpop.permute.xlu0 %1583
        %s1586 = sor.u32 256, 8
        %1587 = vbcast.lane.b32.xlu0 %v1581, %s1586
        %v1588 = vpop.permute.xlu0 %1587
        %s1590 = sor.u32 256, 16
        %1591 = vbcast.lane.b32.xlu0 %v1581, %s1590
        %v1592 = vpop.permute.xlu0 %1591
        %s1594 = sor.u32 256, 24
        %1595 = vbcast.lane.b32.xlu0 %v1581, %s1594
        %v1596 = vpop.permute.xlu0 %1595
        %s1598 = sor.u32 256, 32
        %1599 = vbcast.lane.b32.xlu0 %v1581, %s1598
        %v1600 = vpop.permute.xlu0 %1599
        %s1602 = sor.u32 256, 40
        %1603 = vbcast.lane.b32.xlu0 %v1581, %s1602
        %v1604 = vpop.permute.xlu0 %1603
        %s1606 = sor.u32 256, 48
        %1607 = vbcast.lane.b32.xlu0 %v1581, %s1606
        %v1608 = vpop.permute.xlu0 %1607
        %s1610 = sor.u32 256, 56
        %1611 = vbcast.lane.b32.xlu0 %v1581, %s1610
        %v1612 = vpop.permute.xlu0 %1611
        %s1614 = sor.u32 256, 64
        %1615 = vbcast.lane.b32.xlu0 %v1581, %s1614
        %v1616 = vpop.permute.xlu0 %1615
        %s1618 = sor.u32 256, 72
        %1619 = vbcast.lane.b32.xlu0 %v1581, %s1618
        %v1620 = vpop.permute.xlu0 %1619
        %s1622 = sor.u32 256, 80
        %1623 = vbcast.lane.b32.xlu0 %v1581, %s1622
        %v1624 = vpop.permute.xlu0 %1623
        %s1626 = sor.u32 256, 88
        %1627 = vbcast.lane.b32.xlu0 %v1581, %s1626
        %v1628 = vpop.permute.xlu0 %1627
        %s1630 = sor.u32 256, 96
        %1631 = vbcast.lane.b32.xlu0 %v1581, %s1630
        %v1632 = vpop.permute.xlu0 %1631
        %s1634 = sor.u32 256, 104
        %1635 = vbcast.lane.b32.xlu0 %v1581, %s1634
        %v1636 = vpop.permute.xlu0 %1635
        %s1638 = sor.u32 256, 112
        %1639 = vbcast.lane.b32.xlu0 %v1581, %s1638
        %v1640 = vpop.permute.xlu0 %1639
        %s1642 = sor.u32 256, 120
        %1643 = vbcast.lane.b32.xlu0 %v1581, %s1642
        %v1644 = vpop.permute.xlu0 %1643
        %v1645 = vlaneseq
        %v1646 = vshrl.u32 %v1645, 7
        %v1647 = vsub.s32 7, %v1646
        %v1648 = vrot.slane %v451, %v1647
        %1650 = vbcast.lane.b32.xlu0 %v1648, 256
        %v1651 = vpop.permute.xlu0 %1650
        %s1653 = sor.u32 256, 8
        %1654 = vbcast.lane.b32.xlu0 %v1648, %s1653
        %v1655 = vpop.permute.xlu0 %1654
        %s1657 = sor.u32 256, 16
        %1658 = vbcast.lane.b32.xlu0 %v1648, %s1657
        %v1659 = vpop.permute.xlu0 %1658
        %s1661 = sor.u32 256, 24
        %1662 = vbcast.lane.b32.xlu0 %v1648, %s1661
        %v1663 = vpop.permute.xlu0 %1662
        %s1665 = sor.u32 256, 32
        %1666 = vbcast.lane.b32.xlu0 %v1648, %s1665
        %v1667 = vpop.permute.xlu0 %1666
        %s1669 = sor.u32 256, 40
        %1670 = vbcast.lane.b32.xlu0 %v1648, %s1669
        %v1671 = vpop.permute.xlu0 %1670
        %s1673 = sor.u32 256, 48
        %1674 = vbcast.lane.b32.xlu0 %v1648, %s1673
        %v1675 = vpop.permute.xlu0 %1674
        %s1677 = sor.u32 256, 56
        %1678 = vbcast.lane.b32.xlu0 %v1648, %s1677
        %v1679 = vpop.permute.xlu0 %1678
        %s1681 = sor.u32 256, 64
        %1682 = vbcast.lane.b32.xlu0 %v1648, %s1681
        %v1683 = vpop.permute.xlu0 %1682
        %s1685 = sor.u32 256, 72
        %1686 = vbcast.lane.b32.xlu0 %v1648, %s1685
        %v1687 = vpop.permute.xlu0 %1686
        %s1689 = sor.u32 256, 80
        %1690 = vbcast.lane.b32.xlu0 %v1648, %s1689
        %v1691 = vpop.permute.xlu0 %1690
        %s1693 = sor.u32 256, 88
        %1694 = vbcast.lane.b32.xlu0 %v1648, %s1693
        %v1695 = vpop.permute.xlu0 %1694
        %s1697 = sor.u32 256, 96
        %1698 = vbcast.lane.b32.xlu0 %v1648, %s1697
        %v1699 = vpop.permute.xlu0 %1698
        %s1701 = sor.u32 256, 104
        %1702 = vbcast.lane.b32.xlu0 %v1648, %s1701
        %v1703 = vpop.permute.xlu0 %1702
        %s1705 = sor.u32 256, 112
        %1706 = vbcast.lane.b32.xlu0 %v1648, %s1705
        %v1707 = vpop.permute.xlu0 %1706
        %s1709 = sor.u32 256, 120
        %1710 = vbcast.lane.b32.xlu0 %v1648, %s1709
        %v1711 = vpop.permute.xlu0 %1710
        %v1712 = vlaneseq
        %v1713 = vshrl.u32 %v1712, 7
        %v1714 = vsub.s32 0, %v1713
        %v1715 = vrot.slane %v555, %v1714
        %1717 = vbcast.lane.b32.xlu0 %v1715, 256
        %v1718 = vpop.permute.xlu0 %1717
        %s1720 = sor.u32 256, 8
        %1721 = vbcast.lane.b32.xlu0 %v1715, %s1720
        %v1722 = vpop.permute.xlu0 %1721
        %s1724 = sor.u32 256, 16
        %1725 = vbcast.lane.b32.xlu0 %v1715, %s1724
        %v1726 = vpop.permute.xlu0 %1725
        %s1728 = sor.u32 256, 24
        %1729 = vbcast.lane.b32.xlu0 %v1715, %s1728
        %v1730 = vpop.permute.xlu0 %1729
        %s1732 = sor.u32 256, 32
        %1733 = vbcast.lane.b32.xlu0 %v1715, %s1732
        %v1734 = vpop.permute.xlu0 %1733
        %s1736 = sor.u32 256, 40
        %1737 = vbcast.lane.b32.xlu0 %v1715, %s1736
        %v1738 = vpop.permute.xlu0 %1737
        %s1740 = sor.u32 256, 48
        %1741 = vbcast.lane.b32.xlu0 %v1715, %s1740
        %v1742 = vpop.permute.xlu0 %1741
        %s1744 = sor.u32 256, 56
        %1745 = vbcast.lane.b32.xlu0 %v1715, %s1744
        %v1746 = vpop.permute.xlu0 %1745
        %s1748 = sor.u32 256, 64
        %1749 = vbcast.lane.b32.xlu0 %v1715, %s1748
        %v1750 = vpop.permute.xlu0 %1749
        %s1752 = sor.u32 256, 72
        %1753 = vbcast.lane.b32.xlu0 %v1715, %s1752
        %v1754 = vpop.permute.xlu0 %1753
        %s1756 = sor.u32 256, 80
        %1757 = vbcast.lane.b32.xlu0 %v1715, %s1756
        %v1758 = vpop.permute.xlu0 %1757
        %s1760 = sor.u32 256, 88
        %1761 = vbcast.lane.b32.xlu0 %v1715, %s1760
        %v1762 = vpop.permute.xlu0 %1761
        %s1764 = sor.u32 256, 96
        %1765 = vbcast.lane.b32.xlu0 %v1715, %s1764
        %v1766 = vpop.permute.xlu0 %1765
        %s1768 = sor.u32 256, 104
        %1769 = vbcast.lane.b32.xlu0 %v1715, %s1768
        %v1770 = vpop.permute.xlu0 %1769
        %s1772 = sor.u32 256, 112
        %1773 = vbcast.lane.b32.xlu0 %v1715, %s1772
        %v1774 = vpop.permute.xlu0 %1773
        %s1776 = sor.u32 256, 120
        %1777 = vbcast.lane.b32.xlu0 %v1715, %s1776
        %v1778 = vpop.permute.xlu0 %1777
        %v1779 = vlaneseq
        %v1780 = vshrl.u32 %v1779, 7
        %v1781 = vsub.s32 1, %v1780
        %v1782 = vrot.slane %v555, %v1781
        %1784 = vbcast.lane.b32.xlu0 %v1782, 256
        %v1785 = vpop.permute.xlu0 %1784
        %s1787 = sor.u32 256, 8
        %1788 = vbcast.lane.b32.xlu0 %v1782, %s1787
        %v1789 = vpop.permute.xlu0 %1788
        %s1791 = sor.u32 256, 16
        %1792 = vbcast.lane.b32.xlu0 %v1782, %s1791
        %v1793 = vpop.permute.xlu0 %1792
        %s1795 = sor.u32 256, 24
        %1796 = vbcast.lane.b32.xlu0 %v1782, %s1795
        %v1797 = vpop.permute.xlu0 %1796
        %s1799 = sor.u32 256, 32
        %1800 = vbcast.lane.b32.xlu0 %v1782, %s1799
        %v1801 = vpop.permute.xlu0 %1800
        %s1803 = sor.u32 256, 40
        %1804 = vbcast.lane.b32.xlu0 %v1782, %s1803
        %v1805 = vpop.permute.xlu0 %1804
        %s1807 = sor.u32 256, 48
        %1808 = vbcast.lane.b32.xlu0 %v1782, %s1807
        %v1809 = vpop.permute.xlu0 %1808
        %s1811 = sor.u32 256, 56
        %1812 = vbcast.lane.b32.xlu0 %v1782, %s1811
        %v1813 = vpop.permute.xlu0 %1812
        %s1815 = sor.u32 256, 64
        %1816 = vbcast.lane.b32.xlu0 %v1782, %s1815
        %v1817 = vpop.permute.xlu0 %1816
        %s1819 = sor.u32 256, 72
        %1820 = vbcast.lane.b32.xlu0 %v1782, %s1819
        %v1821 = vpop.permute.xlu0 %1820
        %s1823 = sor.u32 256, 80
        %1824 = vbcast.lane.b32.xlu0 %v1782, %s1823
        %v1825 = vpop.permute.xlu0 %1824
        %s1827 = sor.u32 256, 88
        %1828 = vbcast.lane.b32.xlu0 %v1782, %s1827
        %v1829 = vpop.permute.xlu0 %1828
        %s1831 = sor.u32 256, 96
        %1832 = vbcast.lane.b32.xlu0 %v1782, %s1831
        %v1833 = vpop.permute.xlu0 %1832
        %s1835 = sor.u32 256, 104
        %1836 = vbcast.lane.b32.xlu0 %v1782, %s1835
        %v1837 = vpop.permute.xlu0 %1836
        %s1839 = sor.u32 256, 112
        %1840 = vbcast.lane.b32.xlu0 %v1782, %s1839
        %v1841 = vpop.permute.xlu0 %1840
        %s1843 = sor.u32 256, 120
        %1844 = vbcast.lane.b32.xlu0 %v1782, %s1843
        %v1845 = vpop.permute.xlu0 %1844
        %v1846 = vlaneseq
        %v1847 = vshrl.u32 %v1846, 7
        %v1848 = vsub.s32 2, %v1847
        %v1849 = vrot.slane %v555, %v1848
        %1851 = vbcast.lane.b32.xlu0 %v1849, 256
        %v1852 = vpop.permute.xlu0 %1851
        %s1854 = sor.u32 256, 8
        %1855 = vbcast.lane.b32.xlu0 %v1849, %s1854
        %v1856 = vpop.permute.xlu0 %1855
        %s1858 = sor.u32 256, 16
        %1859 = vbcast.lane.b32.xlu0 %v1849, %s1858
        %v1860 = vpop.permute.xlu0 %1859
        %s1862 = sor.u32 256, 24
        %1863 = vbcast.lane.b32.xlu0 %v1849, %s1862
        %v1864 = vpop.permute.xlu0 %1863
        %s1866 = sor.u32 256, 32
        %1867 = vbcast.lane.b32.xlu0 %v1849, %s1866
        %v1868 = vpop.permute.xlu0 %1867
        %s1870 = sor.u32 256, 40
        %1871 = vbcast.lane.b32.xlu0 %v1849, %s1870
        %v1872 = vpop.permute.xlu0 %1871
        %s1874 = sor.u32 256, 48
        %1875 = vbcast.lane.b32.xlu0 %v1849, %s1874
        %v1876 = vpop.permute.xlu0 %1875
        %s1878 = sor.u32 256, 56
        %1879 = vbcast.lane.b32.xlu0 %v1849, %s1878
        %v1880 = vpop.permute.xlu0 %1879
        %s1882 = sor.u32 256, 64
        %1883 = vbcast.lane.b32.xlu0 %v1849, %s1882
        %v1884 = vpop.permute.xlu0 %1883
        %s1886 = sor.u32 256, 72
        %1887 = vbcast.lane.b32.xlu0 %v1849, %s1886
        %v1888 = vpop.permute.xlu0 %1887
        %s1890 = sor.u32 256, 80
        %1891 = vbcast.lane.b32.xlu0 %v1849, %s1890
        %v1892 = vpop.permute.xlu0 %1891
        %s1894 = sor.u32 256, 88
        %1895 = vbcast.lane.b32.xlu0 %v1849, %s1894
        %v1896 = vpop.permute.xlu0 %1895
        %s1898 = sor.u32 256, 96
        %1899 = vbcast.lane.b32.xlu0 %v1849, %s1898
        %v1900 = vpop.permute.xlu0 %1899
        %s1902 = sor.u32 256, 104
        %1903 = vbcast.lane.b32.xlu0 %v1849, %s1902
        %v1904 = vpop.permute.xlu0 %1903
        %s1906 = sor.u32 256, 112
        %1907 = vbcast.lane.b32.xlu0 %v1849, %s1906
        %v1908 = vpop.permute.xlu0 %1907
        %s1910 = sor.u32 256, 120
        %1911 = vbcast.lane.b32.xlu0 %v1849, %s1910
        %v1912 = vpop.permute.xlu0 %1911
        %v1913 = vlaneseq
        %v1914 = vshrl.u32 %v1913, 7
        %v1915 = vsub.s32 3, %v1914
        %v1916 = vrot.slane %v555, %v1915
        %1918 = vbcast.lane.b32.xlu0 %v1916, 256
        %v1919 = vpop.permute.xlu0 %1918
        %s1921 = sor.u32 256, 8
        %1922 = vbcast.lane.b32.xlu0 %v1916, %s1921
        %v1923 = vpop.permute.xlu0 %1922
        %s1925 = sor.u32 256, 16
        %1926 = vbcast.lane.b32.xlu0 %v1916, %s1925
        %v1927 = vpop.permute.xlu0 %1926
        %s1929 = sor.u32 256, 24
        %1930 = vbcast.lane.b32.xlu0 %v1916, %s1929
        %v1931 = vpop.permute.xlu0 %1930
        %s1933 = sor.u32 256, 32
        %1934 = vbcast.lane.b32.xlu0 %v1916, %s1933
        %v1935 = vpop.permute.xlu0 %1934
        %s1937 = sor.u32 256, 40
        %1938 = vbcast.lane.b32.xlu0 %v1916, %s1937
        %v1939 = vpop.permute.xlu0 %1938
        %s1941 = sor.u32 256, 48
        %1942 = vbcast.lane.b32.xlu0 %v1916, %s1941
        %v1943 = vpop.permute.xlu0 %1942
        %s1945 = sor.u32 256, 56
        %1946 = vbcast.lane.b32.xlu0 %v1916, %s1945
        %v1947 = vpop.permute.xlu0 %1946
        %s1949 = sor.u32 256, 64
        %1950 = vbcast.lane.b32.xlu0 %v1916, %s1949
        %v1951 = vpop.permute.xlu0 %1950
        %s1953 = sor.u32 256, 72
        %1954 = vbcast.lane.b32.xlu0 %v1916, %s1953
        %v1955 = vpop.permute.xlu0 %1954
        %s1957 = sor.u32 256, 80
        %1958 = vbcast.lane.b32.xlu0 %v1916, %s1957
        %v1959 = vpop.permute.xlu0 %1958
        %s1961 = sor.u32 256, 88
        %1962 = vbcast.lane.b32.xlu0 %v1916, %s1961
        %v1963 = vpop.permute.xlu0 %1962
        %s1965 = sor.u32 256, 96
        %1966 = vbcast.lane.b32.xlu0 %v1916, %s1965
        %v1967 = vpop.permute.xlu0 %1966
        %s1969 = sor.u32 256, 104
        %1970 = vbcast.lane.b32.xlu0 %v1916, %s1969
        %v1971 = vpop.permute.xlu0 %1970
        %s1973 = sor.u32 256, 112
        %1974 = vbcast.lane.b32.xlu0 %v1916, %s1973
        %v1975 = vpop.permute.xlu0 %1974
        %s1977 = sor.u32 256, 120
        %1978 = vbcast.lane.b32.xlu0 %v1916, %s1977
        %v1979 = vpop.permute.xlu0 %1978
        %v1980 = vlaneseq
        %v1981 = vshrl.u32 %v1980, 7
        %v1982 = vsub.s32 4, %v1981
        %v1983 = vrot.slane %v555, %v1982
        %1985 = vbcast.lane.b32.xlu0 %v1983, 256
        %v1986 = vpop.permute.xlu0 %1985
        %s1988 = sor.u32 256, 8
        %1989 = vbcast.lane.b32.xlu0 %v1983, %s1988
        %v1990 = vpop.permute.xlu0 %1989
        %s1992 = sor.u32 256, 16
        %1993 = vbcast.lane.b32.xlu0 %v1983, %s1992
        %v1994 = vpop.permute.xlu0 %1993
        %s1996 = sor.u32 256, 24
        %1997 = vbcast.lane.b32.xlu0 %v1983, %s1996
        %v1998 = vpop.permute.xlu0 %1997
        %s2000 = sor.u32 256, 32
        %2001 = vbcast.lane.b32.xlu0 %v1983, %s2000
        %v2002 = vpop.permute.xlu0 %2001
        %s2004 = sor.u32 256, 40
        %2005 = vbcast.lane.b32.xlu0 %v1983, %s2004
        %v2006 = vpop.permute.xlu0 %2005
        %s2008 = sor.u32 256, 48
        %2009 = vbcast.lane.b32.xlu0 %v1983, %s2008
        %v2010 = vpop.permute.xlu0 %2009
        %s2012 = sor.u32 256, 56
        %2013 = vbcast.lane.b32.xlu0 %v1983, %s2012
        %v2014 = vpop.permute.xlu0 %2013
        %s2016 = sor.u32 256, 64
        %2017 = vbcast.lane.b32.xlu0 %v1983, %s2016
        %v2018 = vpop.permute.xlu0 %2017
        %s2020 = sor.u32 256, 72
        %2021 = vbcast.lane.b32.xlu0 %v1983, %s2020
        %v2022 = vpop.permute.xlu0 %2021
        %s2024 = sor.u32 256, 80
        %2025 = vbcast.lane.b32.xlu0 %v1983, %s2024
        %v2026 = vpop.permute.xlu0 %2025
        %s2028 = sor.u32 256, 88
        %2029 = vbcast.lane.b32.xlu0 %v1983, %s2028
        %v2030 = vpop.permute.xlu0 %2029
        %s2032 = sor.u32 256, 96
        %2033 = vbcast.lane.b32.xlu0 %v1983, %s2032
        %v2034 = vpop.permute.xlu0 %2033
        %s2036 = sor.u32 256, 104
        %2037 = vbcast.lane.b32.xlu0 %v1983, %s2036
        %v2038 = vpop.permute.xlu0 %2037
        %s2040 = sor.u32 256, 112
        %2041 = vbcast.lane.b32.xlu0 %v1983, %s2040
        %v2042 = vpop.permute.xlu0 %2041
        %s2044 = sor.u32 256, 120
        %2045 = vbcast.lane.b32.xlu0 %v1983, %s2044
        %v2046 = vpop.permute.xlu0 %2045
        %v2047 = vlaneseq
        %v2048 = vshrl.u32 %v2047, 7
        %v2049 = vsub.s32 5, %v2048
        %v2050 = vrot.slane %v555, %v2049
        %2052 = vbcast.lane.b32.xlu0 %v2050, 256
        %v2053 = vpop.permute.xlu0 %2052
        %s2055 = sor.u32 256, 8
        %2056 = vbcast.lane.b32.xlu0 %v2050, %s2055
        %v2057 = vpop.permute.xlu0 %2056
        %s2059 = sor.u32 256, 16
        %2060 = vbcast.lane.b32.xlu0 %v2050, %s2059
        %v2061 = vpop.permute.xlu0 %2060
        %s2063 = sor.u32 256, 24
        %2064 = vbcast.lane.b32.xlu0 %v2050, %s2063
        %v2065 = vpop.permute.xlu0 %2064
        %s2067 = sor.u32 256, 32
        %2068 = vbcast.lane.b32.xlu0 %v2050, %s2067
        %v2069 = vpop.permute.xlu0 %2068
        %s2071 = sor.u32 256, 40
        %2072 = vbcast.lane.b32.xlu0 %v2050, %s2071
        %v2073 = vpop.permute.xlu0 %2072
        %s2075 = sor.u32 256, 48
        %2076 = vbcast.lane.b32.xlu0 %v2050, %s2075
        %v2077 = vpop.permute.xlu0 %2076
        %s2079 = sor.u32 256, 56
        %2080 = vbcast.lane.b32.xlu0 %v2050, %s2079
        %v2081 = vpop.permute.xlu0 %2080
        %s2083 = sor.u32 256, 64
        %2084 = vbcast.lane.b32.xlu0 %v2050, %s2083
        %v2085 = vpop.permute.xlu0 %2084
        %s2087 = sor.u32 256, 72
        %2088 = vbcast.lane.b32.xlu0 %v2050, %s2087
        %v2089 = vpop.permute.xlu0 %2088
        %s2091 = sor.u32 256, 80
        %2092 = vbcast.lane.b32.xlu0 %v2050, %s2091
        %v2093 = vpop.permute.xlu0 %2092
        %s2095 = sor.u32 256, 88
        %2096 = vbcast.lane.b32.xlu0 %v2050, %s2095
        %v2097 = vpop.permute.xlu0 %2096
        %s2099 = sor.u32 256, 96
        %2100 = vbcast.lane.b32.xlu0 %v2050, %s2099
        %v2101 = vpop.permute.xlu0 %2100
        %s2103 = sor.u32 256, 104
        %2104 = vbcast.lane.b32.xlu0 %v2050, %s2103
        %v2105 = vpop.permute.xlu0 %2104
        %s2107 = sor.u32 256, 112
        %2108 = vbcast.lane.b32.xlu0 %v2050, %s2107
        %v2109 = vpop.permute.xlu0 %2108
        %s2111 = sor.u32 256, 120
        %2112 = vbcast.lane.b32.xlu0 %v2050, %s2111
        %v2113 = vpop.permute.xlu0 %2112
        %v2114 = vlaneseq
        %v2115 = vshrl.u32 %v2114, 7
        %v2116 = vsub.s32 6, %v2115
        %v2117 = vrot.slane %v555, %v2116
        %2119 = vbcast.lane.b32.xlu0 %v2117, 256
        %v2120 = vpop.permute.xlu0 %2119
        %s2122 = sor.u32 256, 8
        %2123 = vbcast.lane.b32.xlu0 %v2117, %s2122
        %v2124 = vpop.permute.xlu0 %2123
        %s2126 = sor.u32 256, 16
        %2127 = vbcast.lane.b32.xlu0 %v2117, %s2126
        %v2128 = vpop.permute.xlu0 %2127
        %s2130 = sor.u32 256, 24
        %2131 = vbcast.lane.b32.xlu0 %v2117, %s2130
        %v2132 = vpop.permute.xlu0 %2131
        %s2134 = sor.u32 256, 32
        %2135 = vbcast.lane.b32.xlu0 %v2117, %s2134
        %v2136 = vpop.permute.xlu0 %2135
        %s2138 = sor.u32 256, 40
        %2139 = vbcast.lane.b32.xlu0 %v2117, %s2138
        %v2140 = vpop.permute.xlu0 %2139
        %s2142 = sor.u32 256, 48
        %2143 = vbcast.lane.b32.xlu0 %v2117, %s2142
        %v2144 = vpop.permute.xlu0 %2143
        %s2146 = sor.u32 256, 56
        %2147 = vbcast.lane.b32.xlu0 %v2117, %s2146
        %v2148 = vpop.permute.xlu0 %2147
        %s2150 = sor.u32 256, 64
        %2151 = vbcast.lane.b32.xlu0 %v2117, %s2150
        %v2152 = vpop.permute.xlu0 %2151
        %s2154 = sor.u32 256, 72
        %2155 = vbcast.lane.b32.xlu0 %v2117, %s2154
        %v2156 = vpop.permute.xlu0 %2155
        %s2158 = sor.u32 256, 80
        %2159 = vbcast.lane.b32.xlu0 %v2117, %s2158
        %v2160 = vpop.permute.xlu0 %2159
        %s2162 = sor.u32 256, 88
        %2163 = vbcast.lane.b32.xlu0 %v2117, %s2162
        %v2164 = vpop.permute.xlu0 %2163
        %s2166 = sor.u32 256, 96
        %2167 = vbcast.lane.b32.xlu0 %v2117, %s2166
        %v2168 = vpop.permute.xlu0 %2167
        %s2170 = sor.u32 256, 104
        %2171 = vbcast.lane.b32.xlu0 %v2117, %s2170
        %v2172 = vpop.permute.xlu0 %2171
        %s2174 = sor.u32 256, 112
        %2175 = vbcast.lane.b32.xlu0 %v2117, %s2174
        %v2176 = vpop.permute.xlu0 %2175
        %s2178 = sor.u32 256, 120
        %2179 = vbcast.lane.b32.xlu0 %v2117, %s2178
        %v2180 = vpop.permute.xlu0 %2179
        %v2181 = vlaneseq
        %v2182 = vshrl.u32 %v2181, 7
        %v2183 = vsub.s32 7, %v2182
        %v2184 = vrot.slane %v555, %v2183
        %2186 = vbcast.lane.b32.xlu0 %v2184, 256
        %v2187 = vpop.permute.xlu0 %2186
        %s2189 = sor.u32 256, 8
        %2190 = vbcast.lane.b32.xlu0 %v2184, %s2189
        %v2191 = vpop.permute.xlu0 %2190
        %s2193 = sor.u32 256, 16
        %2194 = vbcast.lane.b32.xlu0 %v2184, %s2193
        %v2195 = vpop.permute.xlu0 %2194
        %s2197 = sor.u32 256, 24
        %2198 = vbcast.lane.b32.xlu0 %v2184, %s2197
        %v2199 = vpop.permute.xlu0 %2198
        %s2201 = sor.u32 256, 32
        %2202 = vbcast.lane.b32.xlu0 %v2184, %s2201
        %v2203 = vpop.permute.xlu0 %2202
        %s2205 = sor.u32 256, 40
        %2206 = vbcast.lane.b32.xlu0 %v2184, %s2205
        %v2207 = vpop.permute.xlu0 %2206
        %s2209 = sor.u32 256, 48
        %2210 = vbcast.lane.b32.xlu0 %v2184, %s2209
        %v2211 = vpop.permute.xlu0 %2210
        %s2213 = sor.u32 256, 56
        %2214 = vbcast.lane.b32.xlu0 %v2184, %s2213
        %v2215 = vpop.permute.xlu0 %2214
        %s2217 = sor.u32 256, 64
        %2218 = vbcast.lane.b32.xlu0 %v2184, %s2217
        %v2219 = vpop.permute.xlu0 %2218
        %s2221 = sor.u32 256, 72
        %2222 = vbcast.lane.b32.xlu0 %v2184, %s2221
        %v2223 = vpop.permute.xlu0 %2222
        %s2225 = sor.u32 256, 80
        %2226 = vbcast.lane.b32.xlu0 %v2184, %s2225
        %v2227 = vpop.permute.xlu0 %2226
        %s2229 = sor.u32 256, 88
        %2230 = vbcast.lane.b32.xlu0 %v2184, %s2229
        %v2231 = vpop.permute.xlu0 %2230
        %s2233 = sor.u32 256, 96
        %2234 = vbcast.lane.b32.xlu0 %v2184, %s2233
        %v2235 = vpop.permute.xlu0 %2234
        %s2237 = sor.u32 256, 104
        %2238 = vbcast.lane.b32.xlu0 %v2184, %s2237
        %v2239 = vpop.permute.xlu0 %2238
        %s2241 = sor.u32 256, 112
        %2242 = vbcast.lane.b32.xlu0 %v2184, %s2241
        %v2243 = vpop.permute.xlu0 %2242
        %s2245 = sor.u32 256, 120
        %2246 = vbcast.lane.b32.xlu0 %v2184, %s2245
        %v2247 = vpop.permute.xlu0 %2246
        %v2248 = vlaneseq
        %v2249 = vshrl.u32 %v2248, 7
        %v2250 = vsub.s32 0, %v2249
        %v2251 = vrot.slane %v658, %v2250
        %2253 = vbcast.lane.b32.xlu0 %v2251, 256
        %v2254 = vpop.permute.xlu0 %2253
        %s2256 = sor.u32 256, 8
        %2257 = vbcast.lane.b32.xlu0 %v2251, %s2256
        %v2258 = vpop.permute.xlu0 %2257
        %s2260 = sor.u32 256, 16
        %2261 = vbcast.lane.b32.xlu0 %v2251, %s2260
        %v2262 = vpop.permute.xlu0 %2261
        %s2264 = sor.u32 256, 24
        %2265 = vbcast.lane.b32.xlu0 %v2251, %s2264
        %v2266 = vpop.permute.xlu0 %2265
        %s2268 = sor.u32 256, 32
        %2269 = vbcast.lane.b32.xlu0 %v2251, %s2268
        %v2270 = vpop.permute.xlu0 %2269
        %s2272 = sor.u32 256, 40
        %2273 = vbcast.lane.b32.xlu0 %v2251, %s2272
        %v2274 = vpop.permute.xlu0 %2273
        %s2276 = sor.u32 256, 48
        %2277 = vbcast.lane.b32.xlu0 %v2251, %s2276
        %v2278 = vpop.permute.xlu0 %2277
        %s2280 = sor.u32 256, 56
        %2281 = vbcast.lane.b32.xlu0 %v2251, %s2280
        %v2282 = vpop.permute.xlu0 %2281
        %s2284 = sor.u32 256, 64
        %2285 = vbcast.lane.b32.xlu0 %v2251, %s2284
        %v2286 = vpop.permute.xlu0 %2285
        %s2288 = sor.u32 256, 72
        %2289 = vbcast.lane.b32.xlu0 %v2251, %s2288
        %v2290 = vpop.permute.xlu0 %2289
        %s2292 = sor.u32 256, 80
        %2293 = vbcast.lane.b32.xlu0 %v2251, %s2292
        %v2294 = vpop.permute.xlu0 %2293
        %s2296 = sor.u32 256, 88
        %2297 = vbcast.lane.b32.xlu0 %v2251, %s2296
        %v2298 = vpop.permute.xlu0 %2297
        %s2300 = sor.u32 256, 96
        %2301 = vbcast.lane.b32.xlu0 %v2251, %s2300
        %v2302 = vpop.permute.xlu0 %2301
        %s2304 = sor.u32 256, 104
        %2305 = vbcast.lane.b32.xlu0 %v2251, %s2304
        %v2306 = vpop.permute.xlu0 %2305
        %s2308 = sor.u32 256, 112
        %2309 = vbcast.lane.b32.xlu0 %v2251, %s2308
        %v2310 = vpop.permute.xlu0 %2309
        %s2312 = sor.u32 256, 120
        %2313 = vbcast.lane.b32.xlu0 %v2251, %s2312
        %v2314 = vpop.permute.xlu0 %2313
        %v2315 = vlaneseq
        %v2316 = vshrl.u32 %v2315, 7
        %v2317 = vsub.s32 1, %v2316
        %v2318 = vrot.slane %v658, %v2317
        %2320 = vbcast.lane.b32.xlu0 %v2318, 256
        %v2321 = vpop.permute.xlu0 %2320
        %s2323 = sor.u32 256, 8
        %2324 = vbcast.lane.b32.xlu0 %v2318, %s2323
        %v2325 = vpop.permute.xlu0 %2324
        %s2327 = sor.u32 256, 16
        %2328 = vbcast.lane.b32.xlu0 %v2318, %s2327
        %v2329 = vpop.permute.xlu0 %2328
        %s2331 = sor.u32 256, 24
        %2332 = vbcast.lane.b32.xlu0 %v2318, %s2331
        %v2333 = vpop.permute.xlu0 %2332
        %s2335 = sor.u32 256, 32
        %2336 = vbcast.lane.b32.xlu0 %v2318, %s2335
        %v2337 = vpop.permute.xlu0 %2336
        %s2339 = sor.u32 256, 40
        %2340 = vbcast.lane.b32.xlu0 %v2318, %s2339
        %v2341 = vpop.permute.xlu0 %2340
        %s2343 = sor.u32 256, 48
        %2344 = vbcast.lane.b32.xlu0 %v2318, %s2343
        %v2345 = vpop.permute.xlu0 %2344
        %s2347 = sor.u32 256, 56
        %2348 = vbcast.lane.b32.xlu0 %v2318, %s2347
        %v2349 = vpop.permute.xlu0 %2348
        %s2351 = sor.u32 256, 64
        %2352 = vbcast.lane.b32.xlu0 %v2318, %s2351
        %v2353 = vpop.permute.xlu0 %2352
        %s2355 = sor.u32 256, 72
        %2356 = vbcast.lane.b32.xlu0 %v2318, %s2355
        %v2357 = vpop.permute.xlu0 %2356
        %s2359 = sor.u32 256, 80
        %2360 = vbcast.lane.b32.xlu0 %v2318, %s2359
        %v2361 = vpop.permute.xlu0 %2360
        %s2363 = sor.u32 256, 88
        %2364 = vbcast.lane.b32.xlu0 %v2318, %s2363
        %v2365 = vpop.permute.xlu0 %2364
        %s2367 = sor.u32 256, 96
        %2368 = vbcast.lane.b32.xlu0 %v2318, %s2367
        %v2369 = vpop.permute.xlu0 %2368
        %s2371 = sor.u32 256, 104
        %2372 = vbcast.lane.b32.xlu0 %v2318, %s2371
        %v2373 = vpop.permute.xlu0 %2372
        %s2375 = sor.u32 256, 112
        %2376 = vbcast.lane.b32.xlu0 %v2318, %s2375
        %v2377 = vpop.permute.xlu0 %2376
        %s2379 = sor.u32 256, 120
        %2380 = vbcast.lane.b32.xlu0 %v2318, %s2379
        %v2381 = vpop.permute.xlu0 %2380
        %v2382 = vlaneseq
        %v2383 = vshrl.u32 %v2382, 7
        %v2384 = vsub.s32 2, %v2383
        %v2385 = vrot.slane %v658, %v2384
        %2387 = vbcast.lane.b32.xlu0 %v2385, 256
        %v2388 = vpop.permute.xlu0 %2387
        %s2390 = sor.u32 256, 8
        %2391 = vbcast.lane.b32.xlu0 %v2385, %s2390
        %v2392 = vpop.permute.xlu0 %2391
        %s2394 = sor.u32 256, 16
        %2395 = vbcast.lane.b32.xlu0 %v2385, %s2394
        %v2396 = vpop.permute.xlu0 %2395
        %s2398 = sor.u32 256, 24
        %2399 = vbcast.lane.b32.xlu0 %v2385, %s2398
        %v2400 = vpop.permute.xlu0 %2399
        %s2402 = sor.u32 256, 32
        %2403 = vbcast.lane.b32.xlu0 %v2385, %s2402
        %v2404 = vpop.permute.xlu0 %2403
        %s2406 = sor.u32 256, 40
        %2407 = vbcast.lane.b32.xlu0 %v2385, %s2406
        %v2408 = vpop.permute.xlu0 %2407
        %s2410 = sor.u32 256, 48
        %2411 = vbcast.lane.b32.xlu0 %v2385, %s2410
        %v2412 = vpop.permute.xlu0 %2411
        %s2414 = sor.u32 256, 56
        %2415 = vbcast.lane.b32.xlu0 %v2385, %s2414
        %v2416 = vpop.permute.xlu0 %2415
        %s2418 = sor.u32 256, 64
        %2419 = vbcast.lane.b32.xlu0 %v2385, %s2418
        %v2420 = vpop.permute.xlu0 %2419
        %s2422 = sor.u32 256, 72
        %2423 = vbcast.lane.b32.xlu0 %v2385, %s2422
        %v2424 = vpop.permute.xlu0 %2423
        %s2426 = sor.u32 256, 80
        %2427 = vbcast.lane.b32.xlu0 %v2385, %s2426
        %v2428 = vpop.permute.xlu0 %2427
        %s2430 = sor.u32 256, 88
        %2431 = vbcast.lane.b32.xlu0 %v2385, %s2430
        %v2432 = vpop.permute.xlu0 %2431
        %s2434 = sor.u32 256, 96
        %2435 = vbcast.lane.b32.xlu0 %v2385, %s2434
        %v2436 = vpop.permute.xlu0 %2435
        %s2438 = sor.u32 256, 104
        %2439 = vbcast.lane.b32.xlu0 %v2385, %s2438
        %v2440 = vpop.permute.xlu0 %2439
        %s2442 = sor.u32 256, 112
        %2443 = vbcast.lane.b32.xlu0 %v2385, %s2442
        %v2444 = vpop.permute.xlu0 %2443
        %s2446 = sor.u32 256, 120
        %2447 = vbcast.lane.b32.xlu0 %v2385, %s2446
        %v2448 = vpop.permute.xlu0 %2447
        %v2449 = vlaneseq
        %v2450 = vshrl.u32 %v2449, 7
        %v2451 = vsub.s32 3, %v2450
        %v2452 = vrot.slane %v658, %v2451
        %2454 = vbcast.lane.b32.xlu0 %v2452, 256
        %v2455 = vpop.permute.xlu0 %2454
        %s2457 = sor.u32 256, 8
        %2458 = vbcast.lane.b32.xlu0 %v2452, %s2457
        %v2459 = vpop.permute.xlu0 %2458
        %s2461 = sor.u32 256, 16
        %2462 = vbcast.lane.b32.xlu0 %v2452, %s2461
        %v2463 = vpop.permute.xlu0 %2462
        %s2465 = sor.u32 256, 24
        %2466 = vbcast.lane.b32.xlu0 %v2452, %s2465
        %v2467 = vpop.permute.xlu0 %2466
        %s2469 = sor.u32 256, 32
        %2470 = vbcast.lane.b32.xlu0 %v2452, %s2469
        %v2471 = vpop.permute.xlu0 %2470
        %s2473 = sor.u32 256, 40
        %2474 = vbcast.lane.b32.xlu0 %v2452, %s2473
        %v2475 = vpop.permute.xlu0 %2474
        %s2477 = sor.u32 256, 48
        %2478 = vbcast.lane.b32.xlu0 %v2452, %s2477
        %v2479 = vpop.permute.xlu0 %2478
        %s2481 = sor.u32 256, 56
        %2482 = vbcast.lane.b32.xlu0 %v2452, %s2481
        %v2483 = vpop.permute.xlu0 %2482
        %s2485 = sor.u32 256, 64
        %2486 = vbcast.lane.b32.xlu0 %v2452, %s2485
        %v2487 = vpop.permute.xlu0 %2486
        %s2489 = sor.u32 256, 72
        %2490 = vbcast.lane.b32.xlu0 %v2452, %s2489
        %v2491 = vpop.permute.xlu0 %2490
        %s2493 = sor.u32 256, 80
        %2494 = vbcast.lane.b32.xlu0 %v2452, %s2493
        %v2495 = vpop.permute.xlu0 %2494
        %s2497 = sor.u32 256, 88
        %2498 = vbcast.lane.b32.xlu0 %v2452, %s2497
        %v2499 = vpop.permute.xlu0 %2498
        %s2501 = sor.u32 256, 96
        %2502 = vbcast.lane.b32.xlu0 %v2452, %s2501
        %v2503 = vpop.permute.xlu0 %2502
        %s2505 = sor.u32 256, 104
        %2506 = vbcast.lane.b32.xlu0 %v2452, %s2505
        %v2507 = vpop.permute.xlu0 %2506
        %s2509 = sor.u32 256, 112
        %2510 = vbcast.lane.b32.xlu0 %v2452, %s2509
        %v2511 = vpop.permute.xlu0 %2510
        %s2513 = sor.u32 256, 120
        %2514 = vbcast.lane.b32.xlu0 %v2452, %s2513
        %v2515 = vpop.permute.xlu0 %2514
        %v2516 = vlaneseq
        %v2517 = vshrl.u32 %v2516, 7
        %v2518 = vsub.s32 4, %v2517
        %v2519 = vrot.slane %v658, %v2518
        %2521 = vbcast.lane.b32.xlu0 %v2519, 256
        %v2522 = vpop.permute.xlu0 %2521
        %s2524 = sor.u32 256, 8
        %2525 = vbcast.lane.b32.xlu0 %v2519, %s2524
        %v2526 = vpop.permute.xlu0 %2525
        %s2528 = sor.u32 256, 16
        %2529 = vbcast.lane.b32.xlu0 %v2519, %s2528
        %v2530 = vpop.permute.xlu0 %2529
        %s2532 = sor.u32 256, 24
        %2533 = vbcast.lane.b32.xlu0 %v2519, %s2532
        %v2534 = vpop.permute.xlu0 %2533
        %s2536 = sor.u32 256, 32
        %2537 = vbcast.lane.b32.xlu0 %v2519, %s2536
        %v2538 = vpop.permute.xlu0 %2537
        %s2540 = sor.u32 256, 40
        %2541 = vbcast.lane.b32.xlu0 %v2519, %s2540
        %v2542 = vpop.permute.xlu0 %2541
        %s2544 = sor.u32 256, 48
        %2545 = vbcast.lane.b32.xlu0 %v2519, %s2544
        %v2546 = vpop.permute.xlu0 %2545
        %s2548 = sor.u32 256, 56
        %2549 = vbcast.lane.b32.xlu0 %v2519, %s2548
        %v2550 = vpop.permute.xlu0 %2549
        %s2552 = sor.u32 256, 64
        %2553 = vbcast.lane.b32.xlu0 %v2519, %s2552
        %v2554 = vpop.permute.xlu0 %2553
        %s2556 = sor.u32 256, 72
        %2557 = vbcast.lane.b32.xlu0 %v2519, %s2556
        %v2558 = vpop.permute.xlu0 %2557
        %s2560 = sor.u32 256, 80
        %2561 = vbcast.lane.b32.xlu0 %v2519, %s2560
        %v2562 = vpop.permute.xlu0 %2561
        %s2564 = sor.u32 256, 88
        %2565 = vbcast.lane.b32.xlu0 %v2519, %s2564
        %v2566 = vpop.permute.xlu0 %2565
        %s2568 = sor.u32 256, 96
        %2569 = vbcast.lane.b32.xlu0 %v2519, %s2568
        %v2570 = vpop.permute.xlu0 %2569
        %s2572 = sor.u32 256, 104
        %2573 = vbcast.lane.b32.xlu0 %v2519, %s2572
        %v2574 = vpop.permute.xlu0 %2573
        %s2576 = sor.u32 256, 112
        %2577 = vbcast.lane.b32.xlu0 %v2519, %s2576
        %v2578 = vpop.permute.xlu0 %2577
        %s2580 = sor.u32 256, 120
        %2581 = vbcast.lane.b32.xlu0 %v2519, %s2580
        %v2582 = vpop.permute.xlu0 %2581
        %v2583 = vlaneseq
        %v2584 = vshrl.u32 %v2583, 7
        %v2585 = vsub.s32 5, %v2584
        %v2586 = vrot.slane %v658, %v2585
        %2588 = vbcast.lane.b32.xlu0 %v2586, 256
        %v2589 = vpop.permute.xlu0 %2588
        %s2591 = sor.u32 256, 8
        %2592 = vbcast.lane.b32.xlu0 %v2586, %s2591
        %v2593 = vpop.permute.xlu0 %2592
        %s2595 = sor.u32 256, 16
        %2596 = vbcast.lane.b32.xlu0 %v2586, %s2595
        %v2597 = vpop.permute.xlu0 %2596
        %s2599 = sor.u32 256, 24
        %2600 = vbcast.lane.b32.xlu0 %v2586, %s2599
        %v2601 = vpop.permute.xlu0 %2600
        %s2603 = sor.u32 256, 32
        %2604 = vbcast.lane.b32.xlu0 %v2586, %s2603
        %v2605 = vpop.permute.xlu0 %2604
        %s2607 = sor.u32 256, 40
        %2608 = vbcast.lane.b32.xlu0 %v2586, %s2607
        %v2609 = vpop.permute.xlu0 %2608
        %s2611 = sor.u32 256, 48
        %2612 = vbcast.lane.b32.xlu0 %v2586, %s2611
        %v2613 = vpop.permute.xlu0 %2612
        %s2615 = sor.u32 256, 56
        %2616 = vbcast.lane.b32.xlu0 %v2586, %s2615
        %v2617 = vpop.permute.xlu0 %2616
        %s2619 = sor.u32 256, 64
        %2620 = vbcast.lane.b32.xlu0 %v2586, %s2619
        %v2621 = vpop.permute.xlu0 %2620
        %s2623 = sor.u32 256, 72
        %2624 = vbcast.lane.b32.xlu0 %v2586, %s2623
        %v2625 = vpop.permute.xlu0 %2624
        %s2627 = sor.u32 256, 80
        %2628 = vbcast.lane.b32.xlu0 %v2586, %s2627
        %v2629 = vpop.permute.xlu0 %2628
        %s2631 = sor.u32 256, 88
        %2632 = vbcast.lane.b32.xlu0 %v2586, %s2631
        %v2633 = vpop.permute.xlu0 %2632
        %s2635 = sor.u32 256, 96
        %2636 = vbcast.lane.b32.xlu0 %v2586, %s2635
        %v2637 = vpop.permute.xlu0 %2636
        %s2639 = sor.u32 256, 104
        %2640 = vbcast.lane.b32.xlu0 %v2586, %s2639
        %v2641 = vpop.permute.xlu0 %2640
        %s2643 = sor.u32 256, 112
        %2644 = vbcast.lane.b32.xlu0 %v2586, %s2643
        %v2645 = vpop.permute.xlu0 %2644
        %s2647 = sor.u32 256, 120
        %2648 = vbcast.lane.b32.xlu0 %v2586, %s2647
        %v2649 = vpop.permute.xlu0 %2648
        %v2650 = vlaneseq
        %v2651 = vshrl.u32 %v2650, 7
        %v2652 = vsub.s32 6, %v2651
        %v2653 = vrot.slane %v658, %v2652
        %2655 = vbcast.lane.b32.xlu0 %v2653, 256
        %v2656 = vpop.permute.xlu0 %2655
        %s2658 = sor.u32 256, 8
        %2659 = vbcast.lane.b32.xlu0 %v2653, %s2658
        %v2660 = vpop.permute.xlu0 %2659
        %s2662 = sor.u32 256, 16
        %2663 = vbcast.lane.b32.xlu0 %v2653, %s2662
        %v2664 = vpop.permute.xlu0 %2663
        %s2666 = sor.u32 256, 24
        %2667 = vbcast.lane.b32.xlu0 %v2653, %s2666
        %v2668 = vpop.permute.xlu0 %2667
        %s2670 = sor.u32 256, 32
        %2671 = vbcast.lane.b32.xlu0 %v2653, %s2670
        %v2672 = vpop.permute.xlu0 %2671
        %s2674 = sor.u32 256, 40
        %2675 = vbcast.lane.b32.xlu0 %v2653, %s2674
        %v2676 = vpop.permute.xlu0 %2675
        %s2678 = sor.u32 256, 48
        %2679 = vbcast.lane.b32.xlu0 %v2653, %s2678
        %v2680 = vpop.permute.xlu0 %2679
        %s2682 = sor.u32 256, 56
        %2683 = vbcast.lane.b32.xlu0 %v2653, %s2682
        %v2684 = vpop.permute.xlu0 %2683
        %s2686 = sor.u32 256, 64
        %2687 = vbcast.lane.b32.xlu0 %v2653, %s2686
        %v2688 = vpop.permute.xlu0 %2687
        %s2690 = sor.u32 256, 72
        %2691 = vbcast.lane.b32.xlu0 %v2653, %s2690
        %v2692 = vpop.permute.xlu0 %2691
        %s2694 = sor.u32 256, 80
        %2695 = vbcast.lane.b32.xlu0 %v2653, %s2694
        %v2696 = vpop.permute.xlu0 %2695
        %s2698 = sor.u32 256, 88
        %2699 = vbcast.lane.b32.xlu0 %v2653, %s2698
        %v2700 = vpop.permute.xlu0 %2699
        %s2702 = sor.u32 256, 96
        %2703 = vbcast.lane.b32.xlu0 %v2653, %s2702
        %v2704 = vpop.permute.xlu0 %2703
        %s2706 = sor.u32 256, 104
        %2707 = vbcast.lane.b32.xlu0 %v2653, %s2706
        %v2708 = vpop.permute.xlu0 %2707
        %s2710 = sor.u32 256, 112
        %2711 = vbcast.lane.b32.xlu0 %v2653, %s2710
        %v2712 = vpop.permute.xlu0 %2711
        %s2714 = sor.u32 256, 120
        %2715 = vbcast.lane.b32.xlu0 %v2653, %s2714
        %v2716 = vpop.permute.xlu0 %2715
        %v2717 = vlaneseq
        %v2718 = vshrl.u32 %v2717, 7
        %v2719 = vsub.s32 7, %v2718
        %v2720 = vrot.slane %v658, %v2719
        %2722 = vbcast.lane.b32.xlu0 %v2720, 256
        %v2723 = vpop.permute.xlu0 %2722
        %s2725 = sor.u32 256, 8
        %2726 = vbcast.lane.b32.xlu0 %v2720, %s2725
        %v2727 = vpop.permute.xlu0 %2726
        %s2729 = sor.u32 256, 16
        %2730 = vbcast.lane.b32.xlu0 %v2720, %s2729
        %v2731 = vpop.permute.xlu0 %2730
        %s2733 = sor.u32 256, 24
        %2734 = vbcast.lane.b32.xlu0 %v2720, %s2733
        %v2735 = vpop.permute.xlu0 %2734
        %s2737 = sor.u32 256, 32
        %2738 = vbcast.lane.b32.xlu0 %v2720, %s2737
        %v2739 = vpop.permute.xlu0 %2738
        %s2741 = sor.u32 256, 40
        %2742 = vbcast.lane.b32.xlu0 %v2720, %s2741
        %v2743 = vpop.permute.xlu0 %2742
        %s2745 = sor.u32 256, 48
        %2746 = vbcast.lane.b32.xlu0 %v2720, %s2745
        %v2747 = vpop.permute.xlu0 %2746
        %s2749 = sor.u32 256, 56
        %2750 = vbcast.lane.b32.xlu0 %v2720, %s2749
        %v2751 = vpop.permute.xlu0 %2750
        %s2753 = sor.u32 256, 64
        %2754 = vbcast.lane.b32.xlu0 %v2720, %s2753
        %v2755 = vpop.permute.xlu0 %2754
        %s2757 = sor.u32 256, 72
        %2758 = vbcast.lane.b32.xlu0 %v2720, %s2757
        %v2759 = vpop.permute.xlu0 %2758
        %s2761 = sor.u32 256, 80
        %2762 = vbcast.lane.b32.xlu0 %v2720, %s2761
        %v2763 = vpop.permute.xlu0 %2762
        %s2765 = sor.u32 256, 88
        %2766 = vbcast.lane.b32.xlu0 %v2720, %s2765
        %v2767 = vpop.permute.xlu0 %2766
        %s2769 = sor.u32 256, 96
        %2770 = vbcast.lane.b32.xlu0 %v2720, %s2769
        %v2771 = vpop.permute.xlu0 %2770
        %s2773 = sor.u32 256, 104
        %2774 = vbcast.lane.b32.xlu0 %v2720, %s2773
        %v2775 = vpop.permute.xlu0 %2774
        %s2777 = sor.u32 256, 112
        %2778 = vbcast.lane.b32.xlu0 %v2720, %s2777
        %v2779 = vpop.permute.xlu0 %2778
        %s2781 = sor.u32 256, 120
        %2782 = vbcast.lane.b32.xlu0 %v2720, %s2781
        %v2783 = vpop.permute.xlu0 %2782
        %v2784 = vlaneseq
        %v2785 = vshrl.u32 %v2784, 7
        %v2786 = vsub.s32 0, %v2785
        %v2787 = vrot.slane %v761, %v2786
        %2789 = vbcast.lane.b32.xlu0 %v2787, 256
        %v2790 = vpop.permute.xlu0 %2789
        %s2792 = sor.u32 256, 8
        %2793 = vbcast.lane.b32.xlu0 %v2787, %s2792
        %v2794 = vpop.permute.xlu0 %2793
        %s2796 = sor.u32 256, 16
        %2797 = vbcast.lane.b32.xlu0 %v2787, %s2796
        %v2798 = vpop.permute.xlu0 %2797
        %s2800 = sor.u32 256, 24
        %2801 = vbcast.lane.b32.xlu0 %v2787, %s2800
        %v2802 = vpop.permute.xlu0 %2801
        %s2804 = sor.u32 256, 32
        %2805 = vbcast.lane.b32.xlu0 %v2787, %s2804
        %v2806 = vpop.permute.xlu0 %2805
        %s2808 = sor.u32 256, 40
        %2809 = vbcast.lane.b32.xlu0 %v2787, %s2808
        %v2810 = vpop.permute.xlu0 %2809
        %s2812 = sor.u32 256, 48
        %2813 = vbcast.lane.b32.xlu0 %v2787, %s2812
        %v2814 = vpop.permute.xlu0 %2813
        %s2816 = sor.u32 256, 56
        %2817 = vbcast.lane.b32.xlu0 %v2787, %s2816
        %v2818 = vpop.permute.xlu0 %2817
        %s2820 = sor.u32 256, 64
        %2821 = vbcast.lane.b32.xlu0 %v2787, %s2820
        %v2822 = vpop.permute.xlu0 %2821
        %s2824 = sor.u32 256, 72
        %2825 = vbcast.lane.b32.xlu0 %v2787, %s2824
        %v2826 = vpop.permute.xlu0 %2825
        %s2828 = sor.u32 256, 80
        %2829 = vbcast.lane.b32.xlu0 %v2787, %s2828
        %v2830 = vpop.permute.xlu0 %2829
        %s2832 = sor.u32 256, 88
        %2833 = vbcast.lane.b32.xlu0 %v2787, %s2832
        %v2834 = vpop.permute.xlu0 %2833
        %s2836 = sor.u32 256, 96
        %2837 = vbcast.lane.b32.xlu0 %v2787, %s2836
        %v2838 = vpop.permute.xlu0 %2837
        %s2840 = sor.u32 256, 104
        %2841 = vbcast.lane.b32.xlu0 %v2787, %s2840
        %v2842 = vpop.permute.xlu0 %2841
        %s2844 = sor.u32 256, 112
        %2845 = vbcast.lane.b32.xlu0 %v2787, %s2844
        %v2846 = vpop.permute.xlu0 %2845
        %s2848 = sor.u32 256, 120
        %2849 = vbcast.lane.b32.xlu0 %v2787, %s2848
        %v2850 = vpop.permute.xlu0 %2849
        %v2851 = vlaneseq
        %v2852 = vshrl.u32 %v2851, 7
        %v2853 = vsub.s32 1, %v2852
        %v2854 = vrot.slane %v761, %v2853
        %2856 = vbcast.lane.b32.xlu0 %v2854, 256
        %v2857 = vpop.permute.xlu0 %2856
        %s2859 = sor.u32 256, 8
        %2860 = vbcast.lane.b32.xlu0 %v2854, %s2859
        %v2861 = vpop.permute.xlu0 %2860
        %s2863 = sor.u32 256, 16
        %2864 = vbcast.lane.b32.xlu0 %v2854, %s2863
        %v2865 = vpop.permute.xlu0 %2864
        %s2867 = sor.u32 256, 24
        %2868 = vbcast.lane.b32.xlu0 %v2854, %s2867
        %v2869 = vpop.permute.xlu0 %2868
        %s2871 = sor.u32 256, 32
        %2872 = vbcast.lane.b32.xlu0 %v2854, %s2871
        %v2873 = vpop.permute.xlu0 %2872
        %s2875 = sor.u32 256, 40
        %2876 = vbcast.lane.b32.xlu0 %v2854, %s2875
        %v2877 = vpop.permute.xlu0 %2876
        %s2879 = sor.u32 256, 48
        %2880 = vbcast.lane.b32.xlu0 %v2854, %s2879
        %v2881 = vpop.permute.xlu0 %2880
        %s2883 = sor.u32 256, 56
        %2884 = vbcast.lane.b32.xlu0 %v2854, %s2883
        %v2885 = vpop.permute.xlu0 %2884
        %s2887 = sor.u32 256, 64
        %2888 = vbcast.lane.b32.xlu0 %v2854, %s2887
        %v2889 = vpop.permute.xlu0 %2888
        %s2891 = sor.u32 256, 72
        %2892 = vbcast.lane.b32.xlu0 %v2854, %s2891
        %v2893 = vpop.permute.xlu0 %2892
        %s2895 = sor.u32 256, 80
        %2896 = vbcast.lane.b32.xlu0 %v2854, %s2895
        %v2897 = vpop.permute.xlu0 %2896
        %s2899 = sor.u32 256, 88
        %2900 = vbcast.lane.b32.xlu0 %v2854, %s2899
        %v2901 = vpop.permute.xlu0 %2900
        %s2903 = sor.u32 256, 96
        %2904 = vbcast.lane.b32.xlu0 %v2854, %s2903
        %v2905 = vpop.permute.xlu0 %2904
        %s2907 = sor.u32 256, 104
        %2908 = vbcast.lane.b32.xlu0 %v2854, %s2907
        %v2909 = vpop.permute.xlu0 %2908
        %s2911 = sor.u32 256, 112
        %2912 = vbcast.lane.b32.xlu0 %v2854, %s2911
        %v2913 = vpop.permute.xlu0 %2912
        %s2915 = sor.u32 256, 120
        %2916 = vbcast.lane.b32.xlu0 %v2854, %s2915
        %v2917 = vpop.permute.xlu0 %2916
        %v2918 = vlaneseq
        %v2919 = vshrl.u32 %v2918, 7
        %v2920 = vsub.s32 2, %v2919
        %v2921 = vrot.slane %v761, %v2920
        %2923 = vbcast.lane.b32.xlu0 %v2921, 256
        %v2924 = vpop.permute.xlu0 %2923
        %s2926 = sor.u32 256, 8
        %2927 = vbcast.lane.b32.xlu0 %v2921, %s2926
        %v2928 = vpop.permute.xlu0 %2927
        %s2930 = sor.u32 256, 16
        %2931 = vbcast.lane.b32.xlu0 %v2921, %s2930
        %v2932 = vpop.permute.xlu0 %2931
        %s2934 = sor.u32 256, 24
        %2935 = vbcast.lane.b32.xlu0 %v2921, %s2934
        %v2936 = vpop.permute.xlu0 %2935
        %s2938 = sor.u32 256, 32
        %2939 = vbcast.lane.b32.xlu0 %v2921, %s2938
        %v2940 = vpop.permute.xlu0 %2939
        %s2942 = sor.u32 256, 40
        %2943 = vbcast.lane.b32.xlu0 %v2921, %s2942
        %v2944 = vpop.permute.xlu0 %2943
        %s2946 = sor.u32 256, 48
        %2947 = vbcast.lane.b32.xlu0 %v2921, %s2946
        %v2948 = vpop.permute.xlu0 %2947
        %s2950 = sor.u32 256, 56
        %2951 = vbcast.lane.b32.xlu0 %v2921, %s2950
        %v2952 = vpop.permute.xlu0 %2951
        %s2954 = sor.u32 256, 64
        %2955 = vbcast.lane.b32.xlu0 %v2921, %s2954
        %v2956 = vpop.permute.xlu0 %2955
        %s2958 = sor.u32 256, 72
        %2959 = vbcast.lane.b32.xlu0 %v2921, %s2958
        %v2960 = vpop.permute.xlu0 %2959
        %s2962 = sor.u32 256, 80
        %2963 = vbcast.lane.b32.xlu0 %v2921, %s2962
        %v2964 = vpop.permute.xlu0 %2963
        %s2966 = sor.u32 256, 88
        %2967 = vbcast.lane.b32.xlu0 %v2921, %s2966
        %v2968 = vpop.permute.xlu0 %2967
        %s2970 = sor.u32 256, 96
        %2971 = vbcast.lane.b32.xlu0 %v2921, %s2970
        %v2972 = vpop.permute.xlu0 %2971
        %s2974 = sor.u32 256, 104
        %2975 = vbcast.lane.b32.xlu0 %v2921, %s2974
        %v2976 = vpop.permute.xlu0 %2975
        %s2978 = sor.u32 256, 112
        %2979 = vbcast.lane.b32.xlu0 %v2921, %s2978
        %v2980 = vpop.permute.xlu0 %2979
        %s2982 = sor.u32 256, 120
        %2983 = vbcast.lane.b32.xlu0 %v2921, %s2982
        %v2984 = vpop.permute.xlu0 %2983
        %v2985 = vlaneseq
        %v2986 = vshrl.u32 %v2985, 7
        %v2987 = vsub.s32 3, %v2986
        %v2988 = vrot.slane %v761, %v2987
        %2990 = vbcast.lane.b32.xlu0 %v2988, 256
        %v2991 = vpop.permute.xlu0 %2990
        %s2993 = sor.u32 256, 8
        %2994 = vbcast.lane.b32.xlu0 %v2988, %s2993
        %v2995 = vpop.permute.xlu0 %2994
        %s2997 = sor.u32 256, 16
        %2998 = vbcast.lane.b32.xlu0 %v2988, %s2997
        %v2999 = vpop.permute.xlu0 %2998
        %s3001 = sor.u32 256, 24
        %3002 = vbcast.lane.b32.xlu0 %v2988, %s3001
        %v3003 = vpop.permute.xlu0 %3002
        %s3005 = sor.u32 256, 32
        %3006 = vbcast.lane.b32.xlu0 %v2988, %s3005
        %v3007 = vpop.permute.xlu0 %3006
        %s3009 = sor.u32 256, 40
        %3010 = vbcast.lane.b32.xlu0 %v2988, %s3009
        %v3011 = vpop.permute.xlu0 %3010
        %s3013 = sor.u32 256, 48
        %3014 = vbcast.lane.b32.xlu0 %v2988, %s3013
        %v3015 = vpop.permute.xlu0 %3014
        %s3017 = sor.u32 256, 56
        %3018 = vbcast.lane.b32.xlu0 %v2988, %s3017
        %v3019 = vpop.permute.xlu0 %3018
        %s3021 = sor.u32 256, 64
        %3022 = vbcast.lane.b32.xlu0 %v2988, %s3021
        %v3023 = vpop.permute.xlu0 %3022
        %s3025 = sor.u32 256, 72
        %3026 = vbcast.lane.b32.xlu0 %v2988, %s3025
        %v3027 = vpop.permute.xlu0 %3026
        %s3029 = sor.u32 256, 80
        %3030 = vbcast.lane.b32.xlu0 %v2988, %s3029
        %v3031 = vpop.permute.xlu0 %3030
        %s3033 = sor.u32 256, 88
        %3034 = vbcast.lane.b32.xlu0 %v2988, %s3033
        %v3035 = vpop.permute.xlu0 %3034
        %s3037 = sor.u32 256, 96
        %3038 = vbcast.lane.b32.xlu0 %v2988, %s3037
        %v3039 = vpop.permute.xlu0 %3038
        %s3041 = sor.u32 256, 104
        %3042 = vbcast.lane.b32.xlu0 %v2988, %s3041
        %v3043 = vpop.permute.xlu0 %3042
        %s3045 = sor.u32 256, 112
        %3046 = vbcast.lane.b32.xlu0 %v2988, %s3045
        %v3047 = vpop.permute.xlu0 %3046
        %s3049 = sor.u32 256, 120
        %3050 = vbcast.lane.b32.xlu0 %v2988, %s3049
        %v3051 = vpop.permute.xlu0 %3050
        %v3052 = vlaneseq
        %v3053 = vshrl.u32 %v3052, 7
        %v3054 = vsub.s32 4, %v3053
        %v3055 = vrot.slane %v761, %v3054
        %3057 = vbcast.lane.b32.xlu0 %v3055, 256
        %v3058 = vpop.permute.xlu0 %3057
        %s3060 = sor.u32 256, 8
        %3061 = vbcast.lane.b32.xlu0 %v3055, %s3060
        %v3062 = vpop.permute.xlu0 %3061
        %s3064 = sor.u32 256, 16
        %3065 = vbcast.lane.b32.xlu0 %v3055, %s3064
        %v3066 = vpop.permute.xlu0 %3065
        %s3068 = sor.u32 256, 24
        %3069 = vbcast.lane.b32.xlu0 %v3055, %s3068
        %v3070 = vpop.permute.xlu0 %3069
        %s3072 = sor.u32 256, 32
        %3073 = vbcast.lane.b32.xlu0 %v3055, %s3072
        %v3074 = vpop.permute.xlu0 %3073
        %s3076 = sor.u32 256, 40
        %3077 = vbcast.lane.b32.xlu0 %v3055, %s3076
        %v3078 = vpop.permute.xlu0 %3077
        %s3080 = sor.u32 256, 48
        %3081 = vbcast.lane.b32.xlu0 %v3055, %s3080
        %v3082 = vpop.permute.xlu0 %3081
        %s3084 = sor.u32 256, 56
        %3085 = vbcast.lane.b32.xlu0 %v3055, %s3084
        %v3086 = vpop.permute.xlu0 %3085
        %s3088 = sor.u32 256, 64
        %3089 = vbcast.lane.b32.xlu0 %v3055, %s3088
        %v3090 = vpop.permute.xlu0 %3089
        %s3092 = sor.u32 256, 72
        %3093 = vbcast.lane.b32.xlu0 %v3055, %s3092
        %v3094 = vpop.permute.xlu0 %3093
        %s3096 = sor.u32 256, 80
        %3097 = vbcast.lane.b32.xlu0 %v3055, %s3096
        %v3098 = vpop.permute.xlu0 %3097
        %s3100 = sor.u32 256, 88
        %3101 = vbcast.lane.b32.xlu0 %v3055, %s3100
        %v3102 = vpop.permute.xlu0 %3101
        %s3104 = sor.u32 256, 96
        %3105 = vbcast.lane.b32.xlu0 %v3055, %s3104
        %v3106 = vpop.permute.xlu0 %3105
        %s3108 = sor.u32 256, 104
        %3109 = vbcast.lane.b32.xlu0 %v3055, %s3108
        %v3110 = vpop.permute.xlu0 %3109
        %s3112 = sor.u32 256, 112
        %3113 = vbcast.lane.b32.xlu0 %v3055, %s3112
        %v3114 = vpop.permute.xlu0 %3113
        %s3116 = sor.u32 256, 120
        %3117 = vbcast.lane.b32.xlu0 %v3055, %s3116
        %v3118 = vpop.permute.xlu0 %3117
        %v3119 = vlaneseq
        %v3120 = vshrl.u32 %v3119, 7
        %v3121 = vsub.s32 5, %v3120
        %v3122 = vrot.slane %v761, %v3121
        %3124 = vbcast.lane.b32.xlu0 %v3122, 256
        %v3125 = vpop.permute.xlu0 %3124
        %s3127 = sor.u32 256, 8
        %3128 = vbcast.lane.b32.xlu0 %v3122, %s3127
        %v3129 = vpop.permute.xlu0 %3128
        %s3131 = sor.u32 256, 16
        %3132 = vbcast.lane.b32.xlu0 %v3122, %s3131
        %v3133 = vpop.permute.xlu0 %3132
        %s3135 = sor.u32 256, 24
        %3136 = vbcast.lane.b32.xlu0 %v3122, %s3135
        %v3137 = vpop.permute.xlu0 %3136
        %s3139 = sor.u32 256, 32
        %3140 = vbcast.lane.b32.xlu0 %v3122, %s3139
        %v3141 = vpop.permute.xlu0 %3140
        %s3143 = sor.u32 256, 40
        %3144 = vbcast.lane.b32.xlu0 %v3122, %s3143
        %v3145 = vpop.permute.xlu0 %3144
        %s3147 = sor.u32 256, 48
        %3148 = vbcast.lane.b32.xlu0 %v3122, %s3147
        %v3149 = vpop.permute.xlu0 %3148
        %s3151 = sor.u32 256, 56
        %3152 = vbcast.lane.b32.xlu0 %v3122, %s3151
        %v3153 = vpop.permute.xlu0 %3152
        %s3155 = sor.u32 256, 64
        %3156 = vbcast.lane.b32.xlu0 %v3122, %s3155
        %v3157 = vpop.permute.xlu0 %3156
        %s3159 = sor.u32 256, 72
        %3160 = vbcast.lane.b32.xlu0 %v3122, %s3159
        %v3161 = vpop.permute.xlu0 %3160
        %s3163 = sor.u32 256, 80
        %3164 = vbcast.lane.b32.xlu0 %v3122, %s3163
        %v3165 = vpop.permute.xlu0 %3164
        %s3167 = sor.u32 256, 88
        %3168 = vbcast.lane.b32.xlu0 %v3122, %s3167
        %v3169 = vpop.permute.xlu0 %3168
        %s3171 = sor.u32 256, 96
        %3172 = vbcast.lane.b32.xlu0 %v3122, %s3171
        %v3173 = vpop.permute.xlu0 %3172
        %s3175 = sor.u32 256, 104
        %3176 = vbcast.lane.b32.xlu0 %v3122, %s3175
        %v3177 = vpop.permute.xlu0 %3176
        %s3179 = sor.u32 256, 112
        %3180 = vbcast.lane.b32.xlu0 %v3122, %s3179
        %v3181 = vpop.permute.xlu0 %3180
        %s3183 = sor.u32 256, 120
        %3184 = vbcast.lane.b32.xlu0 %v3122, %s3183
        %v3185 = vpop.permute.xlu0 %3184
        %v3186 = vlaneseq
        %v3187 = vshrl.u32 %v3186, 7
        %v3188 = vsub.s32 6, %v3187
        %v3189 = vrot.slane %v761, %v3188
        %3191 = vbcast.lane.b32.xlu0 %v3189, 256
        %v3192 = vpop.permute.xlu0 %3191
        %s3194 = sor.u32 256, 8
        %3195 = vbcast.lane.b32.xlu0 %v3189, %s3194
        %v3196 = vpop.permute.xlu0 %3195
        %s3198 = sor.u32 256, 16
        %3199 = vbcast.lane.b32.xlu0 %v3189, %s3198
        %v3200 = vpop.permute.xlu0 %3199
        %s3202 = sor.u32 256, 24
        %3203 = vbcast.lane.b32.xlu0 %v3189, %s3202
        %v3204 = vpop.permute.xlu0 %3203
        %s3206 = sor.u32 256, 32
        %3207 = vbcast.lane.b32.xlu0 %v3189, %s3206
        %v3208 = vpop.permute.xlu0 %3207
        %s3210 = sor.u32 256, 40
        %3211 = vbcast.lane.b32.xlu0 %v3189, %s3210
        %v3212 = vpop.permute.xlu0 %3211
        %s3214 = sor.u32 256, 48
        %3215 = vbcast.lane.b32.xlu0 %v3189, %s3214
        %v3216 = vpop.permute.xlu0 %3215
        %s3218 = sor.u32 256, 56
        %3219 = vbcast.lane.b32.xlu0 %v3189, %s3218
        %v3220 = vpop.permute.xlu0 %3219
        %s3222 = sor.u32 256, 64
        %3223 = vbcast.lane.b32.xlu0 %v3189, %s3222
        %v3224 = vpop.permute.xlu0 %3223
        %s3226 = sor.u32 256, 72
        %3227 = vbcast.lane.b32.xlu0 %v3189, %s3226
        %v3228 = vpop.permute.xlu0 %3227
        %s3230 = sor.u32 256, 80
        %3231 = vbcast.lane.b32.xlu0 %v3189, %s3230
        %v3232 = vpop.permute.xlu0 %3231
        %s3234 = sor.u32 256, 88
        %3235 = vbcast.lane.b32.xlu0 %v3189, %s3234
        %v3236 = vpop.permute.xlu0 %3235
        %s3238 = sor.u32 256, 96
        %3239 = vbcast.lane.b32.xlu0 %v3189, %s3238
        %v3240 = vpop.permute.xlu0 %3239
        %s3242 = sor.u32 256, 104
        %3243 = vbcast.lane.b32.xlu0 %v3189, %s3242
        %v3244 = vpop.permute.xlu0 %3243
        %s3246 = sor.u32 256, 112
        %3247 = vbcast.lane.b32.xlu0 %v3189, %s3246
        %v3248 = vpop.permute.xlu0 %3247
        %s3250 = sor.u32 256, 120
        %3251 = vbcast.lane.b32.xlu0 %v3189, %s3250
        %v3252 = vpop.permute.xlu0 %3251
        %v3253 = vlaneseq
        %v3254 = vshrl.u32 %v3253, 7
        %v3255 = vsub.s32 7, %v3254
        %v3256 = vrot.slane %v761, %v3255
        %3258 = vbcast.lane.b32.xlu0 %v3256, 256
        %v3259 = vpop.permute.xlu0 %3258
        %s3261 = sor.u32 256, 8
        %3262 = vbcast.lane.b32.xlu0 %v3256, %s3261
        %v3263 = vpop.permute.xlu0 %3262
        %s3265 = sor.u32 256, 16
        %3266 = vbcast.lane.b32.xlu0 %v3256, %s3265
        %v3267 = vpop.permute.xlu0 %3266
        %s3269 = sor.u32 256, 24
        %3270 = vbcast.lane.b32.xlu0 %v3256, %s3269
        %v3271 = vpop.permute.xlu0 %3270
        %s3273 = sor.u32 256, 32
        %3274 = vbcast.lane.b32.xlu0 %v3256, %s3273
        %v3275 = vpop.permute.xlu0 %3274
        %s3277 = sor.u32 256, 40
        %3278 = vbcast.lane.b32.xlu0 %v3256, %s3277
        %v3279 = vpop.permute.xlu0 %3278
        %s3281 = sor.u32 256, 48
        %3282 = vbcast.lane.b32.xlu0 %v3256, %s3281
        %v3283 = vpop.permute.xlu0 %3282
        %s3285 = sor.u32 256, 56
        %3286 = vbcast.lane.b32.xlu0 %v3256, %s3285
        %v3287 = vpop.permute.xlu0 %3286
        %s3289 = sor.u32 256, 64
        %3290 = vbcast.lane.b32.xlu0 %v3256, %s3289
        %v3291 = vpop.permute.xlu0 %3290
        %s3293 = sor.u32 256, 72
        %3294 = vbcast.lane.b32.xlu0 %v3256, %s3293
        %v3295 = vpop.permute.xlu0 %3294
        %s3297 = sor.u32 256, 80
        %3298 = vbcast.lane.b32.xlu0 %v3256, %s3297
        %v3299 = vpop.permute.xlu0 %3298
        %s3301 = sor.u32 256, 88
        %3302 = vbcast.lane.b32.xlu0 %v3256, %s3301
        %v3303 = vpop.permute.xlu0 %3302
        %s3305 = sor.u32 256, 96
        %3306 = vbcast.lane.b32.xlu0 %v3256, %s3305
        %v3307 = vpop.permute.xlu0 %3306
        %s3309 = sor.u32 256, 104
        %3310 = vbcast.lane.b32.xlu0 %v3256, %s3309
        %v3311 = vpop.permute.xlu0 %3310
        %s3313 = sor.u32 256, 112
        %3314 = vbcast.lane.b32.xlu0 %v3256, %s3313
        %v3315 = vpop.permute.xlu0 %3314
        %s3317 = sor.u32 256, 120
        %3318 = vbcast.lane.b32.xlu0 %v3256, %s3317
        %v3319 = vpop.permute.xlu0 %3318
        %v3322 = vcombine.high %v865, %v865
        %v3324 = vunpack.c.l.s4 1966171168
        %v3325 = vunpack.c.0.s8 %v3324
        %v3326 = vlaneseq
        %v3327 = vshrl.u32 %v3326, 7
        %v3328 = vsub.s32 %v3325, %v3327
        %v3329 = vrot.slane %v865, %v3328
        %v3331 = vunpack.c.l.s4 1966171168
        %v3332 = vunpack.c.0.s8 %v3331
        %v3333 = vlaneseq
        %v3334 = vshrl.u32 %v3333, 7
        %v3335 = vsub.s32 %v3332, %v3334
        %v3336 = vrot.slane %v3322, %v3335
        %v3337 = vcombine.high %v3329, %v3329
        %v3338 = vcombine.high %v3336, %v3336
        %v3340 = vunpack.c.l.s4 1966171168
        %v3341 = vunpack.c.0.s8 %v3340
        %v3342 = vlaneseq
        %v3343 = vshrl.u32 %v3342, 7
        %v3344 = vsub.s32 %v3341, %v3343
        %v3345 = vrot.slane %v3329, %v3344
        %v3347 = vunpack.c.l.s4 1966171168
        %v3348 = vunpack.c.0.s8 %v3347
        %v3349 = vlaneseq
        %v3350 = vshrl.u32 %v3349, 7
        %v3351 = vsub.s32 %v3348, %v3350
        %v3352 = vrot.slane %v3336, %v3351
        %v3354 = vunpack.c.l.s4 1966171168
        %v3355 = vunpack.c.0.s8 %v3354
        %v3356 = vlaneseq
        %v3357 = vshrl.u32 %v3356, 7
        %v3358 = vsub.s32 %v3355, %v3357
        %v3359 = vrot.slane %v3337, %v3358
        %v3361 = vunpack.c.l.s4 1966171168
        %v3362 = vunpack.c.0.s8 %v3361
        %v3363 = vlaneseq
        %v3364 = vshrl.u32 %v3363, 7
        %v3365 = vsub.s32 %v3362, %v3364
        %v3366 = vrot.slane %v3338, %v3365
        %v3367 = vcombine.high %v3345, %v3345
        %v3368 = vcombine.high %v3352, %v3352
        %v3369 = vcombine.high %v3359, %v3359
        %v3370 = vcombine.high %v3366, %v3366
        %v3371 = vcombine.high %v969, %v969
        %v3373 = vunpack.c.l.s4 1966171168
        %v3374 = vunpack.c.0.s8 %v3373
        %v3375 = vlaneseq
        %v3376 = vshrl.u32 %v3375, 7
        %v3377 = vsub.s32 %v3374, %v3376
        %v3378 = vrot.slane %v969, %v3377
        %v3380 = vunpack.c.l.s4 1966171168
        %v3381 = vunpack.c.0.s8 %v3380
        %v3382 = vlaneseq
        %v3383 = vshrl.u32 %v3382, 7
        %v3384 = vsub.s32 %v3381, %v3383
        %v3385 = vrot.slane %v3371, %v3384
        %v3386 = vcombine.high %v3378, %v3378
        %v3387 = vcombine.high %v3385, %v3385
        %v3389 = vunpack.c.l.s4 1966171168
        %v3390 = vunpack.c.0.s8 %v3389
        %v3391 = vlaneseq
        %v3392 = vshrl.u32 %v3391, 7
        %v3393 = vsub.s32 %v3390, %v3392
        %v3394 = vrot.slane %v3378, %v3393
        %v3396 = vunpack.c.l.s4 1966171168
        %v3397 = vunpack.c.0.s8 %v3396
        %v3398 = vlaneseq
        %v3399 = vshrl.u32 %v3398, 7
        %v3400 = vsub.s32 %v3397, %v3399
        %v3401 = vrot.slane %v3385, %v3400
        %v3403 = vunpack.c.l.s4 1966171168
        %v3404 = vunpack.c.0.s8 %v3403
        %v3405 = vlaneseq
        %v3406 = vshrl.u32 %v3405, 7
        %v3407 = vsub.s32 %v3404, %v3406
        %v3408 = vrot.slane %v3386, %v3407
        %v3410 = vunpack.c.l.s4 1966171168
        %v3411 = vunpack.c.0.s8 %v3410
        %v3412 = vlaneseq
        %v3413 = vshrl.u32 %v3412, 7
        %v3414 = vsub.s32 %v3411, %v3413
        %v3415 = vrot.slane %v3387, %v3414
        %v3416 = vcombine.high %v3394, %v3394
        %v3417 = vcombine.high %v3401, %v3401
        %v3418 = vcombine.high %v3408, %v3408
        %v3419 = vcombine.high %v3415, %v3415
        %v3422 = vcombine.high %v1072, %v1072
        %v3424 = vunpack.c.l.s4 1966171168
        %v3425 = vunpack.c.0.s8 %v3424
        %v3426 = vlaneseq
        %v3427 = vshrl.u32 %v3426, 7
        %v3428 = vsub.s32 %v3425, %v3427
        %v3429 = vrot.slane %v1072, %v3428
        %v3431 = vunpack.c.l.s4 1966171168
        %v3432 = vunpack.c.0.s8 %v3431
        %v3433 = vlaneseq
        %v3434 = vshrl.u32 %v3433, 7
        %v3435 = vsub.s32 %v3432, %v3434
        %v3436 = vrot.slane %v3422, %v3435
        %v3437 = vcombine.high %v3429, %v3429
        %v3438 = vcombine.high %v3436, %v3436
        %v3440 = vunpack.c.l.s4 1966171168
        %v3441 = vunpack.c.0.s8 %v3440
        %v3442 = vlaneseq
        %v3443 = vshrl.u32 %v3442, 7
        %v3444 = vsub.s32 %v3441, %v3443
        %v3445 = vrot.slane %v3429, %v3444
        %v3447 = vunpack.c.l.s4 1966171168
        %v3448 = vunpack.c.0.s8 %v3447
        %v3449 = vlaneseq
        %v3450 = vshrl.u32 %v3449, 7
        %v3451 = vsub.s32 %v3448, %v3450
        %v3452 = vrot.slane %v3436, %v3451
        %v3454 = vunpack.c.l.s4 1966171168
        %v3455 = vunpack.c.0.s8 %v3454
        %v3456 = vlaneseq
        %v3457 = vshrl.u32 %v3456, 7
        %v3458 = vsub.s32 %v3455, %v3457
        %v3459 = vrot.slane %v3437, %v3458
        %v3461 = vunpack.c.l.s4 1966171168
        %v3462 = vunpack.c.0.s8 %v3461
        %v3463 = vlaneseq
        %v3464 = vshrl.u32 %v3463, 7
        %v3465 = vsub.s32 %v3462, %v3464
        %v3466 = vrot.slane %v3438, %v3465
        %v3467 = vcombine.high %v3445, %v3445
        %v3468 = vcombine.high %v3452, %v3452
        %v3469 = vcombine.high %v3459, %v3459
        %v3470 = vcombine.high %v3466, %v3466
        %v3471 = vcombine.high %v1175, %v1175
        %v3473 = vunpack.c.l.s4 1966171168
        %v3474 = vunpack.c.0.s8 %v3473
        %v3475 = vlaneseq
        %v3476 = vshrl.u32 %v3475, 7
        %v3477 = vsub.s32 %v3474, %v3476
        %v3478 = vrot.slane %v1175, %v3477
        %v3480 = vunpack.c.l.s4 1966171168
        %v3481 = vunpack.c.0.s8 %v3480
        %v3482 = vlaneseq
        %v3483 = vshrl.u32 %v3482, 7
        %v3484 = vsub.s32 %v3481, %v3483
        %v3485 = vrot.slane %v3471, %v3484
        %v3486 = vcombine.high %v3478, %v3478
        %v3487 = vcombine.high %v3485, %v3485
        %v3489 = vunpack.c.l.s4 1966171168
        %v3490 = vunpack.c.0.s8 %v3489
        %v3491 = vlaneseq
        %v3492 = vshrl.u32 %v3491, 7
        %v3493 = vsub.s32 %v3490, %v3492
        %v3494 = vrot.slane %v3478, %v3493
        %v3496 = vunpack.c.l.s4 1966171168
        %v3497 = vunpack.c.0.s8 %v3496
        %v3498 = vlaneseq
        %v3499 = vshrl.u32 %v3498, 7
        %v3500 = vsub.s32 %v3497, %v3499
        %v3501 = vrot.slane %v3485, %v3500
        %v3503 = vunpack.c.l.s4 1966171168
        %v3504 = vunpack.c.0.s8 %v3503
        %v3505 = vlaneseq
        %v3506 = vshrl.u32 %v3505, 7
        %v3507 = vsub.s32 %v3504, %v3506
        %v3508 = vrot.slane %v3486, %v3507
        %v3510 = vunpack.c.l.s4 1966171168
        %v3511 = vunpack.c.0.s8 %v3510
        %v3512 = vlaneseq
        %v3513 = vshrl.u32 %v3512, 7
        %v3514 = vsub.s32 %v3511, %v3513
        %v3515 = vrot.slane %v3487, %v3514
        %v3516 = vcombine.high %v3494, %v3494
        %v3517 = vcombine.high %v3501, %v3501
        %v3518 = vcombine.high %v3508, %v3508
        %v3519 = vcombine.high %v3515, %v3515
        %v3520 = vlaneseq
        %v3521 = vshrl.u32 %v3520, 7
        %v3522 = vsub.s32 0, %v3521
        %v3523 = vrot.slane %v3445, %v3522
        %v3524 = vlaneseq
        %v3525 = vshrl.u32 %v3524, 7
        %v3526 = vsub.s32 0, %v3525
        %v3527 = vrot.slane %v3459, %v3526
        %v3528 = vlaneseq
        %v3529 = vshrl.u32 %v3528, 7
        %v3530 = vsub.s32 0, %v3529
        %v3531 = vrot.slane %v3467, %v3530
        %v3532 = vlaneseq
        %v3533 = vshrl.u32 %v3532, 7
        %v3534 = vsub.s32 0, %v3533
        %v3535 = vrot.slane %v3469, %v3534
        %v3536 = vlaneseq
        %v3537 = vshrl.u32 %v3536, 7
        %v3538 = vsub.s32 0, %v3537
        %v3539 = vrot.slane %v3452, %v3538
        %v3540 = vlaneseq
        %v3541 = vshrl.u32 %v3540, 7
        %v3542 = vsub.s32 0, %v3541
        %v3543 = vrot.slane %v3466, %v3542
        %v3544 = vlaneseq
        %v3545 = vshrl.u32 %v3544, 7
        %v3546 = vsub.s32 0, %v3545
        %v3547 = vrot.slane %v3468, %v3546
        %v3548 = vlaneseq
        %v3549 = vshrl.u32 %v3548, 7
        %v3550 = vsub.s32 0, %v3549
        %v3551 = vrot.slane %v3470, %v3550
        %v3552 = vlaneseq
        %v3553 = vshrl.u32 %v3552, 7
        %v3554 = vsub.s32 0, %v3553
        %v3555 = vrot.slane %v3494, %v3554
        %v3556 = vlaneseq
        %v3557 = vshrl.u32 %v3556, 7
        %v3558 = vsub.s32 0, %v3557
        %v3559 = vrot.slane %v3508, %v3558
        %v3560 = vlaneseq
        %v3561 = vshrl.u32 %v3560, 7
        %v3562 = vsub.s32 0, %v3561
        %v3563 = vrot.slane %v3516, %v3562
        %v3564 = vlaneseq
        %v3565 = vshrl.u32 %v3564, 7
        %v3566 = vsub.s32 0, %v3565
        %v3567 = vrot.slane %v3518, %v3566
        %v3568 = vlaneseq
        %v3569 = vshrl.u32 %v3568, 7
        %v3570 = vsub.s32 0, %v3569
        %v3571 = vrot.slane %v3501, %v3570
        %v3572 = vlaneseq
        %v3573 = vshrl.u32 %v3572, 7
        %v3574 = vsub.s32 0, %v3573
        %v3575 = vrot.slane %v3515, %v3574
        %v3576 = vlaneseq
        %v3577 = vshrl.u32 %v3576, 7
        %v3578 = vsub.s32 0, %v3577
        %v3579 = vrot.slane %v3517, %v3578
        %v3580 = vlaneseq
        %v3581 = vshrl.u32 %v3580, 7
        %v3582 = vsub.s32 0, %v3581
        %v3583 = vrot.slane %v3519, %v3582
        %v3600 = vmul.f32 %v1182, %v3523
        %v3601 = vmul.f32 %v1186, %v3523
        %v3602 = vmul.f32 %v1190, %v3523
        %v3603 = vmul.f32 %v1194, %v3523
        %v3604 = vmul.f32 %v1198, %v3523
        %v3605 = vmul.f32 %v1202, %v3523
        %v3606 = vmul.f32 %v1206, %v3523
        %v3607 = vmul.f32 %v1210, %v3523
        %v3608 = vmul.f32 %v1214, %v3523
        %v3609 = vmul.f32 %v1218, %v3523
        %v3610 = vmul.f32 %v1222, %v3523
        %v3611 = vmul.f32 %v1226, %v3523
        %v3612 = vmul.f32 %v1230, %v3523
        %v3613 = vmul.f32 %v1234, %v3523
        %v3614 = vmul.f32 %v1238, %v3523
        %v3615 = vmul.f32 %v1242, %v3523
        %v3616 = vmul.f32 %v1249, %v3527
        %v3617 = vmul.f32 %v1253, %v3527
        %v3618 = vmul.f32 %v1257, %v3527
        %v3619 = vmul.f32 %v1261, %v3527
        %v3620 = vmul.f32 %v1265, %v3527
        %v3621 = vmul.f32 %v1269, %v3527
        %v3622 = vmul.f32 %v1273, %v3527
        %v3623 = vmul.f32 %v1277, %v3527
        %v3624 = vmul.f32 %v1281, %v3527
        %v3625 = vmul.f32 %v1285, %v3527
        %v3626 = vmul.f32 %v1289, %v3527
        %v3627 = vmul.f32 %v1293, %v3527
        %v3628 = vmul.f32 %v1297, %v3527
        %v3629 = vmul.f32 %v1301, %v3527
        %v3630 = vmul.f32 %v1305, %v3527
        %v3631 = vmul.f32 %v1309, %v3527
        %v3632 = vmul.f32 %v1316, %v3531
        %v3633 = vmul.f32 %v1320, %v3531
        %v3634 = vmul.f32 %v1324, %v3531
        %v3635 = vmul.f32 %v1328, %v3531
        %v3636 = vmul.f32 %v1332, %v3531
        %v3637 = vmul.f32 %v1336, %v3531
        %v3638 = vmul.f32 %v1340, %v3531
        %v3639 = vmul.f32 %v1344, %v3531
        %v3640 = vmul.f32 %v1348, %v3531
        %v3641 = vmul.f32 %v1352, %v3531
        %v3642 = vmul.f32 %v1356, %v3531
        %v3643 = vmul.f32 %v1360, %v3531
        %v3644 = vmul.f32 %v1364, %v3531
        %v3645 = vmul.f32 %v1368, %v3531
        %v3646 = vmul.f32 %v1372, %v3531
        %v3647 = vmul.f32 %v1376, %v3531
        %v3648 = vmul.f32 %v1383, %v3535
        %v3649 = vmul.f32 %v1387, %v3535
        %v3650 = vmul.f32 %v1391, %v3535
        %v3651 = vmul.f32 %v1395, %v3535
        %v3652 = vmul.f32 %v1399, %v3535
        %v3653 = vmul.f32 %v1403, %v3535
        %v3654 = vmul.f32 %v1407, %v3535
        %v3655 = vmul.f32 %v1411, %v3535
        %v3656 = vmul.f32 %v1415, %v3535
        %v3657 = vmul.f32 %v1419, %v3535
        %v3658 = vmul.f32 %v1423, %v3535
        %v3659 = vmul.f32 %v1427, %v3535
        %v3660 = vmul.f32 %v1431, %v3535
        %v3661 = vmul.f32 %v1435, %v3535
        %v3662 = vmul.f32 %v1439, %v3535
        %v3663 = vmul.f32 %v1443, %v3535
        %v3664 = vmul.f32 %v1450, %v3539
        %v3665 = vmul.f32 %v1454, %v3539
        %v3666 = vmul.f32 %v1458, %v3539
        %v3667 = vmul.f32 %v1462, %v3539
        %v3668 = vmul.f32 %v1466, %v3539
        %v3669 = vmul.f32 %v1470, %v3539
        %v3670 = vmul.f32 %v1474, %v3539
        %v3671 = vmul.f32 %v1478, %v3539
        %v3672 = vmul.f32 %v1482, %v3539
        %v3673 = vmul.f32 %v1486, %v3539
        %v3674 = vmul.f32 %v1490, %v3539
        %v3675 = vmul.f32 %v1494, %v3539
        %v3676 = vmul.f32 %v1498, %v3539
        %v3677 = vmul.f32 %v1502, %v3539
        %v3678 = vmul.f32 %v1506, %v3539
        %v3679 = vmul.f32 %v1510, %v3539
        %v3680 = vmul.f32 %v1517, %v3543
        %v3681 = vmul.f32 %v1521, %v3543
        %v3682 = vmul.f32 %v1525, %v3543
        %v3683 = vmul.f32 %v1529, %v3543
        %v3684 = vmul.f32 %v1533, %v3543
        %v3685 = vmul.f32 %v1537, %v3543
        %v3686 = vmul.f32 %v1541, %v3543
        %v3687 = vmul.f32 %v1545, %v3543
        %v3688 = vmul.f32 %v1549, %v3543
        %v3689 = vmul.f32 %v1553, %v3543
        %v3690 = vmul.f32 %v1557, %v3543
        %v3691 = vmul.f32 %v1561, %v3543
        %v3692 = vmul.f32 %v1565, %v3543
        %v3693 = vmul.f32 %v1569, %v3543
        %v3694 = vmul.f32 %v1573, %v3543
        %v3695 = vmul.f32 %v1577, %v3543
        %v3696 = vmul.f32 %v1584, %v3547
        %v3697 = vmul.f32 %v1588, %v3547
        %v3698 = vmul.f32 %v1592, %v3547
        %v3699 = vmul.f32 %v1596, %v3547
        %v3700 = vmul.f32 %v1600, %v3547
        %v3701 = vmul.f32 %v1604, %v3547
        %v3702 = vmul.f32 %v1608, %v3547
        %v3703 = vmul.f32 %v1612, %v3547
        %v3704 = vmul.f32 %v1616, %v3547
        %v3705 = vmul.f32 %v1620, %v3547
        %v3706 = vmul.f32 %v1624, %v3547
        %v3707 = vmul.f32 %v1628, %v3547
        %v3708 = vmul.f32 %v1632, %v3547
        %v3709 = vmul.f32 %v1636, %v3547
        %v3710 = vmul.f32 %v1640, %v3547
        %v3711 = vmul.f32 %v1644, %v3547
        %v3712 = vmul.f32 %v1651, %v3551
        %v3713 = vmul.f32 %v1655, %v3551
        %v3714 = vmul.f32 %v1659, %v3551
        %v3715 = vmul.f32 %v1663, %v3551
        %v3716 = vmul.f32 %v1667, %v3551
        %v3717 = vmul.f32 %v1671, %v3551
        %v3718 = vmul.f32 %v1675, %v3551
        %v3719 = vmul.f32 %v1679, %v3551
        %v3720 = vmul.f32 %v1683, %v3551
        %v3721 = vmul.f32 %v1687, %v3551
        %v3722 = vmul.f32 %v1691, %v3551
        %v3723 = vmul.f32 %v1695, %v3551
        %v3724 = vmul.f32 %v1699, %v3551
        %v3725 = vmul.f32 %v1703, %v3551
        %v3726 = vmul.f32 %v1707, %v3551
        %v3727 = vmul.f32 %v1711, %v3551
        %v3728 = vmul.f32 %v1718, %v3555
        %v3729 = vmul.f32 %v1722, %v3555
        %v3730 = vmul.f32 %v1726, %v3555
        %v3731 = vmul.f32 %v1730, %v3555
        %v3732 = vmul.f32 %v1734, %v3555
        %v3733 = vmul.f32 %v1738, %v3555
        %v3734 = vmul.f32 %v1742, %v3555
        %v3735 = vmul.f32 %v1746, %v3555
        %v3736 = vmul.f32 %v1750, %v3555
        %v3737 = vmul.f32 %v1754, %v3555
        %v3738 = vmul.f32 %v1758, %v3555
        %v3739 = vmul.f32 %v1762, %v3555
        %v3740 = vmul.f32 %v1766, %v3555
        %v3741 = vmul.f32 %v1770, %v3555
        %v3742 = vmul.f32 %v1774, %v3555
        %v3743 = vmul.f32 %v1778, %v3555
        %v3744 = vmul.f32 %v1785, %v3559
        %v3745 = vmul.f32 %v1789, %v3559
        %v3746 = vmul.f32 %v1793, %v3559
        %v3747 = vmul.f32 %v1797, %v3559
        %v3748 = vmul.f32 %v1801, %v3559
        %v3749 = vmul.f32 %v1805, %v3559
        %v3750 = vmul.f32 %v1809, %v3559
        %v3751 = vmul.f32 %v1813, %v3559
        %v3752 = vmul.f32 %v1817, %v3559
        %v3753 = vmul.f32 %v1821, %v3559
        %v3754 = vmul.f32 %v1825, %v3559
        %v3755 = vmul.f32 %v1829, %v3559
        %v3756 = vmul.f32 %v1833, %v3559
        %v3757 = vmul.f32 %v1837, %v3559
        %v3758 = vmul.f32 %v1841, %v3559
        %v3759 = vmul.f32 %v1845, %v3559
        %v3760 = vmul.f32 %v1852, %v3563
        %v3761 = vmul.f32 %v1856, %v3563
        %v3762 = vmul.f32 %v1860, %v3563
        %v3763 = vmul.f32 %v1864, %v3563
        %v3764 = vmul.f32 %v1868, %v3563
        %v3765 = vmul.f32 %v1872, %v3563
        %v3766 = vmul.f32 %v1876, %v3563
        %v3767 = vmul.f32 %v1880, %v3563
        %v3768 = vmul.f32 %v1884, %v3563
        %v3769 = vmul.f32 %v1888, %v3563
        %v3770 = vmul.f32 %v1892, %v3563
        %v3771 = vmul.f32 %v1896, %v3563
        %v3772 = vmul.f32 %v1900, %v3563
        %v3773 = vmul.f32 %v1904, %v3563
        %v3774 = vmul.f32 %v1908, %v3563
        %v3775 = vmul.f32 %v1912, %v3563
        %v3776 = vmul.f32 %v1919, %v3567
        %v3777 = vmul.f32 %v1923, %v3567
        %v3778 = vmul.f32 %v1927, %v3567
        %v3779 = vmul.f32 %v1931, %v3567
        %v3780 = vmul.f32 %v1935, %v3567
        %v3781 = vmul.f32 %v1939, %v3567
        %v3782 = vmul.f32 %v1943, %v3567
        %v3783 = vmul.f32 %v1947, %v3567
        %v3784 = vmul.f32 %v1951, %v3567
        %v3785 = vmul.f32 %v1955, %v3567
        %v3786 = vmul.f32 %v1959, %v3567
        %v3787 = vmul.f32 %v1963, %v3567
        %v3788 = vmul.f32 %v1967, %v3567
        %v3789 = vmul.f32 %v1971, %v3567
        %v3790 = vmul.f32 %v1975, %v3567
        %v3791 = vmul.f32 %v1979, %v3567
        %v3792 = vmul.f32 %v1986, %v3571
        %v3793 = vmul.f32 %v1990, %v3571
        %v3794 = vmul.f32 %v1994, %v3571
        %v3795 = vmul.f32 %v1998, %v3571
        %v3796 = vmul.f32 %v2002, %v3571
        %v3797 = vmul.f32 %v2006, %v3571
        %v3798 = vmul.f32 %v2010, %v3571
        %v3799 = vmul.f32 %v2014, %v3571
        %v3800 = vmul.f32 %v2018, %v3571
        %v3801 = vmul.f32 %v2022, %v3571
        %v3802 = vmul.f32 %v2026, %v3571
        %v3803 = vmul.f32 %v2030, %v3571
        %v3804 = vmul.f32 %v2034, %v3571
        %v3805 = vmul.f32 %v2038, %v3571
        %v3806 = vmul.f32 %v2042, %v3571
        %v3807 = vmul.f32 %v2046, %v3571
        %v3808 = vmul.f32 %v2053, %v3575
        %v3809 = vmul.f32 %v2057, %v3575
        %v3810 = vmul.f32 %v2061, %v3575
        %v3811 = vmul.f32 %v2065, %v3575
        %v3812 = vmul.f32 %v2069, %v3575
        %v3813 = vmul.f32 %v2073, %v3575
        %v3814 = vmul.f32 %v2077, %v3575
        %v3815 = vmul.f32 %v2081, %v3575
        %v3816 = vmul.f32 %v2085, %v3575
        %v3817 = vmul.f32 %v2089, %v3575
        %v3818 = vmul.f32 %v2093, %v3575
        %v3819 = vmul.f32 %v2097, %v3575
        %v3820 = vmul.f32 %v2101, %v3575
        %v3821 = vmul.f32 %v2105, %v3575
        %v3822 = vmul.f32 %v2109, %v3575
        %v3823 = vmul.f32 %v2113, %v3575
        %v3824 = vmul.f32 %v2120, %v3579
        %v3825 = vmul.f32 %v2124, %v3579
        %v3826 = vmul.f32 %v2128, %v3579
        %v3827 = vmul.f32 %v2132, %v3579
        %v3828 = vmul.f32 %v2136, %v3579
        %v3829 = vmul.f32 %v2140, %v3579
        %v3830 = vmul.f32 %v2144, %v3579
        %v3831 = vmul.f32 %v2148, %v3579
        %v3832 = vmul.f32 %v2152, %v3579
        %v3833 = vmul.f32 %v2156, %v3579
        %v3834 = vmul.f32 %v2160, %v3579
        %v3835 = vmul.f32 %v2164, %v3579
        %v3836 = vmul.f32 %v2168, %v3579
        %v3837 = vmul.f32 %v2172, %v3579
        %v3838 = vmul.f32 %v2176, %v3579
        %v3839 = vmul.f32 %v2180, %v3579
        %v3840 = vmul.f32 %v2187, %v3583
        %v3841 = vmul.f32 %v2191, %v3583
        %v3842 = vmul.f32 %v2195, %v3583
        %v3843 = vmul.f32 %v2199, %v3583
        %v3844 = vmul.f32 %v2203, %v3583
        %v3845 = vmul.f32 %v2207, %v3583
        %v3846 = vmul.f32 %v2211, %v3583
        %v3847 = vmul.f32 %v2215, %v3583
        %v3848 = vmul.f32 %v2219, %v3583
        %v3849 = vmul.f32 %v2223, %v3583
        %v3850 = vmul.f32 %v2227, %v3583
        %v3851 = vmul.f32 %v2231, %v3583
        %v3852 = vmul.f32 %v2235, %v3583
        %v3853 = vmul.f32 %v2239, %v3583
        %v3854 = vmul.f32 %v2243, %v3583
        %v3855 = vmul.f32 %v2247, %v3583
        %v3856 = vlaneseq
        %v3857 = vshrl.u32 %v3856, 7
        %v3858 = vsub.s32 0, %v3857
        %v3859 = vrot.slane %v3345, %v3858
        %v3860 = vlaneseq
        %v3861 = vshrl.u32 %v3860, 7
        %v3862 = vsub.s32 0, %v3861
        %v3863 = vrot.slane %v3359, %v3862
        %v3864 = vlaneseq
        %v3865 = vshrl.u32 %v3864, 7
        %v3866 = vsub.s32 0, %v3865
        %v3867 = vrot.slane %v3367, %v3866
        %v3868 = vlaneseq
        %v3869 = vshrl.u32 %v3868, 7
        %v3870 = vsub.s32 0, %v3869
        %v3871 = vrot.slane %v3369, %v3870
        %v3872 = vlaneseq
        %v3873 = vshrl.u32 %v3872, 7
        %v3874 = vsub.s32 0, %v3873
        %v3875 = vrot.slane %v3352, %v3874
        %v3876 = vlaneseq
        %v3877 = vshrl.u32 %v3876, 7
        %v3878 = vsub.s32 0, %v3877
        %v3879 = vrot.slane %v3366, %v3878
        %v3880 = vlaneseq
        %v3881 = vshrl.u32 %v3880, 7
        %v3882 = vsub.s32 0, %v3881
        %v3883 = vrot.slane %v3368, %v3882
        %v3884 = vlaneseq
        %v3885 = vshrl.u32 %v3884, 7
        %v3886 = vsub.s32 0, %v3885
        %v3887 = vrot.slane %v3370, %v3886
        %v3888 = vlaneseq
        %v3889 = vshrl.u32 %v3888, 7
        %v3890 = vsub.s32 0, %v3889
        %v3891 = vrot.slane %v3394, %v3890
        %v3892 = vlaneseq
        %v3893 = vshrl.u32 %v3892, 7
        %v3894 = vsub.s32 0, %v3893
        %v3895 = vrot.slane %v3408, %v3894
        %v3896 = vlaneseq
        %v3897 = vshrl.u32 %v3896, 7
        %v3898 = vsub.s32 0, %v3897
        %v3899 = vrot.slane %v3416, %v3898
        %v3900 = vlaneseq
        %v3901 = vshrl.u32 %v3900, 7
        %v3902 = vsub.s32 0, %v3901
        %v3903 = vrot.slane %v3418, %v3902
        %v3904 = vlaneseq
        %v3905 = vshrl.u32 %v3904, 7
        %v3906 = vsub.s32 0, %v3905
        %v3907 = vrot.slane %v3401, %v3906
        %v3908 = vlaneseq
        %v3909 = vshrl.u32 %v3908, 7
        %v3910 = vsub.s32 0, %v3909
        %v3911 = vrot.slane %v3415, %v3910
        %v3912 = vlaneseq
        %v3913 = vshrl.u32 %v3912, 7
        %v3914 = vsub.s32 0, %v3913
        %v3915 = vrot.slane %v3417, %v3914
        %v3916 = vlaneseq
        %v3917 = vshrl.u32 %v3916, 7
        %v3918 = vsub.s32 0, %v3917
        %v3919 = vrot.slane %v3419, %v3918
        %v3936 = vmul.f32 %v2254, %v3859
        %v3937 = vmul.f32 %v2258, %v3859
        %v3938 = vmul.f32 %v2262, %v3859
        %v3939 = vmul.f32 %v2266, %v3859
        %v3940 = vmul.f32 %v2270, %v3859
        %v3941 = vmul.f32 %v2274, %v3859
        %v3942 = vmul.f32 %v2278, %v3859
        %v3943 = vmul.f32 %v2282, %v3859
        %v3944 = vmul.f32 %v2286, %v3859
        %v3945 = vmul.f32 %v2290, %v3859
        %v3946 = vmul.f32 %v2294, %v3859
        %v3947 = vmul.f32 %v2298, %v3859
        %v3948 = vmul.f32 %v2302, %v3859
        %v3949 = vmul.f32 %v2306, %v3859
        %v3950 = vmul.f32 %v2310, %v3859
        %v3951 = vmul.f32 %v2314, %v3859
        %v3952 = vmul.f32 %v2321, %v3863
        %v3953 = vmul.f32 %v2325, %v3863
        %v3954 = vmul.f32 %v2329, %v3863
        %v3955 = vmul.f32 %v2333, %v3863
        %v3956 = vmul.f32 %v2337, %v3863
        %v3957 = vmul.f32 %v2341, %v3863
        %v3958 = vmul.f32 %v2345, %v3863
        %v3959 = vmul.f32 %v2349, %v3863
        %v3960 = vmul.f32 %v2353, %v3863
        %v3961 = vmul.f32 %v2357, %v3863
        %v3962 = vmul.f32 %v2361, %v3863
        %v3963 = vmul.f32 %v2365, %v3863
        %v3964 = vmul.f32 %v2369, %v3863
        %v3965 = vmul.f32 %v2373, %v3863
        %v3966 = vmul.f32 %v2377, %v3863
        %v3967 = vmul.f32 %v2381, %v3863
        %v3968 = vmul.f32 %v2388, %v3867
        %v3969 = vmul.f32 %v2392, %v3867
        %v3970 = vmul.f32 %v2396, %v3867
        %v3971 = vmul.f32 %v2400, %v3867
        %v3972 = vmul.f32 %v2404, %v3867
        %v3973 = vmul.f32 %v2408, %v3867
        %v3974 = vmul.f32 %v2412, %v3867
        %v3975 = vmul.f32 %v2416, %v3867
        %v3976 = vmul.f32 %v2420, %v3867
        %v3977 = vmul.f32 %v2424, %v3867
        %v3978 = vmul.f32 %v2428, %v3867
        %v3979 = vmul.f32 %v2432, %v3867
        %v3980 = vmul.f32 %v2436, %v3867
        %v3981 = vmul.f32 %v2440, %v3867
        %v3982 = vmul.f32 %v2444, %v3867
        %v3983 = vmul.f32 %v2448, %v3867
        %v3984 = vmul.f32 %v2455, %v3871
        %v3985 = vmul.f32 %v2459, %v3871
        %v3986 = vmul.f32 %v2463, %v3871
        %v3987 = vmul.f32 %v2467, %v3871
        %v3988 = vmul.f32 %v2471, %v3871
        %v3989 = vmul.f32 %v2475, %v3871
        %v3990 = vmul.f32 %v2479, %v3871
        %v3991 = vmul.f32 %v2483, %v3871
        %v3992 = vmul.f32 %v2487, %v3871
        %v3993 = vmul.f32 %v2491, %v3871
        %v3994 = vmul.f32 %v2495, %v3871
        %v3995 = vmul.f32 %v2499, %v3871
        %v3996 = vmul.f32 %v2503, %v3871
        %v3997 = vmul.f32 %v2507, %v3871
        %v3998 = vmul.f32 %v2511, %v3871
        %v3999 = vmul.f32 %v2515, %v3871
        %v4000 = vmul.f32 %v2522, %v3875
        %v4001 = vmul.f32 %v2526, %v3875
        %v4002 = vmul.f32 %v2530, %v3875
        %v4003 = vmul.f32 %v2534, %v3875
        %v4004 = vmul.f32 %v2538, %v3875
        %v4005 = vmul.f32 %v2542, %v3875
        %v4006 = vmul.f32 %v2546, %v3875
        %v4007 = vmul.f32 %v2550, %v3875
        %v4008 = vmul.f32 %v2554, %v3875
        %v4009 = vmul.f32 %v2558, %v3875
        %v4010 = vmul.f32 %v2562, %v3875
        %v4011 = vmul.f32 %v2566, %v3875
        %v4012 = vmul.f32 %v2570, %v3875
        %v4013 = vmul.f32 %v2574, %v3875
        %v4014 = vmul.f32 %v2578, %v3875
        %v4015 = vmul.f32 %v2582, %v3875
        %v4016 = vmul.f32 %v2589, %v3879
        %v4017 = vmul.f32 %v2593, %v3879
        %v4018 = vmul.f32 %v2597, %v3879
        %v4019 = vmul.f32 %v2601, %v3879
        %v4020 = vmul.f32 %v2605, %v3879
        %v4021 = vmul.f32 %v2609, %v3879
        %v4022 = vmul.f32 %v2613, %v3879
        %v4023 = vmul.f32 %v2617, %v3879
        %v4024 = vmul.f32 %v2621, %v3879
        %v4025 = vmul.f32 %v2625, %v3879
        %v4026 = vmul.f32 %v2629, %v3879
        %v4027 = vmul.f32 %v2633, %v3879
        %v4028 = vmul.f32 %v2637, %v3879
        %v4029 = vmul.f32 %v2641, %v3879
        %v4030 = vmul.f32 %v2645, %v3879
        %v4031 = vmul.f32 %v2649, %v3879
        %v4032 = vmul.f32 %v2656, %v3883
        %v4033 = vmul.f32 %v2660, %v3883
        %v4034 = vmul.f32 %v2664, %v3883
        %v4035 = vmul.f32 %v2668, %v3883
        %v4036 = vmul.f32 %v2672, %v3883
        %v4037 = vmul.f32 %v2676, %v3883
        %v4038 = vmul.f32 %v2680, %v3883
        %v4039 = vmul.f32 %v2684, %v3883
        %v4040 = vmul.f32 %v2688, %v3883
        %v4041 = vmul.f32 %v2692, %v3883
        %v4042 = vmul.f32 %v2696, %v3883
        %v4043 = vmul.f32 %v2700, %v3883
        %v4044 = vmul.f32 %v2704, %v3883
        %v4045 = vmul.f32 %v2708, %v3883
        %v4046 = vmul.f32 %v2712, %v3883
        %v4047 = vmul.f32 %v2716, %v3883
        %v4048 = vmul.f32 %v2723, %v3887
        %v4049 = vmul.f32 %v2727, %v3887
        %v4050 = vmul.f32 %v2731, %v3887
        %v4051 = vmul.f32 %v2735, %v3887
        %v4052 = vmul.f32 %v2739, %v3887
        %v4053 = vmul.f32 %v2743, %v3887
        %v4054 = vmul.f32 %v2747, %v3887
        %v4055 = vmul.f32 %v2751, %v3887
        %v4056 = vmul.f32 %v2755, %v3887
        %v4057 = vmul.f32 %v2759, %v3887
        %v4058 = vmul.f32 %v2763, %v3887
        %v4059 = vmul.f32 %v2767, %v3887
        %v4060 = vmul.f32 %v2771, %v3887
        %v4061 = vmul.f32 %v2775, %v3887
        %v4062 = vmul.f32 %v2779, %v3887
        %v4063 = vmul.f32 %v2783, %v3887
        %v4064 = vmul.f32 %v2790, %v3891
        %v4065 = vmul.f32 %v2794, %v3891
        %v4066 = vmul.f32 %v2798, %v3891
        %v4067 = vmul.f32 %v2802, %v3891
        %v4068 = vmul.f32 %v2806, %v3891
        %v4069 = vmul.f32 %v2810, %v3891
        %v4070 = vmul.f32 %v2814, %v3891
        %v4071 = vmul.f32 %v2818, %v3891
        %v4072 = vmul.f32 %v2822, %v3891
        %v4073 = vmul.f32 %v2826, %v3891
        %v4074 = vmul.f32 %v2830, %v3891
        %v4075 = vmul.f32 %v2834, %v3891
        %v4076 = vmul.f32 %v2838, %v3891
        %v4077 = vmul.f32 %v2842, %v3891
        %v4078 = vmul.f32 %v2846, %v3891
        %v4079 = vmul.f32 %v2850, %v3891
        %v4080 = vmul.f32 %v2857, %v3895
        %v4081 = vmul.f32 %v2861, %v3895
        %v4082 = vmul.f32 %v2865, %v3895
        %v4083 = vmul.f32 %v2869, %v3895
        %v4084 = vmul.f32 %v2873, %v3895
        %v4085 = vmul.f32 %v2877, %v3895
        %v4086 = vmul.f32 %v2881, %v3895
        %v4087 = vmul.f32 %v2885, %v3895
        %v4088 = vmul.f32 %v2889, %v3895
        %v4089 = vmul.f32 %v2893, %v3895
        %v4090 = vmul.f32 %v2897, %v3895
        %v4091 = vmul.f32 %v2901, %v3895
        %v4092 = vmul.f32 %v2905, %v3895
        %v4093 = vmul.f32 %v2909, %v3895
        %v4094 = vmul.f32 %v2913, %v3895
        %v4095 = vmul.f32 %v2917, %v3895
        %v4096 = vmul.f32 %v2924, %v3899
        %v4097 = vmul.f32 %v2928, %v3899
        %v4098 = vmul.f32 %v2932, %v3899
        %v4099 = vmul.f32 %v2936, %v3899
        %v4100 = vmul.f32 %v2940, %v3899
        %v4101 = vmul.f32 %v2944, %v3899
        %v4102 = vmul.f32 %v2948, %v3899
        %v4103 = vmul.f32 %v2952, %v3899
        %v4104 = vmul.f32 %v2956, %v3899
        %v4105 = vmul.f32 %v2960, %v3899
        %v4106 = vmul.f32 %v2964, %v3899
        %v4107 = vmul.f32 %v2968, %v3899
        %v4108 = vmul.f32 %v2972, %v3899
        %v4109 = vmul.f32 %v2976, %v3899
        %v4110 = vmul.f32 %v2980, %v3899
        %v4111 = vmul.f32 %v2984, %v3899
        %v4112 = vmul.f32 %v2991, %v3903
        %v4113 = vmul.f32 %v2995, %v3903
        %v4114 = vmul.f32 %v2999, %v3903
        %v4115 = vmul.f32 %v3003, %v3903
        %v4116 = vmul.f32 %v3007, %v3903
        %v4117 = vmul.f32 %v3011, %v3903
        %v4118 = vmul.f32 %v3015, %v3903
        %v4119 = vmul.f32 %v3019, %v3903
        %v4120 = vmul.f32 %v3023, %v3903
        %v4121 = vmul.f32 %v3027, %v3903
        %v4122 = vmul.f32 %v3031, %v3903
        %v4123 = vmul.f32 %v3035, %v3903
        %v4124 = vmul.f32 %v3039, %v3903
        %v4125 = vmul.f32 %v3043, %v3903
        %v4126 = vmul.f32 %v3047, %v3903
        %v4127 = vmul.f32 %v3051, %v3903
        %v4128 = vmul.f32 %v3058, %v3907
        %v4129 = vmul.f32 %v3062, %v3907
        %v4130 = vmul.f32 %v3066, %v3907
        %v4131 = vmul.f32 %v3070, %v3907
        %v4132 = vmul.f32 %v3074, %v3907
        %v4133 = vmul.f32 %v3078, %v3907
        %v4134 = vmul.f32 %v3082, %v3907
        %v4135 = vmul.f32 %v3086, %v3907
        %v4136 = vmul.f32 %v3090, %v3907
        %v4137 = vmul.f32 %v3094, %v3907
        %v4138 = vmul.f32 %v3098, %v3907
        %v4139 = vmul.f32 %v3102, %v3907
        %v4140 = vmul.f32 %v3106, %v3907
        %v4141 = vmul.f32 %v3110, %v3907
        %v4142 = vmul.f32 %v3114, %v3907
        %v4143 = vmul.f32 %v3118, %v3907
        %v4144 = vmul.f32 %v3125, %v3911
        %v4145 = vmul.f32 %v3129, %v3911
        %v4146 = vmul.f32 %v3133, %v3911
        %v4147 = vmul.f32 %v3137, %v3911
        %v4148 = vmul.f32 %v3141, %v3911
        %v4149 = vmul.f32 %v3145, %v3911
        %v4150 = vmul.f32 %v3149, %v3911
        %v4151 = vmul.f32 %v3153, %v3911
        %v4152 = vmul.f32 %v3157, %v3911
        %v4153 = vmul.f32 %v3161, %v3911
        %v4154 = vmul.f32 %v3165, %v3911
        %v4155 = vmul.f32 %v3169, %v3911
        %v4156 = vmul.f32 %v3173, %v3911
        %v4157 = vmul.f32 %v3177, %v3911
        %v4158 = vmul.f32 %v3181, %v3911
        %v4159 = vmul.f32 %v3185, %v3911
        %v4160 = vmul.f32 %v3192, %v3915
        %v4161 = vmul.f32 %v3196, %v3915
        %v4162 = vmul.f32 %v3200, %v3915
        %v4163 = vmul.f32 %v3204, %v3915
        %v4164 = vmul.f32 %v3208, %v3915
        %v4165 = vmul.f32 %v3212, %v3915
        %v4166 = vmul.f32 %v3216, %v3915
        %v4167 = vmul.f32 %v3220, %v3915
        %v4168 = vmul.f32 %v3224, %v3915
        %v4169 = vmul.f32 %v3228, %v3915
        %v4170 = vmul.f32 %v3232, %v3915
        %v4171 = vmul.f32 %v3236, %v3915
        %v4172 = vmul.f32 %v3240, %v3915
        %v4173 = vmul.f32 %v3244, %v3915
        %v4174 = vmul.f32 %v3248, %v3915
        %v4175 = vmul.f32 %v3252, %v3915
        %v4176 = vmul.f32 %v3259, %v3919
        %v4177 = vmul.f32 %v3263, %v3919
        %v4178 = vmul.f32 %v3267, %v3919
        %v4179 = vmul.f32 %v3271, %v3919
        %v4180 = vmul.f32 %v3275, %v3919
        %v4181 = vmul.f32 %v3279, %v3919
        %v4182 = vmul.f32 %v3283, %v3919
        %v4183 = vmul.f32 %v3287, %v3919
        %v4184 = vmul.f32 %v3291, %v3919
        %v4185 = vmul.f32 %v3295, %v3919
        %v4186 = vmul.f32 %v3299, %v3919
        %v4187 = vmul.f32 %v3303, %v3919
        %v4188 = vmul.f32 %v3307, %v3919
        %v4189 = vmul.f32 %v3311, %v3919
        %v4190 = vmul.f32 %v3315, %v3919
        %v4191 = vmul.f32 %v3319, %v3919
        %v4192 = vsub.f32 %v3600, %v3936
        %v4193 = vsub.f32 %v3601, %v3937
        %v4194 = vsub.f32 %v3602, %v3938
        %v4195 = vsub.f32 %v3603, %v3939
        %v4196 = vsub.f32 %v3604, %v3940
        %v4197 = vsub.f32 %v3605, %v3941
        %v4198 = vsub.f32 %v3606, %v3942
        %v4199 = vsub.f32 %v3607, %v3943
        %v4200 = vsub.f32 %v3608, %v3944
        %v4201 = vsub.f32 %v3609, %v3945
        %v4202 = vsub.f32 %v3610, %v3946
        %v4203 = vsub.f32 %v3611, %v3947
        %v4204 = vsub.f32 %v3612, %v3948
        %v4205 = vsub.f32 %v3613, %v3949
        %v4206 = vsub.f32 %v3614, %v3950
        %v4207 = vsub.f32 %v3615, %v3951
        %v4208 = vsub.f32 %v3616, %v3952
        %v4209 = vsub.f32 %v3617, %v3953
        %v4210 = vsub.f32 %v3618, %v3954
        %v4211 = vsub.f32 %v3619, %v3955
        %v4212 = vsub.f32 %v3620, %v3956
        %v4213 = vsub.f32 %v3621, %v3957
        %v4214 = vsub.f32 %v3622, %v3958
        %v4215 = vsub.f32 %v3623, %v3959
        %v4216 = vsub.f32 %v3624, %v3960
        %v4217 = vsub.f32 %v3625, %v3961
        %v4218 = vsub.f32 %v3626, %v3962
        %v4219 = vsub.f32 %v3627, %v3963
        %v4220 = vsub.f32 %v3628, %v3964
        %v4221 = vsub.f32 %v3629, %v3965
        %v4222 = vsub.f32 %v3630, %v3966
        %v4223 = vsub.f32 %v3631, %v3967
        %v4224 = vsub.f32 %v3632, %v3968
        %v4225 = vsub.f32 %v3633, %v3969
        %v4226 = vsub.f32 %v3634, %v3970
        %v4227 = vsub.f32 %v3635, %v3971
        %v4228 = vsub.f32 %v3636, %v3972
        %v4229 = vsub.f32 %v3637, %v3973
        %v4230 = vsub.f32 %v3638, %v3974
        %v4231 = vsub.f32 %v3639, %v3975
        %v4232 = vsub.f32 %v3640, %v3976
        %v4233 = vsub.f32 %v3641, %v3977
        %v4234 = vsub.f32 %v3642, %v3978
        %v4235 = vsub.f32 %v3643, %v3979
        %v4236 = vsub.f32 %v3644, %v3980
        %v4237 = vsub.f32 %v3645, %v3981
        %v4238 = vsub.f32 %v3646, %v3982
        %v4239 = vsub.f32 %v3647, %v3983
        %v4240 = vsub.f32 %v3648, %v3984
        %v4241 = vsub.f32 %v3649, %v3985
        %v4242 = vsub.f32 %v3650, %v3986
        %v4243 = vsub.f32 %v3651, %v3987
        %v4244 = vsub.f32 %v3652, %v3988
        %v4245 = vsub.f32 %v3653, %v3989
        %v4246 = vsub.f32 %v3654, %v3990
        %v4247 = vsub.f32 %v3655, %v3991
        %v4248 = vsub.f32 %v3656, %v3992
        %v4249 = vsub.f32 %v3657, %v3993
        %v4250 = vsub.f32 %v3658, %v3994
        %v4251 = vsub.f32 %v3659, %v3995
        %v4252 = vsub.f32 %v3660, %v3996
        %v4253 = vsub.f32 %v3661, %v3997
        %v4254 = vsub.f32 %v3662, %v3998
        %v4255 = vsub.f32 %v3663, %v3999
        %v4256 = vsub.f32 %v3664, %v4000
        %v4257 = vsub.f32 %v3665, %v4001
        %v4258 = vsub.f32 %v3666, %v4002
        %v4259 = vsub.f32 %v3667, %v4003
        %v4260 = vsub.f32 %v3668, %v4004
        %v4261 = vsub.f32 %v3669, %v4005
        %v4262 = vsub.f32 %v3670, %v4006
        %v4263 = vsub.f32 %v3671, %v4007
        %v4264 = vsub.f32 %v3672, %v4008
        %v4265 = vsub.f32 %v3673, %v4009
        %v4266 = vsub.f32 %v3674, %v4010
        %v4267 = vsub.f32 %v3675, %v4011
        %v4268 = vsub.f32 %v3676, %v4012
        %v4269 = vsub.f32 %v3677, %v4013
        %v4270 = vsub.f32 %v3678, %v4014
        %v4271 = vsub.f32 %v3679, %v4015
        %v4272 = vsub.f32 %v3680, %v4016
        %v4273 = vsub.f32 %v3681, %v4017
        %v4274 = vsub.f32 %v3682, %v4018
        %v4275 = vsub.f32 %v3683, %v4019
        %v4276 = vsub.f32 %v3684, %v4020
        %v4277 = vsub.f32 %v3685, %v4021
        %v4278 = vsub.f32 %v3686, %v4022
        %v4279 = vsub.f32 %v3687, %v4023
        %v4280 = vsub.f32 %v3688, %v4024
        %v4281 = vsub.f32 %v3689, %v4025
        %v4282 = vsub.f32 %v3690, %v4026
        %v4283 = vsub.f32 %v3691, %v4027
        %v4284 = vsub.f32 %v3692, %v4028
        %v4285 = vsub.f32 %v3693, %v4029
        %v4286 = vsub.f32 %v3694, %v4030
        %v4287 = vsub.f32 %v3695, %v4031
        %v4288 = vsub.f32 %v3696, %v4032
        %v4289 = vsub.f32 %v3697, %v4033
        %v4290 = vsub.f32 %v3698, %v4034
        %v4291 = vsub.f32 %v3699, %v4035
        %v4292 = vsub.f32 %v3700, %v4036
        %v4293 = vsub.f32 %v3701, %v4037
        %v4294 = vsub.f32 %v3702, %v4038
        %v4295 = vsub.f32 %v3703, %v4039
        %v4296 = vsub.f32 %v3704, %v4040
        %v4297 = vsub.f32 %v3705, %v4041
        %v4298 = vsub.f32 %v3706, %v4042
        %v4299 = vsub.f32 %v3707, %v4043
        %v4300 = vsub.f32 %v3708, %v4044
        %v4301 = vsub.f32 %v3709, %v4045
        %v4302 = vsub.f32 %v3710, %v4046
        %v4303 = vsub.f32 %v3711, %v4047
        %v4304 = vsub.f32 %v3712, %v4048
        %v4305 = vsub.f32 %v3713, %v4049
        %v4306 = vsub.f32 %v3714, %v4050
        %v4307 = vsub.f32 %v3715, %v4051
        %v4308 = vsub.f32 %v3716, %v4052
        %v4309 = vsub.f32 %v3717, %v4053
        %v4310 = vsub.f32 %v3718, %v4054
        %v4311 = vsub.f32 %v3719, %v4055
        %v4312 = vsub.f32 %v3720, %v4056
        %v4313 = vsub.f32 %v3721, %v4057
        %v4314 = vsub.f32 %v3722, %v4058
        %v4315 = vsub.f32 %v3723, %v4059
        %v4316 = vsub.f32 %v3724, %v4060
        %v4317 = vsub.f32 %v3725, %v4061
        %v4318 = vsub.f32 %v3726, %v4062
        %v4319 = vsub.f32 %v3727, %v4063
        %v4320 = vsub.f32 %v3728, %v4064
        %v4321 = vsub.f32 %v3729, %v4065
        %v4322 = vsub.f32 %v3730, %v4066
        %v4323 = vsub.f32 %v3731, %v4067
        %v4324 = vsub.f32 %v3732, %v4068
        %v4325 = vsub.f32 %v3733, %v4069
        %v4326 = vsub.f32 %v3734, %v4070
        %v4327 = vsub.f32 %v3735, %v4071
        %v4328 = vsub.f32 %v3736, %v4072
        %v4329 = vsub.f32 %v3737, %v4073
        %v4330 = vsub.f32 %v3738, %v4074
        %v4331 = vsub.f32 %v3739, %v4075
        %v4332 = vsub.f32 %v3740, %v4076
        %v4333 = vsub.f32 %v3741, %v4077
        %v4334 = vsub.f32 %v3742, %v4078
        %v4335 = vsub.f32 %v3743, %v4079
        %v4336 = vsub.f32 %v3744, %v4080
        %v4337 = vsub.f32 %v3745, %v4081
        %v4338 = vsub.f32 %v3746, %v4082
        %v4339 = vsub.f32 %v3747, %v4083
        %v4340 = vsub.f32 %v3748, %v4084
        %v4341 = vsub.f32 %v3749, %v4085
        %v4342 = vsub.f32 %v3750, %v4086
        %v4343 = vsub.f32 %v3751, %v4087
        %v4344 = vsub.f32 %v3752, %v4088
        %v4345 = vsub.f32 %v3753, %v4089
        %v4346 = vsub.f32 %v3754, %v4090
        %v4347 = vsub.f32 %v3755, %v4091
        %v4348 = vsub.f32 %v3756, %v4092
        %v4349 = vsub.f32 %v3757, %v4093
        %v4350 = vsub.f32 %v3758, %v4094
        %v4351 = vsub.f32 %v3759, %v4095
        %v4352 = vsub.f32 %v3760, %v4096
        %v4353 = vsub.f32 %v3761, %v4097
        %v4354 = vsub.f32 %v3762, %v4098
        %v4355 = vsub.f32 %v3763, %v4099
        %v4356 = vsub.f32 %v3764, %v4100
        %v4357 = vsub.f32 %v3765, %v4101
        %v4358 = vsub.f32 %v3766, %v4102
        %v4359 = vsub.f32 %v3767, %v4103
        %v4360 = vsub.f32 %v3768, %v4104
        %v4361 = vsub.f32 %v3769, %v4105
        %v4362 = vsub.f32 %v3770, %v4106
        %v4363 = vsub.f32 %v3771, %v4107
        %v4364 = vsub.f32 %v3772, %v4108
        %v4365 = vsub.f32 %v3773, %v4109
        %v4366 = vsub.f32 %v3774, %v4110
        %v4367 = vsub.f32 %v3775, %v4111
        %v4368 = vsub.f32 %v3776, %v4112
        %v4369 = vsub.f32 %v3777, %v4113
        %v4370 = vsub.f32 %v3778, %v4114
        %v4371 = vsub.f32 %v3779, %v4115
        %v4372 = vsub.f32 %v3780, %v4116
        %v4373 = vsub.f32 %v3781, %v4117
        %v4374 = vsub.f32 %v3782, %v4118
        %v4375 = vsub.f32 %v3783, %v4119
        %v4376 = vsub.f32 %v3784, %v4120
        %v4377 = vsub.f32 %v3785, %v4121
        %v4378 = vsub.f32 %v3786, %v4122
        %v4379 = vsub.f32 %v3787, %v4123
        %v4380 = vsub.f32 %v3788, %v4124
        %v4381 = vsub.f32 %v3789, %v4125
        %v4382 = vsub.f32 %v3790, %v4126
        %v4383 = vsub.f32 %v3791, %v4127
        %v4384 = vsub.f32 %v3792, %v4128
        %v4385 = vsub.f32 %v3793, %v4129
        %v4386 = vsub.f32 %v3794, %v4130
        %v4387 = vsub.f32 %v3795, %v4131
        %v4388 = vsub.f32 %v3796, %v4132
        %v4389 = vsub.f32 %v3797, %v4133
        %v4390 = vsub.f32 %v3798, %v4134
        %v4391 = vsub.f32 %v3799, %v4135
        %v4392 = vsub.f32 %v3800, %v4136
        %v4393 = vsub.f32 %v3801, %v4137
        %v4394 = vsub.f32 %v3802, %v4138
        %v4395 = vsub.f32 %v3803, %v4139
        %v4396 = vsub.f32 %v3804, %v4140
        %v4397 = vsub.f32 %v3805, %v4141
        %v4398 = vsub.f32 %v3806, %v4142
        %v4399 = vsub.f32 %v3807, %v4143
        %v4400 = vsub.f32 %v3808, %v4144
        %v4401 = vsub.f32 %v3809, %v4145
        %v4402 = vsub.f32 %v3810, %v4146
        %v4403 = vsub.f32 %v3811, %v4147
        %v4404 = vsub.f32 %v3812, %v4148
        %v4405 = vsub.f32 %v3813, %v4149
        %v4406 = vsub.f32 %v3814, %v4150
        %v4407 = vsub.f32 %v3815, %v4151
        %v4408 = vsub.f32 %v3816, %v4152
        %v4409 = vsub.f32 %v3817, %v4153
        %v4410 = vsub.f32 %v3818, %v4154
        %v4411 = vsub.f32 %v3819, %v4155
        %v4412 = vsub.f32 %v3820, %v4156
        %v4413 = vsub.f32 %v3821, %v4157
        %v4414 = vsub.f32 %v3822, %v4158
        %v4415 = vsub.f32 %v3823, %v4159
        %v4416 = vsub.f32 %v3824, %v4160
        %v4417 = vsub.f32 %v3825, %v4161
        %v4418 = vsub.f32 %v3826, %v4162
        %v4419 = vsub.f32 %v3827, %v4163
        %v4420 = vsub.f32 %v3828, %v4164
        %v4421 = vsub.f32 %v3829, %v4165
        %v4422 = vsub.f32 %v3830, %v4166
        %v4423 = vsub.f32 %v3831, %v4167
        %v4424 = vsub.f32 %v3832, %v4168
        %v4425 = vsub.f32 %v3833, %v4169
        %v4426 = vsub.f32 %v3834, %v4170
        %v4427 = vsub.f32 %v3835, %v4171
        %v4428 = vsub.f32 %v3836, %v4172
        %v4429 = vsub.f32 %v3837, %v4173
        %v4430 = vsub.f32 %v3838, %v4174
        %v4431 = vsub.f32 %v3839, %v4175
        %v4432 = vsub.f32 %v3840, %v4176
        %v4433 = vsub.f32 %v3841, %v4177
        %v4434 = vsub.f32 %v3842, %v4178
        %v4435 = vsub.f32 %v3843, %v4179
        %v4436 = vsub.f32 %v3844, %v4180
        %v4437 = vsub.f32 %v3845, %v4181
        %v4438 = vsub.f32 %v3846, %v4182
        %v4439 = vsub.f32 %v3847, %v4183
        %v4440 = vsub.f32 %v3848, %v4184
        %v4441 = vsub.f32 %v3849, %v4185
        %v4442 = vsub.f32 %v3850, %v4186
        %v4443 = vsub.f32 %v3851, %v4187
        %v4444 = vsub.f32 %v3852, %v4188
        %v4445 = vsub.f32 %v3853, %v4189
        %v4446 = vsub.f32 %v3854, %v4190
        %v4447 = vsub.f32 %v3855, %v4191
        %4448 = vst [vmem:[%s240] sm:$0xff] %v4192
        %4449 = vst [vmem:[%s240 + $0x8] sm:$0xff] %v4193
        %4450 = vst [vmem:[%s240 + $0x10] sm:$0xff] %v4194
        %4451 = vst [vmem:[%s240 + $0x18] sm:$0xff] %v4195
        %4452 = vst [vmem:[%s240 + $0x20] sm:$0xff] %v4196
        %4453 = vst [vmem:[%s240 + $0x28] sm:$0xff] %v4197
        %4454 = vst [vmem:[%s240 + $0x30] sm:$0xff] %v4198
        %4455 = vst [vmem:[%s240 + $0x38] sm:$0xff] %v4199
        %4456 = vst [vmem:[%s240 + $0x40] sm:$0xff] %v4200
        %4457 = vst [vmem:[%s240 + $0x48] sm:$0xff] %v4201
        %4458 = vst [vmem:[%s240 + $0x50] sm:$0xff] %v4202
        %4459 = vst [vmem:[%s240 + $0x58] sm:$0xff] %v4203
        %4460 = vst [vmem:[%s240 + $0x60] sm:$0xff] %v4204
        %4461 = vst [vmem:[%s240 + $0x68] sm:$0xff] %v4205
        %4462 = vst [vmem:[%s240 + $0x70] sm:$0xff] %v4206
        %4463 = vst [vmem:[%s240 + $0x78] sm:$0xff] %v4207
        %4464 = vst [vmem:[%s240 + $0x80] sm:$0xff] %v4208
        %4465 = vst [vmem:[%s240 + $0x88] sm:$0xff] %v4209
        %4466 = vst [vmem:[%s240 + $0x90] sm:$0xff] %v4210
        %4467 = vst [vmem:[%s240 + $0x98] sm:$0xff] %v4211
        %4468 = vst [vmem:[%s240 + $0xa0] sm:$0xff] %v4212
        %4469 = vst [vmem:[%s240 + $0xa8] sm:$0xff] %v4213
        %4470 = vst [vmem:[%s240 + $0xb0] sm:$0xff] %v4214
        %4471 = vst [vmem:[%s240 + $0xb8] sm:$0xff] %v4215
        %4472 = vst [vmem:[%s240 + $0xc0] sm:$0xff] %v4216
        %4473 = vst [vmem:[%s240 + $0xc8] sm:$0xff] %v4217
        %4474 = vst [vmem:[%s240 + $0xd0] sm:$0xff] %v4218
        %4475 = vst [vmem:[%s240 + $0xd8] sm:$0xff] %v4219
        %4476 = vst [vmem:[%s240 + $0xe0] sm:$0xff] %v4220
        %4477 = vst [vmem:[%s240 + $0xe8] sm:$0xff] %v4221
        %4478 = vst [vmem:[%s240 + $0xf0] sm:$0xff] %v4222
        %4479 = vst [vmem:[%s240 + $0xf8] sm:$0xff] %v4223
        %4480 = vst [vmem:[%s240 + $0x100] sm:$0xff] %v4224
        %4481 = vst [vmem:[%s240 + $0x108] sm:$0xff] %v4225
        %4482 = vst [vmem:[%s240 + $0x110] sm:$0xff] %v4226
        %4483 = vst [vmem:[%s240 + $0x118] sm:$0xff] %v4227
        %4484 = vst [vmem:[%s240 + $0x120] sm:$0xff] %v4228
        %4485 = vst [vmem:[%s240 + $0x128] sm:$0xff] %v4229
        %4486 = vst [vmem:[%s240 + $0x130] sm:$0xff] %v4230
        %4487 = vst [vmem:[%s240 + $0x138] sm:$0xff] %v4231
        %4488 = vst [vmem:[%s240 + $0x140] sm:$0xff] %v4232
        %4489 = vst [vmem:[%s240 + $0x148] sm:$0xff] %v4233
        %4490 = vst [vmem:[%s240 + $0x150] sm:$0xff] %v4234
        %4491 = vst [vmem:[%s240 + $0x158] sm:$0xff] %v4235
        %4492 = vst [vmem:[%s240 + $0x160] sm:$0xff] %v4236
        %4493 = vst [vmem:[%s240 + $0x168] sm:$0xff] %v4237
        %4494 = vst [vmem:[%s240 + $0x170] sm:$0xff] %v4238
        %4495 = vst [vmem:[%s240 + $0x178] sm:$0xff] %v4239
        %4496 = vst [vmem:[%s240 + $0x180] sm:$0xff] %v4240
        %4497 = vst [vmem:[%s240 + $0x188] sm:$0xff] %v4241
        %4498 = vst [vmem:[%s240 + $0x190] sm:$0xff] %v4242
        %4499 = vst [vmem:[%s240 + $0x198] sm:$0xff] %v4243
        %4500 = vst [vmem:[%s240 + $0x1a0] sm:$0xff] %v4244
        %4501 = vst [vmem:[%s240 + $0x1a8] sm:$0xff] %v4245
        %4502 = vst [vmem:[%s240 + $0x1b0] sm:$0xff] %v4246
        %4503 = vst [vmem:[%s240 + $0x1b8] sm:$0xff] %v4247
        %4504 = vst [vmem:[%s240 + $0x1c0] sm:$0xff] %v4248
        %4505 = vst [vmem:[%s240 + $0x1c8] sm:$0xff] %v4249
        %4506 = vst [vmem:[%s240 + $0x1d0] sm:$0xff] %v4250
        %4507 = vst [vmem:[%s240 + $0x1d8] sm:$0xff] %v4251
        %4508 = vst [vmem:[%s240 + $0x1e0] sm:$0xff] %v4252
        %4509 = vst [vmem:[%s240 + $0x1e8] sm:$0xff] %v4253
        %4510 = vst [vmem:[%s240 + $0x1f0] sm:$0xff] %v4254
        %4511 = vst [vmem:[%s240 + $0x1f8] sm:$0xff] %v4255
        %4512 = vst [vmem:[%s240 + $0x200] sm:$0xff] %v4256
        %4513 = vst [vmem:[%s240 + $0x208] sm:$0xff] %v4257
        %4514 = vst [vmem:[%s240 + $0x210] sm:$0xff] %v4258
        %4515 = vst [vmem:[%s240 + $0x218] sm:$0xff] %v4259
        %4516 = vst [vmem:[%s240 + $0x220] sm:$0xff] %v4260
        %4517 = vst [vmem:[%s240 + $0x228] sm:$0xff] %v4261
        %4518 = vst [vmem:[%s240 + $0x230] sm:$0xff] %v4262
        %4519 = vst [vmem:[%s240 + $0x238] sm:$0xff] %v4263
        %4520 = vst [vmem:[%s240 + $0x240] sm:$0xff] %v4264
        %4521 = vst [vmem:[%s240 + $0x248] sm:$0xff] %v4265
        %4522 = vst [vmem:[%s240 + $0x250] sm:$0xff] %v4266
        %4523 = vst [vmem:[%s240 + $0x258] sm:$0xff] %v4267
        %4524 = vst [vmem:[%s240 + $0x260] sm:$0xff] %v4268
        %4525 = vst [vmem:[%s240 + $0x268] sm:$0xff] %v4269
        %4526 = vst [vmem:[%s240 + $0x270] sm:$0xff] %v4270
        %4527 = vst [vmem:[%s240 + $0x278] sm:$0xff] %v4271
        %4528 = vst [vmem:[%s240 + $0x280] sm:$0xff] %v4272
        %4529 = vst [vmem:[%s240 + $0x288] sm:$0xff] %v4273
        %4530 = vst [vmem:[%s240 + $0x290] sm:$0xff] %v4274
        %4531 = vst [vmem:[%s240 + $0x298] sm:$0xff] %v4275
        %4532 = vst [vmem:[%s240 + $0x2a0] sm:$0xff] %v4276
        %4533 = vst [vmem:[%s240 + $0x2a8] sm:$0xff] %v4277
        %4534 = vst [vmem:[%s240 + $0x2b0] sm:$0xff] %v4278
        %4535 = vst [vmem:[%s240 + $0x2b8] sm:$0xff] %v4279
        %4536 = vst [vmem:[%s240 + $0x2c0] sm:$0xff] %v4280
        %4537 = vst [vmem:[%s240 + $0x2c8] sm:$0xff] %v4281
        %4538 = vst [vmem:[%s240 + $0x2d0] sm:$0xff] %v4282
        %4539 = vst [vmem:[%s240 + $0x2d8] sm:$0xff] %v4283
        %4540 = vst [vmem:[%s240 + $0x2e0] sm:$0xff] %v4284
        %4541 = vst [vmem:[%s240 + $0x2e8] sm:$0xff] %v4285
        %4542 = vst [vmem:[%s240 + $0x2f0] sm:$0xff] %v4286
        %4543 = vst [vmem:[%s240 + $0x2f8] sm:$0xff] %v4287
        %4544 = vst [vmem:[%s240 + $0x300] sm:$0xff] %v4288
        %4545 = vst [vmem:[%s240 + $0x308] sm:$0xff] %v4289
        %4546 = vst [vmem:[%s240 + $0x310] sm:$0xff] %v4290
        %4547 = vst [vmem:[%s240 + $0x318] sm:$0xff] %v4291
        %4548 = vst [vmem:[%s240 + $0x320] sm:$0xff] %v4292
        %4549 = vst [vmem:[%s240 + $0x328] sm:$0xff] %v4293
        %4550 = vst [vmem:[%s240 + $0x330] sm:$0xff] %v4294
        %4551 = vst [vmem:[%s240 + $0x338] sm:$0xff] %v4295
        %4552 = vst [vmem:[%s240 + $0x340] sm:$0xff] %v4296
        %4553 = vst [vmem:[%s240 + $0x348] sm:$0xff] %v4297
        %4554 = vst [vmem:[%s240 + $0x350] sm:$0xff] %v4298
        %4555 = vst [vmem:[%s240 + $0x358] sm:$0xff] %v4299
        %4556 = vst [vmem:[%s240 + $0x360] sm:$0xff] %v4300
        %4557 = vst [vmem:[%s240 + $0x368] sm:$0xff] %v4301
        %4558 = vst [vmem:[%s240 + $0x370] sm:$0xff] %v4302
        %4559 = vst [vmem:[%s240 + $0x378] sm:$0xff] %v4303
        %4560 = vst [vmem:[%s240 + $0x380] sm:$0xff] %v4304
        %4561 = vst [vmem:[%s240 + $0x388] sm:$0xff] %v4305
        %4562 = vst [vmem:[%s240 + $0x390] sm:$0xff] %v4306
        %4563 = vst [vmem:[%s240 + $0x398] sm:$0xff] %v4307
        %4564 = vst [vmem:[%s240 + $0x3a0] sm:$0xff] %v4308
        %4565 = vst [vmem:[%s240 + $0x3a8] sm:$0xff] %v4309
        %4566 = vst [vmem:[%s240 + $0x3b0] sm:$0xff] %v4310
        %4567 = vst [vmem:[%s240 + $0x3b8] sm:$0xff] %v4311
        %4568 = vst [vmem:[%s240 + $0x3c0] sm:$0xff] %v4312
        %4569 = vst [vmem:[%s240 + $0x3c8] sm:$0xff] %v4313
        %4570 = vst [vmem:[%s240 + $0x3d0] sm:$0xff] %v4314
        %4571 = vst [vmem:[%s240 + $0x3d8] sm:$0xff] %v4315
        %4572 = vst [vmem:[%s240 + $0x3e0] sm:$0xff] %v4316
        %4573 = vst [vmem:[%s240 + $0x3e8] sm:$0xff] %v4317
        %4574 = vst [vmem:[%s240 + $0x3f0] sm:$0xff] %v4318
        %4575 = vst [vmem:[%s240 + $0x3f8] sm:$0xff] %v4319
        %4576 = vst [vmem:[%s240 + $0x400] sm:$0xff] %v4320
        %4577 = vst [vmem:[%s240 + $0x408] sm:$0xff] %v4321
        %4578 = vst [vmem:[%s240 + $0x410] sm:$0xff] %v4322
        %4579 = vst [vmem:[%s240 + $0x418] sm:$0xff] %v4323
        %4580 = vst [vmem:[%s240 + $0x420] sm:$0xff] %v4324
        %4581 = vst [vmem:[%s240 + $0x428] sm:$0xff] %v4325
        %4582 = vst [vmem:[%s240 + $0x430] sm:$0xff] %v4326
        %4583 = vst [vmem:[%s240 + $0x438] sm:$0xff] %v4327
        %4584 = vst [vmem:[%s240 + $0x440] sm:$0xff] %v4328
        %4585 = vst [vmem:[%s240 + $0x448] sm:$0xff] %v4329
        %4586 = vst [vmem:[%s240 + $0x450] sm:$0xff] %v4330
        %4587 = vst [vmem:[%s240 + $0x458] sm:$0xff] %v4331
        %4588 = vst [vmem:[%s240 + $0x460] sm:$0xff] %v4332
        %4589 = vst [vmem:[%s240 + $0x468] sm:$0xff] %v4333
        %4590 = vst [vmem:[%s240 + $0x470] sm:$0xff] %v4334
        %4591 = vst [vmem:[%s240 + $0x478] sm:$0xff] %v4335
        %4592 = vst [vmem:[%s240 + $0x480] sm:$0xff] %v4336
        %4593 = vst [vmem:[%s240 + $0x488] sm:$0xff] %v4337
        %4594 = vst [vmem:[%s240 + $0x490] sm:$0xff] %v4338
        %4595 = vst [vmem:[%s240 + $0x498] sm:$0xff] %v4339
        %4596 = vst [vmem:[%s240 + $0x4a0] sm:$0xff] %v4340
        %4597 = vst [vmem:[%s240 + $0x4a8] sm:$0xff] %v4341
        %4598 = vst [vmem:[%s240 + $0x4b0] sm:$0xff] %v4342
        %4599 = vst [vmem:[%s240 + $0x4b8] sm:$0xff] %v4343
        %4600 = vst [vmem:[%s240 + $0x4c0] sm:$0xff] %v4344
        %4601 = vst [vmem:[%s240 + $0x4c8] sm:$0xff] %v4345
        %4602 = vst [vmem:[%s240 + $0x4d0] sm:$0xff] %v4346
        %4603 = vst [vmem:[%s240 + $0x4d8] sm:$0xff] %v4347
        %4604 = vst [vmem:[%s240 + $0x4e0] sm:$0xff] %v4348
        %4605 = vst [vmem:[%s240 + $0x4e8] sm:$0xff] %v4349
        %4606 = vst [vmem:[%s240 + $0x4f0] sm:$0xff] %v4350
        %4607 = vst [vmem:[%s240 + $0x4f8] sm:$0xff] %v4351
        %4608 = vst [vmem:[%s240 + $0x500] sm:$0xff] %v4352
        %4609 = vst [vmem:[%s240 + $0x508] sm:$0xff] %v4353
        %4610 = vst [vmem:[%s240 + $0x510] sm:$0xff] %v4354
        %4611 = vst [vmem:[%s240 + $0x518] sm:$0xff] %v4355
        %4612 = vst [vmem:[%s240 + $0x520] sm:$0xff] %v4356
        %4613 = vst [vmem:[%s240 + $0x528] sm:$0xff] %v4357
        %4614 = vst [vmem:[%s240 + $0x530] sm:$0xff] %v4358
        %4615 = vst [vmem:[%s240 + $0x538] sm:$0xff] %v4359
        %4616 = vst [vmem:[%s240 + $0x540] sm:$0xff] %v4360
        %4617 = vst [vmem:[%s240 + $0x548] sm:$0xff] %v4361
        %4618 = vst [vmem:[%s240 + $0x550] sm:$0xff] %v4362
        %4619 = vst [vmem:[%s240 + $0x558] sm:$0xff] %v4363
        %4620 = vst [vmem:[%s240 + $0x560] sm:$0xff] %v4364
        %4621 = vst [vmem:[%s240 + $0x568] sm:$0xff] %v4365
        %4622 = vst [vmem:[%s240 + $0x570] sm:$0xff] %v4366
        %4623 = vst [vmem:[%s240 + $0x578] sm:$0xff] %v4367
        %4624 = vst [vmem:[%s240 + $0x580] sm:$0xff] %v4368
        %4625 = vst [vmem:[%s240 + $0x588] sm:$0xff] %v4369
        %4626 = vst [vmem:[%s240 + $0x590] sm:$0xff] %v4370
        %4627 = vst [vmem:[%s240 + $0x598] sm:$0xff] %v4371
        %4628 = vst [vmem:[%s240 + $0x5a0] sm:$0xff] %v4372
        %4629 = vst [vmem:[%s240 + $0x5a8] sm:$0xff] %v4373
        %4630 = vst [vmem:[%s240 + $0x5b0] sm:$0xff] %v4374
        %4631 = vst [vmem:[%s240 + $0x5b8] sm:$0xff] %v4375
        %4632 = vst [vmem:[%s240 + $0x5c0] sm:$0xff] %v4376
        %4633 = vst [vmem:[%s240 + $0x5c8] sm:$0xff] %v4377
        %4634 = vst [vmem:[%s240 + $0x5d0] sm:$0xff] %v4378
        %4635 = vst [vmem:[%s240 + $0x5d8] sm:$0xff] %v4379
        %4636 = vst [vmem:[%s240 + $0x5e0] sm:$0xff] %v4380
        %4637 = vst [vmem:[%s240 + $0x5e8] sm:$0xff] %v4381
        %4638 = vst [vmem:[%s240 + $0x5f0] sm:$0xff] %v4382
        %4639 = vst [vmem:[%s240 + $0x5f8] sm:$0xff] %v4383
        %4640 = vst [vmem:[%s240 + $0x600] sm:$0xff] %v4384
        %4641 = vst [vmem:[%s240 + $0x608] sm:$0xff] %v4385
        %4642 = vst [vmem:[%s240 + $0x610] sm:$0xff] %v4386
        %4643 = vst [vmem:[%s240 + $0x618] sm:$0xff] %v4387
        %4644 = vst [vmem:[%s240 + $0x620] sm:$0xff] %v4388
        %4645 = vst [vmem:[%s240 + $0x628] sm:$0xff] %v4389
        %4646 = vst [vmem:[%s240 + $0x630] sm:$0xff] %v4390
        %4647 = vst [vmem:[%s240 + $0x638] sm:$0xff] %v4391
        %4648 = vst [vmem:[%s240 + $0x640] sm:$0xff] %v4392
        %4649 = vst [vmem:[%s240 + $0x648] sm:$0xff] %v4393
        %4650 = vst [vmem:[%s240 + $0x650] sm:$0xff] %v4394
        %4651 = vst [vmem:[%s240 + $0x658] sm:$0xff] %v4395
        %4652 = vst [vmem:[%s240 + $0x660] sm:$0xff] %v4396
        %4653 = vst [vmem:[%s240 + $0x668] sm:$0xff] %v4397
        %4654 = vst [vmem:[%s240 + $0x670] sm:$0xff] %v4398
        %4655 = vst [vmem:[%s240 + $0x678] sm:$0xff] %v4399
        %4656 = vst [vmem:[%s240 + $0x680] sm:$0xff] %v4400
        %4657 = vst [vmem:[%s240 + $0x688] sm:$0xff] %v4401
        %4658 = vst [vmem:[%s240 + $0x690] sm:$0xff] %v4402
        %4659 = vst [vmem:[%s240 + $0x698] sm:$0xff] %v4403
        %4660 = vst [vmem:[%s240 + $0x6a0] sm:$0xff] %v4404
        %4661 = vst [vmem:[%s240 + $0x6a8] sm:$0xff] %v4405
        %4662 = vst [vmem:[%s240 + $0x6b0] sm:$0xff] %v4406
        %4663 = vst [vmem:[%s240 + $0x6b8] sm:$0xff] %v4407
        %4664 = vst [vmem:[%s240 + $0x6c0] sm:$0xff] %v4408
        %4665 = vst [vmem:[%s240 + $0x6c8] sm:$0xff] %v4409
        %4666 = vst [vmem:[%s240 + $0x6d0] sm:$0xff] %v4410
        %4667 = vst [vmem:[%s240 + $0x6d8] sm:$0xff] %v4411
        %4668 = vst [vmem:[%s240 + $0x6e0] sm:$0xff] %v4412
        %4669 = vst [vmem:[%s240 + $0x6e8] sm:$0xff] %v4413
        %4670 = vst [vmem:[%s240 + $0x6f0] sm:$0xff] %v4414
        %4671 = vst [vmem:[%s240 + $0x6f8] sm:$0xff] %v4415
        %4672 = vst [vmem:[%s240 + $0x700] sm:$0xff] %v4416
        %4673 = vst [vmem:[%s240 + $0x708] sm:$0xff] %v4417
        %4674 = vst [vmem:[%s240 + $0x710] sm:$0xff] %v4418
        %4675 = vst [vmem:[%s240 + $0x718] sm:$0xff] %v4419
        %4676 = vst [vmem:[%s240 + $0x720] sm:$0xff] %v4420
        %4677 = vst [vmem:[%s240 + $0x728] sm:$0xff] %v4421
        %4678 = vst [vmem:[%s240 + $0x730] sm:$0xff] %v4422
        %4679 = vst [vmem:[%s240 + $0x738] sm:$0xff] %v4423
        %4680 = vst [vmem:[%s240 + $0x740] sm:$0xff] %v4424
        %4681 = vst [vmem:[%s240 + $0x748] sm:$0xff] %v4425
        %4682 = vst [vmem:[%s240 + $0x750] sm:$0xff] %v4426
        %4683 = vst [vmem:[%s240 + $0x758] sm:$0xff] %v4427
        %4684 = vst [vmem:[%s240 + $0x760] sm:$0xff] %v4428
        %4685 = vst [vmem:[%s240 + $0x768] sm:$0xff] %v4429
        %4686 = vst [vmem:[%s240 + $0x770] sm:$0xff] %v4430
        %4687 = vst [vmem:[%s240 + $0x778] sm:$0xff] %v4431
        %4688 = vst [vmem:[%s240 + $0x780] sm:$0xff] %v4432
        %4689 = vst [vmem:[%s240 + $0x788] sm:$0xff] %v4433
        %4690 = vst [vmem:[%s240 + $0x790] sm:$0xff] %v4434
        %4691 = vst [vmem:[%s240 + $0x798] sm:$0xff] %v4435
        %4692 = vst [vmem:[%s240 + $0x7a0] sm:$0xff] %v4436
        %4693 = vst [vmem:[%s240 + $0x7a8] sm:$0xff] %v4437
        %4694 = vst [vmem:[%s240 + $0x7b0] sm:$0xff] %v4438
        %4695 = vst [vmem:[%s240 + $0x7b8] sm:$0xff] %v4439
        %4696 = vst [vmem:[%s240 + $0x7c0] sm:$0xff] %v4440
        %4697 = vst [vmem:[%s240 + $0x7c8] sm:$0xff] %v4441
        %4698 = vst [vmem:[%s240 + $0x7d0] sm:$0xff] %v4442
        %4699 = vst [vmem:[%s240 + $0x7d8] sm:$0xff] %v4443
        %4700 = vst [vmem:[%s240 + $0x7e0] sm:$0xff] %v4444
        %4701 = vst [vmem:[%s240 + $0x7e8] sm:$0xff] %v4445
        %4702 = vst [vmem:[%s240 + $0x7f0] sm:$0xff] %v4446
        %4703 = vst [vmem:[%s240 + $0x7f8] sm:$0xff] %v4447
        %v4704 = vmul.f32 %v2254, %v3523
        %v4705 = vmul.f32 %v2258, %v3523
        %v4706 = vmul.f32 %v2262, %v3523
        %v4707 = vmul.f32 %v2266, %v3523
        %v4708 = vmul.f32 %v2270, %v3523
        %v4709 = vmul.f32 %v2274, %v3523
        %v4710 = vmul.f32 %v2278, %v3523
        %v4711 = vmul.f32 %v2282, %v3523
        %v4712 = vmul.f32 %v2286, %v3523
        %v4713 = vmul.f32 %v2290, %v3523
        %v4714 = vmul.f32 %v2294, %v3523
        %v4715 = vmul.f32 %v2298, %v3523
        %v4716 = vmul.f32 %v2302, %v3523
        %v4717 = vmul.f32 %v2306, %v3523
        %v4718 = vmul.f32 %v2310, %v3523
        %v4719 = vmul.f32 %v2314, %v3523
        %v4720 = vmul.f32 %v2321, %v3527
        %v4721 = vmul.f32 %v2325, %v3527
        %v4722 = vmul.f32 %v2329, %v3527
        %v4723 = vmul.f32 %v2333, %v3527
        %v4724 = vmul.f32 %v2337, %v3527
        %v4725 = vmul.f32 %v2341, %v3527
        %v4726 = vmul.f32 %v2345, %v3527
        %v4727 = vmul.f32 %v2349, %v3527
        %v4728 = vmul.f32 %v2353, %v3527
        %v4729 = vmul.f32 %v2357, %v3527
        %v4730 = vmul.f32 %v2361, %v3527
        %v4731 = vmul.f32 %v2365, %v3527
        %v4732 = vmul.f32 %v2369, %v3527
        %v4733 = vmul.f32 %v2373, %v3527
        %v4734 = vmul.f32 %v2377, %v3527
        %v4735 = vmul.f32 %v2381, %v3527
        %v4736 = vmul.f32 %v2388, %v3531
        %v4737 = vmul.f32 %v2392, %v3531
        %v4738 = vmul.f32 %v2396, %v3531
        %v4739 = vmul.f32 %v2400, %v3531
        %v4740 = vmul.f32 %v2404, %v3531
        %v4741 = vmul.f32 %v2408, %v3531
        %v4742 = vmul.f32 %v2412, %v3531
        %v4743 = vmul.f32 %v2416, %v3531
        %v4744 = vmul.f32 %v2420, %v3531
        %v4745 = vmul.f32 %v2424, %v3531
        %v4746 = vmul.f32 %v2428, %v3531
        %v4747 = vmul.f32 %v2432, %v3531
        %v4748 = vmul.f32 %v2436, %v3531
        %v4749 = vmul.f32 %v2440, %v3531
        %v4750 = vmul.f32 %v2444, %v3531
        %v4751 = vmul.f32 %v2448, %v3531
        %v4752 = vmul.f32 %v2455, %v3535
        %v4753 = vmul.f32 %v2459, %v3535
        %v4754 = vmul.f32 %v2463, %v3535
        %v4755 = vmul.f32 %v2467, %v3535
        %v4756 = vmul.f32 %v2471, %v3535
        %v4757 = vmul.f32 %v2475, %v3535
        %v4758 = vmul.f32 %v2479, %v3535
        %v4759 = vmul.f32 %v2483, %v3535
        %v4760 = vmul.f32 %v2487, %v3535
        %v4761 = vmul.f32 %v2491, %v3535
        %v4762 = vmul.f32 %v2495, %v3535
        %v4763 = vmul.f32 %v2499, %v3535
        %v4764 = vmul.f32 %v2503, %v3535
        %v4765 = vmul.f32 %v2507, %v3535
        %v4766 = vmul.f32 %v2511, %v3535
        %v4767 = vmul.f32 %v2515, %v3535
        %v4768 = vmul.f32 %v2522, %v3539
        %v4769 = vmul.f32 %v2526, %v3539
        %v4770 = vmul.f32 %v2530, %v3539
        %v4771 = vmul.f32 %v2534, %v3539
        %v4772 = vmul.f32 %v2538, %v3539
        %v4773 = vmul.f32 %v2542, %v3539
        %v4774 = vmul.f32 %v2546, %v3539
        %v4775 = vmul.f32 %v2550, %v3539
        %v4776 = vmul.f32 %v2554, %v3539
        %v4777 = vmul.f32 %v2558, %v3539
        %v4778 = vmul.f32 %v2562, %v3539
        %v4779 = vmul.f32 %v2566, %v3539
        %v4780 = vmul.f32 %v2570, %v3539
        %v4781 = vmul.f32 %v2574, %v3539
        %v4782 = vmul.f32 %v2578, %v3539
        %v4783 = vmul.f32 %v2582, %v3539
        %v4784 = vmul.f32 %v2589, %v3543
        %v4785 = vmul.f32 %v2593, %v3543
        %v4786 = vmul.f32 %v2597, %v3543
        %v4787 = vmul.f32 %v2601, %v3543
        %v4788 = vmul.f32 %v2605, %v3543
        %v4789 = vmul.f32 %v2609, %v3543
        %v4790 = vmul.f32 %v2613, %v3543
        %v4791 = vmul.f32 %v2617, %v3543
        %v4792 = vmul.f32 %v2621, %v3543
        %v4793 = vmul.f32 %v2625, %v3543
        %v4794 = vmul.f32 %v2629, %v3543
        %v4795 = vmul.f32 %v2633, %v3543
        %v4796 = vmul.f32 %v2637, %v3543
        %v4797 = vmul.f32 %v2641, %v3543
        %v4798 = vmul.f32 %v2645, %v3543
        %v4799 = vmul.f32 %v2649, %v3543
        %v4800 = vmul.f32 %v2656, %v3547
        %v4801 = vmul.f32 %v2660, %v3547
        %v4802 = vmul.f32 %v2664, %v3547
        %v4803 = vmul.f32 %v2668, %v3547
        %v4804 = vmul.f32 %v2672, %v3547
        %v4805 = vmul.f32 %v2676, %v3547
        %v4806 = vmul.f32 %v2680, %v3547
        %v4807 = vmul.f32 %v2684, %v3547
        %v4808 = vmul.f32 %v2688, %v3547
        %v4809 = vmul.f32 %v2692, %v3547
        %v4810 = vmul.f32 %v2696, %v3547
        %v4811 = vmul.f32 %v2700, %v3547
        %v4812 = vmul.f32 %v2704, %v3547
        %v4813 = vmul.f32 %v2708, %v3547
        %v4814 = vmul.f32 %v2712, %v3547
        %v4815 = vmul.f32 %v2716, %v3547
        %v4816 = vmul.f32 %v2723, %v3551
        %v4817 = vmul.f32 %v2727, %v3551
        %v4818 = vmul.f32 %v2731, %v3551
        %v4819 = vmul.f32 %v2735, %v3551
        %v4820 = vmul.f32 %v2739, %v3551
        %v4821 = vmul.f32 %v2743, %v3551
        %v4822 = vmul.f32 %v2747, %v3551
        %v4823 = vmul.f32 %v2751, %v3551
        %v4824 = vmul.f32 %v2755, %v3551
        %v4825 = vmul.f32 %v2759, %v3551
        %v4826 = vmul.f32 %v2763, %v3551
        %v4827 = vmul.f32 %v2767, %v3551
        %v4828 = vmul.f32 %v2771, %v3551
        %v4829 = vmul.f32 %v2775, %v3551
        %v4830 = vmul.f32 %v2779, %v3551
        %v4831 = vmul.f32 %v2783, %v3551
        %v4832 = vmul.f32 %v2790, %v3555
        %v4833 = vmul.f32 %v2794, %v3555
        %v4834 = vmul.f32 %v2798, %v3555
        %v4835 = vmul.f32 %v2802, %v3555
        %v4836 = vmul.f32 %v2806, %v3555
        %v4837 = vmul.f32 %v2810, %v3555
        %v4838 = vmul.f32 %v2814, %v3555
        %v4839 = vmul.f32 %v2818, %v3555
        %v4840 = vmul.f32 %v2822, %v3555
        %v4841 = vmul.f32 %v2826, %v3555
        %v4842 = vmul.f32 %v2830, %v3555
        %v4843 = vmul.f32 %v2834, %v3555
        %v4844 = vmul.f32 %v2838, %v3555
        %v4845 = vmul.f32 %v2842, %v3555
        %v4846 = vmul.f32 %v2846, %v3555
        %v4847 = vmul.f32 %v2850, %v3555
        %v4848 = vmul.f32 %v2857, %v3559
        %v4849 = vmul.f32 %v2861, %v3559
        %v4850 = vmul.f32 %v2865, %v3559
        %v4851 = vmul.f32 %v2869, %v3559
        %v4852 = vmul.f32 %v2873, %v3559
        %v4853 = vmul.f32 %v2877, %v3559
        %v4854 = vmul.f32 %v2881, %v3559
        %v4855 = vmul.f32 %v2885, %v3559
        %v4856 = vmul.f32 %v2889, %v3559
        %v4857 = vmul.f32 %v2893, %v3559
        %v4858 = vmul.f32 %v2897, %v3559
        %v4859 = vmul.f32 %v2901, %v3559
        %v4860 = vmul.f32 %v2905, %v3559
        %v4861 = vmul.f32 %v2909, %v3559
        %v4862 = vmul.f32 %v2913, %v3559
        %v4863 = vmul.f32 %v2917, %v3559
        %v4864 = vmul.f32 %v2924, %v3563
        %v4865 = vmul.f32 %v2928, %v3563
        %v4866 = vmul.f32 %v2932, %v3563
        %v4867 = vmul.f32 %v2936, %v3563
        %v4868 = vmul.f32 %v2940, %v3563
        %v4869 = vmul.f32 %v2944, %v3563
        %v4870 = vmul.f32 %v2948, %v3563
        %v4871 = vmul.f32 %v2952, %v3563
        %v4872 = vmul.f32 %v2956, %v3563
        %v4873 = vmul.f32 %v2960, %v3563
        %v4874 = vmul.f32 %v2964, %v3563
        %v4875 = vmul.f32 %v2968, %v3563
        %v4876 = vmul.f32 %v2972, %v3563
        %v4877 = vmul.f32 %v2976, %v3563
        %v4878 = vmul.f32 %v2980, %v3563
        %v4879 = vmul.f32 %v2984, %v3563
        %v4880 = vmul.f32 %v2991, %v3567
        %v4881 = vmul.f32 %v2995, %v3567
        %v4882 = vmul.f32 %v2999, %v3567
        %v4883 = vmul.f32 %v3003, %v3567
        %v4884 = vmul.f32 %v3007, %v3567
        %v4885 = vmul.f32 %v3011, %v3567
        %v4886 = vmul.f32 %v3015, %v3567
        %v4887 = vmul.f32 %v3019, %v3567
        %v4888 = vmul.f32 %v3023, %v3567
        %v4889 = vmul.f32 %v3027, %v3567
        %v4890 = vmul.f32 %v3031, %v3567
        %v4891 = vmul.f32 %v3035, %v3567
        %v4892 = vmul.f32 %v3039, %v3567
        %v4893 = vmul.f32 %v3043, %v3567
        %v4894 = vmul.f32 %v3047, %v3567
        %v4895 = vmul.f32 %v3051, %v3567
        %v4896 = vmul.f32 %v3058, %v3571
        %v4897 = vmul.f32 %v3062, %v3571
        %v4898 = vmul.f32 %v3066, %v3571
        %v4899 = vmul.f32 %v3070, %v3571
        %v4900 = vmul.f32 %v3074, %v3571
        %v4901 = vmul.f32 %v3078, %v3571
        %v4902 = vmul.f32 %v3082, %v3571
        %v4903 = vmul.f32 %v3086, %v3571
        %v4904 = vmul.f32 %v3090, %v3571
        %v4905 = vmul.f32 %v3094, %v3571
        %v4906 = vmul.f32 %v3098, %v3571
        %v4907 = vmul.f32 %v3102, %v3571
        %v4908 = vmul.f32 %v3106, %v3571
        %v4909 = vmul.f32 %v3110, %v3571
        %v4910 = vmul.f32 %v3114, %v3571
        %v4911 = vmul.f32 %v3118, %v3571
        %v4912 = vmul.f32 %v3125, %v3575
        %v4913 = vmul.f32 %v3129, %v3575
        %v4914 = vmul.f32 %v3133, %v3575
        %v4915 = vmul.f32 %v3137, %v3575
        %v4916 = vmul.f32 %v3141, %v3575
        %v4917 = vmul.f32 %v3145, %v3575
        %v4918 = vmul.f32 %v3149, %v3575
        %v4919 = vmul.f32 %v3153, %v3575
        %v4920 = vmul.f32 %v3157, %v3575
        %v4921 = vmul.f32 %v3161, %v3575
        %v4922 = vmul.f32 %v3165, %v3575
        %v4923 = vmul.f32 %v3169, %v3575
        %v4924 = vmul.f32 %v3173, %v3575
        %v4925 = vmul.f32 %v3177, %v3575
        %v4926 = vmul.f32 %v3181, %v3575
        %v4927 = vmul.f32 %v3185, %v3575
        %v4928 = vmul.f32 %v3192, %v3579
        %v4929 = vmul.f32 %v3196, %v3579
        %v4930 = vmul.f32 %v3200, %v3579
        %v4931 = vmul.f32 %v3204, %v3579
        %v4932 = vmul.f32 %v3208, %v3579
        %v4933 = vmul.f32 %v3212, %v3579
        %v4934 = vmul.f32 %v3216, %v3579
        %v4935 = vmul.f32 %v3220, %v3579
        %v4936 = vmul.f32 %v3224, %v3579
        %v4937 = vmul.f32 %v3228, %v3579
        %v4938 = vmul.f32 %v3232, %v3579
        %v4939 = vmul.f32 %v3236, %v3579
        %v4940 = vmul.f32 %v3240, %v3579
        %v4941 = vmul.f32 %v3244, %v3579
        %v4942 = vmul.f32 %v3248, %v3579
        %v4943 = vmul.f32 %v3252, %v3579
        %v4944 = vmul.f32 %v3259, %v3583
        %v4945 = vmul.f32 %v3263, %v3583
        %v4946 = vmul.f32 %v3267, %v3583
        %v4947 = vmul.f32 %v3271, %v3583
        %v4948 = vmul.f32 %v3275, %v3583
        %v4949 = vmul.f32 %v3279, %v3583
        %v4950 = vmul.f32 %v3283, %v3583
        %v4951 = vmul.f32 %v3287, %v3583
        %v4952 = vmul.f32 %v3291, %v3583
        %v4953 = vmul.f32 %v3295, %v3583
        %v4954 = vmul.f32 %v3299, %v3583
        %v4955 = vmul.f32 %v3303, %v3583
        %v4956 = vmul.f32 %v3307, %v3583
        %v4957 = vmul.f32 %v3311, %v3583
        %v4958 = vmul.f32 %v3315, %v3583
        %v4959 = vmul.f32 %v3319, %v3583
        %v4960 = vmul.f32 %v1182, %v3859
        %v4961 = vmul.f32 %v1186, %v3859
        %v4962 = vmul.f32 %v1190, %v3859
        %v4963 = vmul.f32 %v1194, %v3859
        %v4964 = vmul.f32 %v1198, %v3859
        %v4965 = vmul.f32 %v1202, %v3859
        %v4966 = vmul.f32 %v1206, %v3859
        %v4967 = vmul.f32 %v1210, %v3859
        %v4968 = vmul.f32 %v1214, %v3859
        %v4969 = vmul.f32 %v1218, %v3859
        %v4970 = vmul.f32 %v1222, %v3859
        %v4971 = vmul.f32 %v1226, %v3859
        %v4972 = vmul.f32 %v1230, %v3859
        %v4973 = vmul.f32 %v1234, %v3859
        %v4974 = vmul.f32 %v1238, %v3859
        %v4975 = vmul.f32 %v1242, %v3859
        %v4976 = vmul.f32 %v1249, %v3863
        %v4977 = vmul.f32 %v1253, %v3863
        %v4978 = vmul.f32 %v1257, %v3863
        %v4979 = vmul.f32 %v1261, %v3863
        %v4980 = vmul.f32 %v1265, %v3863
        %v4981 = vmul.f32 %v1269, %v3863
        %v4982 = vmul.f32 %v1273, %v3863
        %v4983 = vmul.f32 %v1277, %v3863
        %v4984 = vmul.f32 %v1281, %v3863
        %v4985 = vmul.f32 %v1285, %v3863
        %v4986 = vmul.f32 %v1289, %v3863
        %v4987 = vmul.f32 %v1293, %v3863
        %v4988 = vmul.f32 %v1297, %v3863
        %v4989 = vmul.f32 %v1301, %v3863
        %v4990 = vmul.f32 %v1305, %v3863
        %v4991 = vmul.f32 %v1309, %v3863
        %v4992 = vmul.f32 %v1316, %v3867
        %v4993 = vmul.f32 %v1320, %v3867
        %v4994 = vmul.f32 %v1324, %v3867
        %v4995 = vmul.f32 %v1328, %v3867
        %v4996 = vmul.f32 %v1332, %v3867
        %v4997 = vmul.f32 %v1336, %v3867
        %v4998 = vmul.f32 %v1340, %v3867
        %v4999 = vmul.f32 %v1344, %v3867
        %v5000 = vmul.f32 %v1348, %v3867
        %v5001 = vmul.f32 %v1352, %v3867
        %v5002 = vmul.f32 %v1356, %v3867
        %v5003 = vmul.f32 %v1360, %v3867
        %v5004 = vmul.f32 %v1364, %v3867
        %v5005 = vmul.f32 %v1368, %v3867
        %v5006 = vmul.f32 %v1372, %v3867
        %v5007 = vmul.f32 %v1376, %v3867
        %v5008 = vmul.f32 %v1383, %v3871
        %v5009 = vmul.f32 %v1387, %v3871
        %v5010 = vmul.f32 %v1391, %v3871
        %v5011 = vmul.f32 %v1395, %v3871
        %v5012 = vmul.f32 %v1399, %v3871
        %v5013 = vmul.f32 %v1403, %v3871
        %v5014 = vmul.f32 %v1407, %v3871
        %v5015 = vmul.f32 %v1411, %v3871
        %v5016 = vmul.f32 %v1415, %v3871
        %v5017 = vmul.f32 %v1419, %v3871
        %v5018 = vmul.f32 %v1423, %v3871
        %v5019 = vmul.f32 %v1427, %v3871
        %v5020 = vmul.f32 %v1431, %v3871
        %v5021 = vmul.f32 %v1435, %v3871
        %v5022 = vmul.f32 %v1439, %v3871
        %v5023 = vmul.f32 %v1443, %v3871
        %v5024 = vmul.f32 %v1450, %v3875
        %v5025 = vmul.f32 %v1454, %v3875
        %v5026 = vmul.f32 %v1458, %v3875
        %v5027 = vmul.f32 %v1462, %v3875
        %v5028 = vmul.f32 %v1466, %v3875
        %v5029 = vmul.f32 %v1470, %v3875
        %v5030 = vmul.f32 %v1474, %v3875
        %v5031 = vmul.f32 %v1478, %v3875
        %v5032 = vmul.f32 %v1482, %v3875
        %v5033 = vmul.f32 %v1486, %v3875
        %v5034 = vmul.f32 %v1490, %v3875
        %v5035 = vmul.f32 %v1494, %v3875
        %v5036 = vmul.f32 %v1498, %v3875
        %v5037 = vmul.f32 %v1502, %v3875
        %v5038 = vmul.f32 %v1506, %v3875
        %v5039 = vmul.f32 %v1510, %v3875
        %v5040 = vmul.f32 %v1517, %v3879
        %v5041 = vmul.f32 %v1521, %v3879
        %v5042 = vmul.f32 %v1525, %v3879
        %v5043 = vmul.f32 %v1529, %v3879
        %v5044 = vmul.f32 %v1533, %v3879
        %v5045 = vmul.f32 %v1537, %v3879
        %v5046 = vmul.f32 %v1541, %v3879
        %v5047 = vmul.f32 %v1545, %v3879
        %v5048 = vmul.f32 %v1549, %v3879
        %v5049 = vmul.f32 %v1553, %v3879
        %v5050 = vmul.f32 %v1557, %v3879
        %v5051 = vmul.f32 %v1561, %v3879
        %v5052 = vmul.f32 %v1565, %v3879
        %v5053 = vmul.f32 %v1569, %v3879
        %v5054 = vmul.f32 %v1573, %v3879
        %v5055 = vmul.f32 %v1577, %v3879
        %v5056 = vmul.f32 %v1584, %v3883
        %v5057 = vmul.f32 %v1588, %v3883
        %v5058 = vmul.f32 %v1592, %v3883
        %v5059 = vmul.f32 %v1596, %v3883
        %v5060 = vmul.f32 %v1600, %v3883
        %v5061 = vmul.f32 %v1604, %v3883
        %v5062 = vmul.f32 %v1608, %v3883
        %v5063 = vmul.f32 %v1612, %v3883
        %v5064 = vmul.f32 %v1616, %v3883
        %v5065 = vmul.f32 %v1620, %v3883
        %v5066 = vmul.f32 %v1624, %v3883
        %v5067 = vmul.f32 %v1628, %v3883
        %v5068 = vmul.f32 %v1632, %v3883
        %v5069 = vmul.f32 %v1636, %v3883
        %v5070 = vmul.f32 %v1640, %v3883
        %v5071 = vmul.f32 %v1644, %v3883
        %v5072 = vmul.f32 %v1651, %v3887
        %v5073 = vmul.f32 %v1655, %v3887
        %v5074 = vmul.f32 %v1659, %v3887
        %v5075 = vmul.f32 %v1663, %v3887
        %v5076 = vmul.f32 %v1667, %v3887
        %v5077 = vmul.f32 %v1671, %v3887
        %v5078 = vmul.f32 %v1675, %v3887
        %v5079 = vmul.f32 %v1679, %v3887
        %v5080 = vmul.f32 %v1683, %v3887
        %v5081 = vmul.f32 %v1687, %v3887
        %v5082 = vmul.f32 %v1691, %v3887
        %v5083 = vmul.f32 %v1695, %v3887
        %v5084 = vmul.f32 %v1699, %v3887
        %v5085 = vmul.f32 %v1703, %v3887
        %v5086 = vmul.f32 %v1707, %v3887
        %v5087 = vmul.f32 %v1711, %v3887
        %v5088 = vmul.f32 %v1718, %v3891
        %v5089 = vmul.f32 %v1722, %v3891
        %v5090 = vmul.f32 %v1726, %v3891
        %v5091 = vmul.f32 %v1730, %v3891
        %v5092 = vmul.f32 %v1734, %v3891
        %v5093 = vmul.f32 %v1738, %v3891
        %v5094 = vmul.f32 %v1742, %v3891
        %v5095 = vmul.f32 %v1746, %v3891
        %v5096 = vmul.f32 %v1750, %v3891
        %v5097 = vmul.f32 %v1754, %v3891
        %v5098 = vmul.f32 %v1758, %v3891
        %v5099 = vmul.f32 %v1762, %v3891
        %v5100 = vmul.f32 %v1766, %v3891
        %v5101 = vmul.f32 %v1770, %v3891
        %v5102 = vmul.f32 %v1774, %v3891
        %v5103 = vmul.f32 %v1778, %v3891
        %v5104 = vmul.f32 %v1785, %v3895
        %v5105 = vmul.f32 %v1789, %v3895
        %v5106 = vmul.f32 %v1793, %v3895
        %v5107 = vmul.f32 %v1797, %v3895
        %v5108 = vmul.f32 %v1801, %v3895
        %v5109 = vmul.f32 %v1805, %v3895
        %v5110 = vmul.f32 %v1809, %v3895
        %v5111 = vmul.f32 %v1813, %v3895
        %v5112 = vmul.f32 %v1817, %v3895
        %v5113 = vmul.f32 %v1821, %v3895
        %v5114 = vmul.f32 %v1825, %v3895
        %v5115 = vmul.f32 %v1829, %v3895
        %v5116 = vmul.f32 %v1833, %v3895
        %v5117 = vmul.f32 %v1837, %v3895
        %v5118 = vmul.f32 %v1841, %v3895
        %v5119 = vmul.f32 %v1845, %v3895
        %v5120 = vmul.f32 %v1852, %v3899
        %v5121 = vmul.f32 %v1856, %v3899
        %v5122 = vmul.f32 %v1860, %v3899
        %v5123 = vmul.f32 %v1864, %v3899
        %v5124 = vmul.f32 %v1868, %v3899
        %v5125 = vmul.f32 %v1872, %v3899
        %v5126 = vmul.f32 %v1876, %v3899
        %v5127 = vmul.f32 %v1880, %v3899
        %v5128 = vmul.f32 %v1884, %v3899
        %v5129 = vmul.f32 %v1888, %v3899
        %v5130 = vmul.f32 %v1892, %v3899
        %v5131 = vmul.f32 %v1896, %v3899
        %v5132 = vmul.f32 %v1900, %v3899
        %v5133 = vmul.f32 %v1904, %v3899
        %v5134 = vmul.f32 %v1908, %v3899
        %v5135 = vmul.f32 %v1912, %v3899
        %v5136 = vmul.f32 %v1919, %v3903
        %v5137 = vmul.f32 %v1923, %v3903
        %v5138 = vmul.f32 %v1927, %v3903
        %v5139 = vmul.f32 %v1931, %v3903
        %v5140 = vmul.f32 %v1935, %v3903
        %v5141 = vmul.f32 %v1939, %v3903
        %v5142 = vmul.f32 %v1943, %v3903
        %v5143 = vmul.f32 %v1947, %v3903
        %v5144 = vmul.f32 %v1951, %v3903
        %v5145 = vmul.f32 %v1955, %v3903
        %v5146 = vmul.f32 %v1959, %v3903
        %v5147 = vmul.f32 %v1963, %v3903
        %v5148 = vmul.f32 %v1967, %v3903
        %v5149 = vmul.f32 %v1971, %v3903
        %v5150 = vmul.f32 %v1975, %v3903
        %v5151 = vmul.f32 %v1979, %v3903
        %v5152 = vmul.f32 %v1986, %v3907
        %v5153 = vmul.f32 %v1990, %v3907
        %v5154 = vmul.f32 %v1994, %v3907
        %v5155 = vmul.f32 %v1998, %v3907
        %v5156 = vmul.f32 %v2002, %v3907
        %v5157 = vmul.f32 %v2006, %v3907
        %v5158 = vmul.f32 %v2010, %v3907
        %v5159 = vmul.f32 %v2014, %v3907
        %v5160 = vmul.f32 %v2018, %v3907
        %v5161 = vmul.f32 %v2022, %v3907
        %v5162 = vmul.f32 %v2026, %v3907
        %v5163 = vmul.f32 %v2030, %v3907
        %v5164 = vmul.f32 %v2034, %v3907
        %v5165 = vmul.f32 %v2038, %v3907
        %v5166 = vmul.f32 %v2042, %v3907
        %v5167 = vmul.f32 %v2046, %v3907
        %v5168 = vmul.f32 %v2053, %v3911
        %v5169 = vmul.f32 %v2057, %v3911
        %v5170 = vmul.f32 %v2061, %v3911
        %v5171 = vmul.f32 %v2065, %v3911
        %v5172 = vmul.f32 %v2069, %v3911
        %v5173 = vmul.f32 %v2073, %v3911
        %v5174 = vmul.f32 %v2077, %v3911
        %v5175 = vmul.f32 %v2081, %v3911
        %v5176 = vmul.f32 %v2085, %v3911
        %v5177 = vmul.f32 %v2089, %v3911
        %v5178 = vmul.f32 %v2093, %v3911
        %v5179 = vmul.f32 %v2097, %v3911
        %v5180 = vmul.f32 %v2101, %v3911
        %v5181 = vmul.f32 %v2105, %v3911
        %v5182 = vmul.f32 %v2109, %v3911
        %v5183 = vmul.f32 %v2113, %v3911
        %v5184 = vmul.f32 %v2120, %v3915
        %v5185 = vmul.f32 %v2124, %v3915
        %v5186 = vmul.f32 %v2128, %v3915
        %v5187 = vmul.f32 %v2132, %v3915
        %v5188 = vmul.f32 %v2136, %v3915
        %v5189 = vmul.f32 %v2140, %v3915
        %v5190 = vmul.f32 %v2144, %v3915
        %v5191 = vmul.f32 %v2148, %v3915
        %v5192 = vmul.f32 %v2152, %v3915
        %v5193 = vmul.f32 %v2156, %v3915
        %v5194 = vmul.f32 %v2160, %v3915
        %v5195 = vmul.f32 %v2164, %v3915
        %v5196 = vmul.f32 %v2168, %v3915
        %v5197 = vmul.f32 %v2172, %v3915
        %v5198 = vmul.f32 %v2176, %v3915
        %v5199 = vmul.f32 %v2180, %v3915
        %v5200 = vmul.f32 %v2187, %v3919
        %v5201 = vmul.f32 %v2191, %v3919
        %v5202 = vmul.f32 %v2195, %v3919
        %v5203 = vmul.f32 %v2199, %v3919
        %v5204 = vmul.f32 %v2203, %v3919
        %v5205 = vmul.f32 %v2207, %v3919
        %v5206 = vmul.f32 %v2211, %v3919
        %v5207 = vmul.f32 %v2215, %v3919
        %v5208 = vmul.f32 %v2219, %v3919
        %v5209 = vmul.f32 %v2223, %v3919
        %v5210 = vmul.f32 %v2227, %v3919
        %v5211 = vmul.f32 %v2231, %v3919
        %v5212 = vmul.f32 %v2235, %v3919
        %v5213 = vmul.f32 %v2239, %v3919
        %v5214 = vmul.f32 %v2243, %v3919
        %v5215 = vmul.f32 %v2247, %v3919
        %v5216 = vadd.f32 %v4704, %v4960
        %v5217 = vadd.f32 %v4705, %v4961
        %v5218 = vadd.f32 %v4706, %v4962
        %v5219 = vadd.f32 %v4707, %v4963
        %v5220 = vadd.f32 %v4708, %v4964
        %v5221 = vadd.f32 %v4709, %v4965
        %v5222 = vadd.f32 %v4710, %v4966
        %v5223 = vadd.f32 %v4711, %v4967
        %v5224 = vadd.f32 %v4712, %v4968
        %v5225 = vadd.f32 %v4713, %v4969
        %v5226 = vadd.f32 %v4714, %v4970
        %v5227 = vadd.f32 %v4715, %v4971
        %v5228 = vadd.f32 %v4716, %v4972
        %v5229 = vadd.f32 %v4717, %v4973
        %v5230 = vadd.f32 %v4718, %v4974
        %v5231 = vadd.f32 %v4719, %v4975
        %v5232 = vadd.f32 %v4720, %v4976
        %v5233 = vadd.f32 %v4721, %v4977
        %v5234 = vadd.f32 %v4722, %v4978
        %v5235 = vadd.f32 %v4723, %v4979
        %v5236 = vadd.f32 %v4724, %v4980
        %v5237 = vadd.f32 %v4725, %v4981
        %v5238 = vadd.f32 %v4726, %v4982
        %v5239 = vadd.f32 %v4727, %v4983
        %v5240 = vadd.f32 %v4728, %v4984
        %v5241 = vadd.f32 %v4729, %v4985
        %v5242 = vadd.f32 %v4730, %v4986
        %v5243 = vadd.f32 %v4731, %v4987
        %v5244 = vadd.f32 %v4732, %v4988
        %v5245 = vadd.f32 %v4733, %v4989
        %v5246 = vadd.f32 %v4734, %v4990
        %v5247 = vadd.f32 %v4735, %v4991
        %v5248 = vadd.f32 %v4736, %v4992
        %v5249 = vadd.f32 %v4737, %v4993
        %v5250 = vadd.f32 %v4738, %v4994
        %v5251 = vadd.f32 %v4739, %v4995
        %v5252 = vadd.f32 %v4740, %v4996
        %v5253 = vadd.f32 %v4741, %v4997
        %v5254 = vadd.f32 %v4742, %v4998
        %v5255 = vadd.f32 %v4743, %v4999
        %v5256 = vadd.f32 %v4744, %v5000
        %v5257 = vadd.f32 %v4745, %v5001
        %v5258 = vadd.f32 %v4746, %v5002
        %v5259 = vadd.f32 %v4747, %v5003
        %v5260 = vadd.f32 %v4748, %v5004
        %v5261 = vadd.f32 %v4749, %v5005
        %v5262 = vadd.f32 %v4750, %v5006
        %v5263 = vadd.f32 %v4751, %v5007
        %v5264 = vadd.f32 %v4752, %v5008
        %v5265 = vadd.f32 %v4753, %v5009
        %v5266 = vadd.f32 %v4754, %v5010
        %v5267 = vadd.f32 %v4755, %v5011
        %v5268 = vadd.f32 %v4756, %v5012
        %v5269 = vadd.f32 %v4757, %v5013
        %v5270 = vadd.f32 %v4758, %v5014
        %v5271 = vadd.f32 %v4759, %v5015
        %v5272 = vadd.f32 %v4760, %v5016
        %v5273 = vadd.f32 %v4761, %v5017
        %v5274 = vadd.f32 %v4762, %v5018
        %v5275 = vadd.f32 %v4763, %v5019
        %v5276 = vadd.f32 %v4764, %v5020
        %v5277 = vadd.f32 %v4765, %v5021
        %v5278 = vadd.f32 %v4766, %v5022
        %v5279 = vadd.f32 %v4767, %v5023
        %v5280 = vadd.f32 %v4768, %v5024
        %v5281 = vadd.f32 %v4769, %v5025
        %v5282 = vadd.f32 %v4770, %v5026
        %v5283 = vadd.f32 %v4771, %v5027
        %v5284 = vadd.f32 %v4772, %v5028
        %v5285 = vadd.f32 %v4773, %v5029
        %v5286 = vadd.f32 %v4774, %v5030
        %v5287 = vadd.f32 %v4775, %v5031
        %v5288 = vadd.f32 %v4776, %v5032
        %v5289 = vadd.f32 %v4777, %v5033
        %v5290 = vadd.f32 %v4778, %v5034
        %v5291 = vadd.f32 %v4779, %v5035
        %v5292 = vadd.f32 %v4780, %v5036
        %v5293 = vadd.f32 %v4781, %v5037
        %v5294 = vadd.f32 %v4782, %v5038
        %v5295 = vadd.f32 %v4783, %v5039
        %v5296 = vadd.f32 %v4784, %v5040
        %v5297 = vadd.f32 %v4785, %v5041
        %v5298 = vadd.f32 %v4786, %v5042
        %v5299 = vadd.f32 %v4787, %v5043
        %v5300 = vadd.f32 %v4788, %v5044
        %v5301 = vadd.f32 %v4789, %v5045
        %v5302 = vadd.f32 %v4790, %v5046
        %v5303 = vadd.f32 %v4791, %v5047
        %v5304 = vadd.f32 %v4792, %v5048
        %v5305 = vadd.f32 %v4793, %v5049
        %v5306 = vadd.f32 %v4794, %v5050
        %v5307 = vadd.f32 %v4795, %v5051
        %v5308 = vadd.f32 %v4796, %v5052
        %v5309 = vadd.f32 %v4797, %v5053
        %v5310 = vadd.f32 %v4798, %v5054
        %v5311 = vadd.f32 %v4799, %v5055
        %v5312 = vadd.f32 %v4800, %v5056
        %v5313 = vadd.f32 %v4801, %v5057
        %v5314 = vadd.f32 %v4802, %v5058
        %v5315 = vadd.f32 %v4803, %v5059
        %v5316 = vadd.f32 %v4804, %v5060
        %v5317 = vadd.f32 %v4805, %v5061
        %v5318 = vadd.f32 %v4806, %v5062
        %v5319 = vadd.f32 %v4807, %v5063
        %v5320 = vadd.f32 %v4808, %v5064
        %v5321 = vadd.f32 %v4809, %v5065
        %v5322 = vadd.f32 %v4810, %v5066
        %v5323 = vadd.f32 %v4811, %v5067
        %v5324 = vadd.f32 %v4812, %v5068
        %v5325 = vadd.f32 %v4813, %v5069
        %v5326 = vadd.f32 %v4814, %v5070
        %v5327 = vadd.f32 %v4815, %v5071
        %v5328 = vadd.f32 %v4816, %v5072
        %v5329 = vadd.f32 %v4817, %v5073
        %v5330 = vadd.f32 %v4818, %v5074
        %v5331 = vadd.f32 %v4819, %v5075
        %v5332 = vadd.f32 %v4820, %v5076
        %v5333 = vadd.f32 %v4821, %v5077
        %v5334 = vadd.f32 %v4822, %v5078
        %v5335 = vadd.f32 %v4823, %v5079
        %v5336 = vadd.f32 %v4824, %v5080
        %v5337 = vadd.f32 %v4825, %v5081
        %v5338 = vadd.f32 %v4826, %v5082
        %v5339 = vadd.f32 %v4827, %v5083
        %v5340 = vadd.f32 %v4828, %v5084
        %v5341 = vadd.f32 %v4829, %v5085
        %v5342 = vadd.f32 %v4830, %v5086
        %v5343 = vadd.f32 %v4831, %v5087
        %v5344 = vadd.f32 %v4832, %v5088
        %v5345 = vadd.f32 %v4833, %v5089
        %v5346 = vadd.f32 %v4834, %v5090
        %v5347 = vadd.f32 %v4835, %v5091
        %v5348 = vadd.f32 %v4836, %v5092
        %v5349 = vadd.f32 %v4837, %v5093
        %v5350 = vadd.f32 %v4838, %v5094
        %v5351 = vadd.f32 %v4839, %v5095
        %v5352 = vadd.f32 %v4840, %v5096
        %v5353 = vadd.f32 %v4841, %v5097
        %v5354 = vadd.f32 %v4842, %v5098
        %v5355 = vadd.f32 %v4843, %v5099
        %v5356 = vadd.f32 %v4844, %v5100
        %v5357 = vadd.f32 %v4845, %v5101
        %v5358 = vadd.f32 %v4846, %v5102
        %v5359 = vadd.f32 %v4847, %v5103
        %v5360 = vadd.f32 %v4848, %v5104
        %v5361 = vadd.f32 %v4849, %v5105
        %v5362 = vadd.f32 %v4850, %v5106
        %v5363 = vadd.f32 %v4851, %v5107
        %v5364 = vadd.f32 %v4852, %v5108
        %v5365 = vadd.f32 %v4853, %v5109
        %v5366 = vadd.f32 %v4854, %v5110
        %v5367 = vadd.f32 %v4855, %v5111
        %v5368 = vadd.f32 %v4856, %v5112
        %v5369 = vadd.f32 %v4857, %v5113
        %v5370 = vadd.f32 %v4858, %v5114
        %v5371 = vadd.f32 %v4859, %v5115
        %v5372 = vadd.f32 %v4860, %v5116
        %v5373 = vadd.f32 %v4861, %v5117
        %v5374 = vadd.f32 %v4862, %v5118
        %v5375 = vadd.f32 %v4863, %v5119
        %v5376 = vadd.f32 %v4864, %v5120
        %v5377 = vadd.f32 %v4865, %v5121
        %v5378 = vadd.f32 %v4866, %v5122
        %v5379 = vadd.f32 %v4867, %v5123
        %v5380 = vadd.f32 %v4868, %v5124
        %v5381 = vadd.f32 %v4869, %v5125
        %v5382 = vadd.f32 %v4870, %v5126
        %v5383 = vadd.f32 %v4871, %v5127
        %v5384 = vadd.f32 %v4872, %v5128
        %v5385 = vadd.f32 %v4873, %v5129
        %v5386 = vadd.f32 %v4874, %v5130
        %v5387 = vadd.f32 %v4875, %v5131
        %v5388 = vadd.f32 %v4876, %v5132
        %v5389 = vadd.f32 %v4877, %v5133
        %v5390 = vadd.f32 %v4878, %v5134
        %v5391 = vadd.f32 %v4879, %v5135
        %v5392 = vadd.f32 %v4880, %v5136
        %v5393 = vadd.f32 %v4881, %v5137
        %v5394 = vadd.f32 %v4882, %v5138
        %v5395 = vadd.f32 %v4883, %v5139
        %v5396 = vadd.f32 %v4884, %v5140
        %v5397 = vadd.f32 %v4885, %v5141
        %v5398 = vadd.f32 %v4886, %v5142
        %v5399 = vadd.f32 %v4887, %v5143
        %v5400 = vadd.f32 %v4888, %v5144
        %v5401 = vadd.f32 %v4889, %v5145
        %v5402 = vadd.f32 %v4890, %v5146
        %v5403 = vadd.f32 %v4891, %v5147
        %v5404 = vadd.f32 %v4892, %v5148
        %v5405 = vadd.f32 %v4893, %v5149
        %v5406 = vadd.f32 %v4894, %v5150
        %v5407 = vadd.f32 %v4895, %v5151
        %v5408 = vadd.f32 %v4896, %v5152
        %v5409 = vadd.f32 %v4897, %v5153
        %v5410 = vadd.f32 %v4898, %v5154
        %v5411 = vadd.f32 %v4899, %v5155
        %v5412 = vadd.f32 %v4900, %v5156
        %v5413 = vadd.f32 %v4901, %v5157
        %v5414 = vadd.f32 %v4902, %v5158
        %v5415 = vadd.f32 %v4903, %v5159
        %v5416 = vadd.f32 %v4904, %v5160
        %v5417 = vadd.f32 %v4905, %v5161
        %v5418 = vadd.f32 %v4906, %v5162
        %v5419 = vadd.f32 %v4907, %v5163
        %v5420 = vadd.f32 %v4908, %v5164
        %v5421 = vadd.f32 %v4909, %v5165
        %v5422 = vadd.f32 %v4910, %v5166
        %v5423 = vadd.f32 %v4911, %v5167
        %v5424 = vadd.f32 %v4912, %v5168
        %v5425 = vadd.f32 %v4913, %v5169
        %v5426 = vadd.f32 %v4914, %v5170
        %v5427 = vadd.f32 %v4915, %v5171
        %v5428 = vadd.f32 %v4916, %v5172
        %v5429 = vadd.f32 %v4917, %v5173
        %v5430 = vadd.f32 %v4918, %v5174
        %v5431 = vadd.f32 %v4919, %v5175
        %v5432 = vadd.f32 %v4920, %v5176
        %v5433 = vadd.f32 %v4921, %v5177
        %v5434 = vadd.f32 %v4922, %v5178
        %v5435 = vadd.f32 %v4923, %v5179
        %v5436 = vadd.f32 %v4924, %v5180
        %v5437 = vadd.f32 %v4925, %v5181
        %v5438 = vadd.f32 %v4926, %v5182
        %v5439 = vadd.f32 %v4927, %v5183
        %v5440 = vadd.f32 %v4928, %v5184
        %v5441 = vadd.f32 %v4929, %v5185
        %v5442 = vadd.f32 %v4930, %v5186
        %v5443 = vadd.f32 %v4931, %v5187
        %v5444 = vadd.f32 %v4932, %v5188
        %v5445 = vadd.f32 %v4933, %v5189
        %v5446 = vadd.f32 %v4934, %v5190
        %v5447 = vadd.f32 %v4935, %v5191
        %v5448 = vadd.f32 %v4936, %v5192
        %v5449 = vadd.f32 %v4937, %v5193
        %v5450 = vadd.f32 %v4938, %v5194
        %v5451 = vadd.f32 %v4939, %v5195
        %v5452 = vadd.f32 %v4940, %v5196
        %v5453 = vadd.f32 %v4941, %v5197
        %v5454 = vadd.f32 %v4942, %v5198
        %v5455 = vadd.f32 %v4943, %v5199
        %v5456 = vadd.f32 %v4944, %v5200
        %v5457 = vadd.f32 %v4945, %v5201
        %v5458 = vadd.f32 %v4946, %v5202
        %v5459 = vadd.f32 %v4947, %v5203
        %v5460 = vadd.f32 %v4948, %v5204
        %v5461 = vadd.f32 %v4949, %v5205
        %v5462 = vadd.f32 %v4950, %v5206
        %v5463 = vadd.f32 %v4951, %v5207
        %v5464 = vadd.f32 %v4952, %v5208
        %v5465 = vadd.f32 %v4953, %v5209
        %v5466 = vadd.f32 %v4954, %v5210
        %v5467 = vadd.f32 %v4955, %v5211
        %v5468 = vadd.f32 %v4956, %v5212
        %v5469 = vadd.f32 %v4957, %v5213
        %v5470 = vadd.f32 %v4958, %v5214
        %v5471 = vadd.f32 %v4959, %v5215
        %s5472 = scalar_lea.vmem %s240, 2048 [#allocation2]
        %5473 = vst [vmem:[%s5472] sm:$0xff] %v5216
        %5474 = vst [vmem:[%s5472 + $0x8] sm:$0xff] %v5217
        %5475 = vst [vmem:[%s5472 + $0x10] sm:$0xff] %v5218
        %5476 = vst [vmem:[%s5472 + $0x18] sm:$0xff] %v5219
        %5477 = vst [vmem:[%s5472 + $0x20] sm:$0xff] %v5220
        %5478 = vst [vmem:[%s5472 + $0x28] sm:$0xff] %v5221
        %5479 = vst [vmem:[%s5472 + $0x30] sm:$0xff] %v5222
        %5480 = vst [vmem:[%s5472 + $0x38] sm:$0xff] %v5223
        %5481 = vst [vmem:[%s5472 + $0x40] sm:$0xff] %v5224
        %5482 = vst [vmem:[%s5472 + $0x48] sm:$0xff] %v5225
        %5483 = vst [vmem:[%s5472 + $0x50] sm:$0xff] %v5226
        %5484 = vst [vmem:[%s5472 + $0x58] sm:$0xff] %v5227
        %5485 = vst [vmem:[%s5472 + $0x60] sm:$0xff] %v5228
        %5486 = vst [vmem:[%s5472 + $0x68] sm:$0xff] %v5229
        %5487 = vst [vmem:[%s5472 + $0x70] sm:$0xff] %v5230
        %5488 = vst [vmem:[%s5472 + $0x78] sm:$0xff] %v5231
        %5489 = vst [vmem:[%s5472 + $0x80] sm:$0xff] %v5232
        %5490 = vst [vmem:[%s5472 + $0x88] sm:$0xff] %v5233
        %5491 = vst [vmem:[%s5472 + $0x90] sm:$0xff] %v5234
        %5492 = vst [vmem:[%s5472 + $0x98] sm:$0xff] %v5235
        %5493 = vst [vmem:[%s5472 + $0xa0] sm:$0xff] %v5236
        %5494 = vst [vmem:[%s5472 + $0xa8] sm:$0xff] %v5237
        %5495 = vst [vmem:[%s5472 + $0xb0] sm:$0xff] %v5238
        %5496 = vst [vmem:[%s5472 + $0xb8] sm:$0xff] %v5239
        %5497 = vst [vmem:[%s5472 + $0xc0] sm:$0xff] %v5240
        %5498 = vst [vmem:[%s5472 + $0xc8] sm:$0xff] %v5241
        %5499 = vst [vmem:[%s5472 + $0xd0] sm:$0xff] %v5242
        %5500 = vst [vmem:[%s5472 + $0xd8] sm:$0xff] %v5243
        %5501 = vst [vmem:[%s5472 + $0xe0] sm:$0xff] %v5244
        %5502 = vst [vmem:[%s5472 + $0xe8] sm:$0xff] %v5245
        %5503 = vst [vmem:[%s5472 + $0xf0] sm:$0xff] %v5246
        %5504 = vst [vmem:[%s5472 + $0xf8] sm:$0xff] %v5247
        %5505 = vst [vmem:[%s5472 + $0x100] sm:$0xff] %v5248
        %5506 = vst [vmem:[%s5472 + $0x108] sm:$0xff] %v5249
        %5507 = vst [vmem:[%s5472 + $0x110] sm:$0xff] %v5250
        %5508 = vst [vmem:[%s5472 + $0x118] sm:$0xff] %v5251
        %5509 = vst [vmem:[%s5472 + $0x120] sm:$0xff] %v5252
        %5510 = vst [vmem:[%s5472 + $0x128] sm:$0xff] %v5253
        %5511 = vst [vmem:[%s5472 + $0x130] sm:$0xff] %v5254
        %5512 = vst [vmem:[%s5472 + $0x138] sm:$0xff] %v5255
        %5513 = vst [vmem:[%s5472 + $0x140] sm:$0xff] %v5256
        %5514 = vst [vmem:[%s5472 + $0x148] sm:$0xff] %v5257
        %5515 = vst [vmem:[%s5472 + $0x150] sm:$0xff] %v5258
        %5516 = vst [vmem:[%s5472 + $0x158] sm:$0xff] %v5259
        %5517 = vst [vmem:[%s5472 + $0x160] sm:$0xff] %v5260
        %5518 = vst [vmem:[%s5472 + $0x168] sm:$0xff] %v5261
        %5519 = vst [vmem:[%s5472 + $0x170] sm:$0xff] %v5262
        %5520 = vst [vmem:[%s5472 + $0x178] sm:$0xff] %v5263
        %5521 = vst [vmem:[%s5472 + $0x180] sm:$0xff] %v5264
        %5522 = vst [vmem:[%s5472 + $0x188] sm:$0xff] %v5265
        %5523 = vst [vmem:[%s5472 + $0x190] sm:$0xff] %v5266
        %5524 = vst [vmem:[%s5472 + $0x198] sm:$0xff] %v5267
        %5525 = vst [vmem:[%s5472 + $0x1a0] sm:$0xff] %v5268
        %5526 = vst [vmem:[%s5472 + $0x1a8] sm:$0xff] %v5269
        %5527 = vst [vmem:[%s5472 + $0x1b0] sm:$0xff] %v5270
        %5528 = vst [vmem:[%s5472 + $0x1b8] sm:$0xff] %v5271
        %5529 = vst [vmem:[%s5472 + $0x1c0] sm:$0xff] %v5272
        %5530 = vst [vmem:[%s5472 + $0x1c8] sm:$0xff] %v5273
        %5531 = vst [vmem:[%s5472 + $0x1d0] sm:$0xff] %v5274
        %5532 = vst [vmem:[%s5472 + $0x1d8] sm:$0xff] %v5275
        %5533 = vst [vmem:[%s5472 + $0x1e0] sm:$0xff] %v5276
        %5534 = vst [vmem:[%s5472 + $0x1e8] sm:$0xff] %v5277
        %5535 = vst [vmem:[%s5472 + $0x1f0] sm:$0xff] %v5278
        %5536 = vst [vmem:[%s5472 + $0x1f8] sm:$0xff] %v5279
        %5537 = vst [vmem:[%s5472 + $0x200] sm:$0xff] %v5280
        %5538 = vst [vmem:[%s5472 + $0x208] sm:$0xff] %v5281
        %5539 = vst [vmem:[%s5472 + $0x210] sm:$0xff] %v5282
        %5540 = vst [vmem:[%s5472 + $0x218] sm:$0xff] %v5283
        %5541 = vst [vmem:[%s5472 + $0x220] sm:$0xff] %v5284
        %5542 = vst [vmem:[%s5472 + $0x228] sm:$0xff] %v5285
        %5543 = vst [vmem:[%s5472 + $0x230] sm:$0xff] %v5286
        %5544 = vst [vmem:[%s5472 + $0x238] sm:$0xff] %v5287
        %5545 = vst [vmem:[%s5472 + $0x240] sm:$0xff] %v5288
        %5546 = vst [vmem:[%s5472 + $0x248] sm:$0xff] %v5289
        %5547 = vst [vmem:[%s5472 + $0x250] sm:$0xff] %v5290
        %5548 = vst [vmem:[%s5472 + $0x258] sm:$0xff] %v5291
        %5549 = vst [vmem:[%s5472 + $0x260] sm:$0xff] %v5292
        %5550 = vst [vmem:[%s5472 + $0x268] sm:$0xff] %v5293
        %5551 = vst [vmem:[%s5472 + $0x270] sm:$0xff] %v5294
        %5552 = vst [vmem:[%s5472 + $0x278] sm:$0xff] %v5295
        %5553 = vst [vmem:[%s5472 + $0x280] sm:$0xff] %v5296
        %5554 = vst [vmem:[%s5472 + $0x288] sm:$0xff] %v5297
        %5555 = vst [vmem:[%s5472 + $0x290] sm:$0xff] %v5298
        %5556 = vst [vmem:[%s5472 + $0x298] sm:$0xff] %v5299
        %5557 = vst [vmem:[%s5472 + $0x2a0] sm:$0xff] %v5300
        %5558 = vst [vmem:[%s5472 + $0x2a8] sm:$0xff] %v5301
        %5559 = vst [vmem:[%s5472 + $0x2b0] sm:$0xff] %v5302
        %5560 = vst [vmem:[%s5472 + $0x2b8] sm:$0xff] %v5303
        %5561 = vst [vmem:[%s5472 + $0x2c0] sm:$0xff] %v5304
        %5562 = vst [vmem:[%s5472 + $0x2c8] sm:$0xff] %v5305
        %5563 = vst [vmem:[%s5472 + $0x2d0] sm:$0xff] %v5306
        %5564 = vst [vmem:[%s5472 + $0x2d8] sm:$0xff] %v5307
        %5565 = vst [vmem:[%s5472 + $0x2e0] sm:$0xff] %v5308
        %5566 = vst [vmem:[%s5472 + $0x2e8] sm:$0xff] %v5309
        %5567 = vst [vmem:[%s5472 + $0x2f0] sm:$0xff] %v5310
        %5568 = vst [vmem:[%s5472 + $0x2f8] sm:$0xff] %v5311
        %5569 = vst [vmem:[%s5472 + $0x300] sm:$0xff] %v5312
        %5570 = vst [vmem:[%s5472 + $0x308] sm:$0xff] %v5313
        %5571 = vst [vmem:[%s5472 + $0x310] sm:$0xff] %v5314
        %5572 = vst [vmem:[%s5472 + $0x318] sm:$0xff] %v5315
        %5573 = vst [vmem:[%s5472 + $0x320] sm:$0xff] %v5316
        %5574 = vst [vmem:[%s5472 + $0x328] sm:$0xff] %v5317
        %5575 = vst [vmem:[%s5472 + $0x330] sm:$0xff] %v5318
        %5576 = vst [vmem:[%s5472 + $0x338] sm:$0xff] %v5319
        %5577 = vst [vmem:[%s5472 + $0x340] sm:$0xff] %v5320
        %5578 = vst [vmem:[%s5472 + $0x348] sm:$0xff] %v5321
        %5579 = vst [vmem:[%s5472 + $0x350] sm:$0xff] %v5322
        %5580 = vst [vmem:[%s5472 + $0x358] sm:$0xff] %v5323
        %5581 = vst [vmem:[%s5472 + $0x360] sm:$0xff] %v5324
        %5582 = vst [vmem:[%s5472 + $0x368] sm:$0xff] %v5325
        %5583 = vst [vmem:[%s5472 + $0x370] sm:$0xff] %v5326
        %5584 = vst [vmem:[%s5472 + $0x378] sm:$0xff] %v5327
        %5585 = vst [vmem:[%s5472 + $0x380] sm:$0xff] %v5328
        %5586 = vst [vmem:[%s5472 + $0x388] sm:$0xff] %v5329
        %5587 = vst [vmem:[%s5472 + $0x390] sm:$0xff] %v5330
        %5588 = vst [vmem:[%s5472 + $0x398] sm:$0xff] %v5331
        %5589 = vst [vmem:[%s5472 + $0x3a0] sm:$0xff] %v5332
        %5590 = vst [vmem:[%s5472 + $0x3a8] sm:$0xff] %v5333
        %5591 = vst [vmem:[%s5472 + $0x3b0] sm:$0xff] %v5334
        %5592 = vst [vmem:[%s5472 + $0x3b8] sm:$0xff] %v5335
        %5593 = vst [vmem:[%s5472 + $0x3c0] sm:$0xff] %v5336
        %5594 = vst [vmem:[%s5472 + $0x3c8] sm:$0xff] %v5337
        %5595 = vst [vmem:[%s5472 + $0x3d0] sm:$0xff] %v5338
        %5596 = vst [vmem:[%s5472 + $0x3d8] sm:$0xff] %v5339
        %5597 = vst [vmem:[%s5472 + $0x3e0] sm:$0xff] %v5340
        %5598 = vst [vmem:[%s5472 + $0x3e8] sm:$0xff] %v5341
        %5599 = vst [vmem:[%s5472 + $0x3f0] sm:$0xff] %v5342
        %5600 = vst [vmem:[%s5472 + $0x3f8] sm:$0xff] %v5343
        %5601 = vst [vmem:[%s5472 + $0x400] sm:$0xff] %v5344
        %5602 = vst [vmem:[%s5472 + $0x408] sm:$0xff] %v5345
        %5603 = vst [vmem:[%s5472 + $0x410] sm:$0xff] %v5346
        %5604 = vst [vmem:[%s5472 + $0x418] sm:$0xff] %v5347
        %5605 = vst [vmem:[%s5472 + $0x420] sm:$0xff] %v5348
        %5606 = vst [vmem:[%s5472 + $0x428] sm:$0xff] %v5349
        %5607 = vst [vmem:[%s5472 + $0x430] sm:$0xff] %v5350
        %5608 = vst [vmem:[%s5472 + $0x438] sm:$0xff] %v5351
        %5609 = vst [vmem:[%s5472 + $0x440] sm:$0xff] %v5352
        %5610 = vst [vmem:[%s5472 + $0x448] sm:$0xff] %v5353
        %5611 = vst [vmem:[%s5472 + $0x450] sm:$0xff] %v5354
        %5612 = vst [vmem:[%s5472 + $0x458] sm:$0xff] %v5355
        %5613 = vst [vmem:[%s5472 + $0x460] sm:$0xff] %v5356
        %5614 = vst [vmem:[%s5472 + $0x468] sm:$0xff] %v5357
        %5615 = vst [vmem:[%s5472 + $0x470] sm:$0xff] %v5358
        %5616 = vst [vmem:[%s5472 + $0x478] sm:$0xff] %v5359
        %5617 = vst [vmem:[%s5472 + $0x480] sm:$0xff] %v5360
        %5618 = vst [vmem:[%s5472 + $0x488] sm:$0xff] %v5361
        %5619 = vst [vmem:[%s5472 + $0x490] sm:$0xff] %v5362
        %5620 = vst [vmem:[%s5472 + $0x498] sm:$0xff] %v5363
        %5621 = vst [vmem:[%s5472 + $0x4a0] sm:$0xff] %v5364
        %5622 = vst [vmem:[%s5472 + $0x4a8] sm:$0xff] %v5365
        %5623 = vst [vmem:[%s5472 + $0x4b0] sm:$0xff] %v5366
        %5624 = vst [vmem:[%s5472 + $0x4b8] sm:$0xff] %v5367
        %5625 = vst [vmem:[%s5472 + $0x4c0] sm:$0xff] %v5368
        %5626 = vst [vmem:[%s5472 + $0x4c8] sm:$0xff] %v5369
        %5627 = vst [vmem:[%s5472 + $0x4d0] sm:$0xff] %v5370
        %5628 = vst [vmem:[%s5472 + $0x4d8] sm:$0xff] %v5371
        %5629 = vst [vmem:[%s5472 + $0x4e0] sm:$0xff] %v5372
        %5630 = vst [vmem:[%s5472 + $0x4e8] sm:$0xff] %v5373
        %5631 = vst [vmem:[%s5472 + $0x4f0] sm:$0xff] %v5374
        %5632 = vst [vmem:[%s5472 + $0x4f8] sm:$0xff] %v5375
        %5633 = vst [vmem:[%s5472 + $0x500] sm:$0xff] %v5376
        %5634 = vst [vmem:[%s5472 + $0x508] sm:$0xff] %v5377
        %5635 = vst [vmem:[%s5472 + $0x510] sm:$0xff] %v5378
        %5636 = vst [vmem:[%s5472 + $0x518] sm:$0xff] %v5379
        %5637 = vst [vmem:[%s5472 + $0x520] sm:$0xff] %v5380
        %5638 = vst [vmem:[%s5472 + $0x528] sm:$0xff] %v5381
        %5639 = vst [vmem:[%s5472 + $0x530] sm:$0xff] %v5382
        %5640 = vst [vmem:[%s5472 + $0x538] sm:$0xff] %v5383
        %5641 = vst [vmem:[%s5472 + $0x540] sm:$0xff] %v5384
        %5642 = vst [vmem:[%s5472 + $0x548] sm:$0xff] %v5385
        %5643 = vst [vmem:[%s5472 + $0x550] sm:$0xff] %v5386
        %5644 = vst [vmem:[%s5472 + $0x558] sm:$0xff] %v5387
        %5645 = vst [vmem:[%s5472 + $0x560] sm:$0xff] %v5388
        %5646 = vst [vmem:[%s5472 + $0x568] sm:$0xff] %v5389
        %5647 = vst [vmem:[%s5472 + $0x570] sm:$0xff] %v5390
        %5648 = vst [vmem:[%s5472 + $0x578] sm:$0xff] %v5391
        %5649 = vst [vmem:[%s5472 + $0x580] sm:$0xff] %v5392
        %5650 = vst [vmem:[%s5472 + $0x588] sm:$0xff] %v5393
        %5651 = vst [vmem:[%s5472 + $0x590] sm:$0xff] %v5394
        %5652 = vst [vmem:[%s5472 + $0x598] sm:$0xff] %v5395
        %5653 = vst [vmem:[%s5472 + $0x5a0] sm:$0xff] %v5396
        %5654 = vst [vmem:[%s5472 + $0x5a8] sm:$0xff] %v5397
        %5655 = vst [vmem:[%s5472 + $0x5b0] sm:$0xff] %v5398
        %5656 = vst [vmem:[%s5472 + $0x5b8] sm:$0xff] %v5399
        %5657 = vst [vmem:[%s5472 + $0x5c0] sm:$0xff] %v5400
        %5658 = vst [vmem:[%s5472 + $0x5c8] sm:$0xff] %v5401
        %5659 = vst [vmem:[%s5472 + $0x5d0] sm:$0xff] %v5402
        %5660 = vst [vmem:[%s5472 + $0x5d8] sm:$0xff] %v5403
        %5661 = vst [vmem:[%s5472 + $0x5e0] sm:$0xff] %v5404
        %5662 = vst [vmem:[%s5472 + $0x5e8] sm:$0xff] %v5405
        %5663 = vst [vmem:[%s5472 + $0x5f0] sm:$0xff] %v5406
        %5664 = vst [vmem:[%s5472 + $0x5f8] sm:$0xff] %v5407
        %5665 = vst [vmem:[%s5472 + $0x600] sm:$0xff] %v5408
        %5666 = vst [vmem:[%s5472 + $0x608] sm:$0xff] %v5409
        %5667 = vst [vmem:[%s5472 + $0x610] sm:$0xff] %v5410
        %5668 = vst [vmem:[%s5472 + $0x618] sm:$0xff] %v5411
        %5669 = vst [vmem:[%s5472 + $0x620] sm:$0xff] %v5412
        %5670 = vst [vmem:[%s5472 + $0x628] sm:$0xff] %v5413
        %5671 = vst [vmem:[%s5472 + $0x630] sm:$0xff] %v5414
        %5672 = vst [vmem:[%s5472 + $0x638] sm:$0xff] %v5415
        %5673 = vst [vmem:[%s5472 + $0x640] sm:$0xff] %v5416
        %5674 = vst [vmem:[%s5472 + $0x648] sm:$0xff] %v5417
        %5675 = vst [vmem:[%s5472 + $0x650] sm:$0xff] %v5418
        %5676 = vst [vmem:[%s5472 + $0x658] sm:$0xff] %v5419
        %5677 = vst [vmem:[%s5472 + $0x660] sm:$0xff] %v5420
        %5678 = vst [vmem:[%s5472 + $0x668] sm:$0xff] %v5421
        %5679 = vst [vmem:[%s5472 + $0x670] sm:$0xff] %v5422
        %5680 = vst [vmem:[%s5472 + $0x678] sm:$0xff] %v5423
        %5681 = vst [vmem:[%s5472 + $0x680] sm:$0xff] %v5424
        %5682 = vst [vmem:[%s5472 + $0x688] sm:$0xff] %v5425
        %5683 = vst [vmem:[%s5472 + $0x690] sm:$0xff] %v5426
        %5684 = vst [vmem:[%s5472 + $0x698] sm:$0xff] %v5427
        %5685 = vst [vmem:[%s5472 + $0x6a0] sm:$0xff] %v5428
        %5686 = vst [vmem:[%s5472 + $0x6a8] sm:$0xff] %v5429
        %5687 = vst [vmem:[%s5472 + $0x6b0] sm:$0xff] %v5430
        %5688 = vst [vmem:[%s5472 + $0x6b8] sm:$0xff] %v5431
        %5689 = vst [vmem:[%s5472 + $0x6c0] sm:$0xff] %v5432
        %5690 = vst [vmem:[%s5472 + $0x6c8] sm:$0xff] %v5433
        %5691 = vst [vmem:[%s5472 + $0x6d0] sm:$0xff] %v5434
        %5692 = vst [vmem:[%s5472 + $0x6d8] sm:$0xff] %v5435
        %5693 = vst [vmem:[%s5472 + $0x6e0] sm:$0xff] %v5436
        %5694 = vst [vmem:[%s5472 + $0x6e8] sm:$0xff] %v5437
        %5695 = vst [vmem:[%s5472 + $0x6f0] sm:$0xff] %v5438
        %5696 = vst [vmem:[%s5472 + $0x6f8] sm:$0xff] %v5439
        %5697 = vst [vmem:[%s5472 + $0x700] sm:$0xff] %v5440
        %5698 = vst [vmem:[%s5472 + $0x708] sm:$0xff] %v5441
        %5699 = vst [vmem:[%s5472 + $0x710] sm:$0xff] %v5442
        %5700 = vst [vmem:[%s5472 + $0x718] sm:$0xff] %v5443
        %5701 = vst [vmem:[%s5472 + $0x720] sm:$0xff] %v5444
        %5702 = vst [vmem:[%s5472 + $0x728] sm:$0xff] %v5445
        %5703 = vst [vmem:[%s5472 + $0x730] sm:$0xff] %v5446
        %5704 = vst [vmem:[%s5472 + $0x738] sm:$0xff] %v5447
        %5705 = vst [vmem:[%s5472 + $0x740] sm:$0xff] %v5448
        %5706 = vst [vmem:[%s5472 + $0x748] sm:$0xff] %v5449
        %5707 = vst [vmem:[%s5472 + $0x750] sm:$0xff] %v5450
        %5708 = vst [vmem:[%s5472 + $0x758] sm:$0xff] %v5451
        %5709 = vst [vmem:[%s5472 + $0x760] sm:$0xff] %v5452
        %5710 = vst [vmem:[%s5472 + $0x768] sm:$0xff] %v5453
        %5711 = vst [vmem:[%s5472 + $0x770] sm:$0xff] %v5454
        %5712 = vst [vmem:[%s5472 + $0x778] sm:$0xff] %v5455
        %5713 = vst [vmem:[%s5472 + $0x780] sm:$0xff] %v5456
        %5714 = vst [vmem:[%s5472 + $0x788] sm:$0xff] %v5457
        %5715 = vst [vmem:[%s5472 + $0x790] sm:$0xff] %v5458
        %5716 = vst [vmem:[%s5472 + $0x798] sm:$0xff] %v5459
        %5717 = vst [vmem:[%s5472 + $0x7a0] sm:$0xff] %v5460
        %5718 = vst [vmem:[%s5472 + $0x7a8] sm:$0xff] %v5461
        %5719 = vst [vmem:[%s5472 + $0x7b0] sm:$0xff] %v5462
        %5720 = vst [vmem:[%s5472 + $0x7b8] sm:$0xff] %v5463
        %5721 = vst [vmem:[%s5472 + $0x7c0] sm:$0xff] %v5464
        %5722 = vst [vmem:[%s5472 + $0x7c8] sm:$0xff] %v5465
        %5723 = vst [vmem:[%s5472 + $0x7d0] sm:$0xff] %v5466
        %5724 = vst [vmem:[%s5472 + $0x7d8] sm:$0xff] %v5467
        %5725 = vst [vmem:[%s5472 + $0x7e0] sm:$0xff] %v5468
        %5726 = vst [vmem:[%s5472 + $0x7e8] sm:$0xff] %v5469
        %5727 = vst [vmem:[%s5472 + $0x7f0] sm:$0xff] %v5470
        %5728 = vst [vmem:[%s5472 + $0x7f8] sm:$0xff] %v5471
        %s5729 = sand.u32 %s147, 1
        %s5730 = scalar_lea.sflag [#allocation3], %s5729
        %s5731 = sand.u32 %s147, 1
        %s5732 = smul.addr %s5731, 4096
        %s5733 = scalar_lea.vmem [#allocation2], %s5732
        // Predicated region
        $region37: #{tpu_custom_call.1} parent=35 // pred_check
          %p5734 = pneg %p157
        $region38: #{tpu_custom_call.1} parent=35 // pred_check_branch
          %5736 = sbr.rel (%p5734) target = $region40
        $region39: #{tpu_custom_call.1} parent=35 // pred_region
          %s5737 = smul.u32 16, %s24
          %s5739 = ssub.s32 65536, 65536
          %5740 = vsyncadd %s5730, %s5739
          %s5741 = sadd.s32 %s25, %s5737
          %s5742 = smul.addr %s23, 512
          %s5743 = sadd.s32 %s5741, %s5742
          %s5744 = smul.addr %s5743, 128
          %s5745 = scalar_lea.hbm %s4, %s5744
          %s5746 = sshll.u32 %s5733, 4
          %s5747 = int_to_ptr.vmem [resolvable:$true] %s5746
          %5752 = dma.vmem_to_hbm [thread:$0]  %s5747, 65536, %s5745, %s5730, 128, 128, 8
        $region40: #{tpu_custom_call.1} parent=35 // pred_fallthru
          _
      $region36: #{tpu_custom_call.1} parent=5 // pred_fallthru
        _
      %p5753 = scmp.le.s32.totalorder 2, %s13
      // Predicated region
      $region41: #{tpu_custom_call.1} parent=5 // pred_check
        %p5754 = pneg %p5753
      $region42: #{tpu_custom_call.1} parent=5 // pred_check_branch
        %5756 = sbr.rel (%p5754) target = $region44
      $region43: #{tpu_custom_call.1} parent=5 // pred_region
        %s5757 = ssub.s32 %s13, 2
        // Predicated region
        $region45: #{tpu_custom_call.1} parent=43 // pred_check
          %p5758 = pneg %p163
        $region46: #{tpu_custom_call.1} parent=43 // pred_check_branch
          %5760 = sbr.rel (%p5758) target = $region48
        $region47: #{tpu_custom_call.1} parent=43 // pred_region
          %s5761 = sand.u32 %s148, 1
          %s5762 = scalar_lea.sflag [#allocation3], %s5761
          %s5763 = sand.u32 %s148, 1
          %s5764 = smul.addr %s5763, 4096
          %s5765 = scalar_lea.vmem [#allocation2], %s5764
          %5766 = dma.done %s5762, 65536
        $region48: #{tpu_custom_call.1} parent=43 // pred_fallthru
          _
      $region44: #{tpu_custom_call.1} parent=5 // pred_fallthru
        _
    $region6: #{tpu_custom_call.1} parent=1 // loop_footer
      %s17 = sadd.s32 1, %s13
    $region7: #{tpu_custom_call.1} parent=1 // loop_footer_branch
      %12 = sbr.rel target = $region3
    $region8: #{tpu_custom_call.1} parent=1 // loop_exit
      _
    %5767 = vsyncpa [#allocation3], 1
    %s5768 = scalar_lea.sflag [#allocation3], 1
    %5769 = vsyncpa %s5768, 1

</llo_original>
